<compile_context>
chip_gen: v7x
topology: tpu7x:2x2x1
jax: 0.10.0
libtpu: 0.0.40
codegen_flags: <defaults>
</compile_context>

<pallas_src>
import functools

import jax
import jax.numpy as jnp
from jax.experimental import pallas as pl
from jax.experimental.pallas import tpu as pltpu


_LANE = 128
_SUBLANE_BF16 = 16  # bf16 packs 2 rows per sublane -> batch tile multiple of 16


def _round_up(x, m):
    return ((x + m - 1) // m) * m


def _cdiv(a, b):
    return (a + b - 1) // b


def _tensorcores_per_chip():
    # Only v7x has 2 TensorCores per chip; gate the forced 2-way grid split on it.
    try:
        kind = jax.devices()[0].device_kind.lower()
    except Exception:
        return 1
    return 2 if "v7" in kind else 1


def _autoencoder_kernel(
    x_ref,
    w1_ref, b1_ref,
    w2_ref, b2_ref,
    w3c_ref, b3c_ref,
    w5_ref, b5_ref,
    w6_ref, b6_ref,
    dec_ref, enc_ref,
):
    """Fused encoder + decoder forward for one batch tile.

    MXU inputs are bf16 with f32 accumulation; bias add / ReLU in f32.
    x arrives straight from HBM as f32 and is cast in-kernel (no wrapper copy).
    """
    lat_pad = enc_ref.shape[-1]

    x = x_ref[...].astype(jnp.bfloat16)

    # ---- encoder ----
    h = jnp.dot(x, w1_ref[...], preferred_element_type=jnp.float32) + b1_ref[...]
    h = jnp.maximum(h, 0.0).astype(jnp.bfloat16)
    h = jnp.dot(h, w2_ref[...], preferred_element_type=jnp.float32) + b2_ref[...]
    h2 = jnp.maximum(h, 0.0).astype(jnp.bfloat16)

    # One MXU pass producing [ z (padded latent) | decoder-first-layer preact ]:
    #   w3c = [ pad(w3) | w3 @ w4 ],  b3c = [ pad(b3) | b3 @ w4 + b4 ]
    zd = jnp.dot(h2, w3c_ref[...], preferred_element_type=jnp.float32) + b3c_ref[...]
    z = zd[:, :lat_pad]

    # ---- decoder ----
    d = jnp.maximum(zd[:, lat_pad:], 0.0).astype(jnp.bfloat16)
    d = jnp.dot(d, w5_ref[...], preferred_element_type=jnp.float32) + b5_ref[...]
    d = jnp.maximum(d, 0.0).astype(jnp.bfloat16)
    d = jnp.dot(d, w6_ref[...], preferred_element_type=jnp.float32) + b6_ref[...]

    enc_ref[...] = z.astype(enc_ref.dtype)
    dec_ref[...] = d.astype(dec_ref.dtype)


def prepare_params(params):
    """One-time weight prep, hoisted out of the per-call forward.

    * (in, out) weights cast to bf16 (MXU inputs), biases kept f32 as (1, out).
    * Latent projection w3/b3 zero-padded to 128 lanes and concatenated with the
      exactly-folded first decoder layer (w3 @ w4, b3 @ w4 + b4) into a single
      (128, 256) weight / (1, 256) bias.
    """
    latent_dim = params["w3"].shape[1]
    lat_pad = _round_up(latent_dim, _LANE)

    w3p = jnp.pad(params["w3"], ((0, 0), (0, lat_pad - latent_dim)))
    b3p = jnp.pad(params["b3"], ((0, 0), (0, lat_pad - latent_dim)))
    w34 = params["w3"] @ params["w4"]
    b34 = params["b3"] @ params["w4"] + params["b4"]

    return dict(
        w1=params["w1"].astype(jnp.bfloat16), b1=params["b1"].astype(jnp.float32),
        w2=params["w2"].astype(jnp.bfloat16), b2=params["b2"].astype(jnp.float32),
        w3c=jnp.concatenate([w3p, w34], axis=1).astype(jnp.bfloat16),
        b3c=jnp.concatenate([b3p, b34], axis=1).astype(jnp.float32),
        w5=params["w5"].astype(jnp.bfloat16), b5=params["b5"].astype(jnp.float32),
        w6=params["w6"].astype(jnp.bfloat16), b6=params["b6"].astype(jnp.float32),
    )


@functools.partial(jax.jit, static_argnames=("latent_dim", "batch_tile"))
def autoencoder_forward(x, prepared, latent_dim=2, batch_tile=512):
    """Runs the fused autoencoder forward pass.

    x: (B, input_dim) or (B, C, H, W) float32
    prepared: output of prepare_params()
    Returns (decoded (B, input_dim) f32, encoded (B, latent_dim) f32).
    """
    if x.ndim > 2:
        x = x.reshape(x.shape[0], -1)  # same as torch .view(B, -1)

    b, input_dim = x.shape
    hidden1 = prepared["w1"].shape[1]     # 512
    hidden2 = prepared["w2"].shape[1]     # 128
    lat_pad = _round_up(latent_dim, _LANE)

    # ---- batch tile selection (static) ----
    tile = max(_SUBLANE_BF16, min(batch_tile, _round_up(b, _SUBLANE_BF16)))
    tile = _round_up(tile, _SUBLANE_BF16)
    # Force >= 2 grid steps only where it pays: v7x's two TensorCores.
    if (_tensorcores_per_chip() >= 2 and _cdiv(b, tile) < 2
            and b >= 2 * _SUBLANE_BF16):
        tile = _round_up(_cdiv(b, 2), _SUBLANE_BF16)
    b_pad = _round_up(b, tile)
    grid = (b_pad // tile,)

    # Row-only padding (no feature pad, no dtype cast); a no-op when the batch
    # already divides the tile.
    x_p = x if b_pad == b else jnp.pad(x, ((0, b_pad - b), (0, 0)))

    weight_args = (
        prepared["w1"], prepared["b1"], prepared["w2"], prepared["b2"],
        prepared["w3c"], prepared["b3c"], prepared["w5"], prepared["b5"],
        prepared["w6"], prepared["b6"],
    )

    def _const_spec(shape):
        # Whole array VMEM-resident; constant block index => DMA'd once and
        # reused across every batch tile.
        return pl.BlockSpec(shape, lambda i: tuple(0 for _ in shape))

    in_specs = [pl.BlockSpec((tile, input_dim), lambda i: (i, 0))]
    in_specs += [_const_spec(a.shape) for a in weight_args]

    out_specs = (
        pl.BlockSpec((tile, input_dim), lambda i: (i, 0)),  # decoded (true width)
        pl.BlockSpec((tile, lat_pad), lambda i: (i, 0)),    # encoded (padded to 128)
    )

    # VMEM budget computed from the footprint (block buffers are double
    # buffered) so v7x's 64 MiB keeps scheduler headroom.
    block_bytes = 2 * tile * input_dim * 4          # x blocks
    block_bytes += 2 * tile * input_dim * 4         # decoded blocks
    block_bytes += 2 * tile * lat_pad * 4           # encoded blocks
    block_bytes += 2 * sum(a.size * a.dtype.itemsize for a in weight_args)
    interm_bytes = tile * (2 * hidden1 + 2 * hidden2 + lat_pad + input_dim) * 4
    vmem_limit = int(1.25 * (block_bytes + interm_bytes)) + (4 << 20)
    vmem_limit = min(max(vmem_limit, 16 << 20), 64 << 20)

    # Advisory cost estimate for XLA's scheduler.
    flops = 2 * b_pad * (input_dim * hidden1 + hidden1 * hidden2
                         + hidden2 * (lat_pad + hidden2)
                         + hidden2 * hidden1 + hidden1 * input_dim)
    bytes_accessed = (x_p.size * 4
                      + sum(a.size * a.dtype.itemsize for a in weight_args)
                      + b_pad * input_dim * 4      # decoded
                      + b_pad * lat_pad * 4)       # encoded

    decoded, encoded = pl.pallas_call(
        _autoencoder_kernel,
        grid=grid,
        in_specs=in_specs,
        out_specs=out_specs,
        out_shape=(
            jax.ShapeDtypeStruct((b_pad, input_dim), jnp.float32),
            jax.ShapeDtypeStruct((b_pad, lat_pad), jnp.float32),
        ),
        compiler_params=pltpu.CompilerParams(
            dimension_semantics=("parallel",),
            vmem_limit_bytes=vmem_limit,
        ),
        cost_estimate=pl.CostEstimate(
            flops=flops, transcendentals=0, bytes_accessed=bytes_accessed),
    )(x_p, *weight_args)

    decoded = decoded if b_pad == b else decoded[:b]
    encoded = encoded[:b, :latent_dim]
    return decoded, encoded


def init_params(key, input_dim=784, latent_dim=2):
    """Deterministic init mirroring nn.Linear default (uniform +/- 1/sqrt(fan_in)).

    Weights are stored transposed relative to PyTorch, i.e. (in, out), and
    biases as (1, out) so the kernel can broadcast-add them directly.
    """
    dims = [
        (input_dim, 512),    # encoder L1
        (512, 128),          # encoder L2
        (128, latent_dim),   # encoder L3
        (latent_dim, 128),   # decoder L1
        (128, 512),          # decoder L2
        (512, input_dim),    # decoder L3
    ]
    params = {}
    for idx, (fan_in, fan_out) in enumerate(dims, start=1):
        key, kw, kb = jax.random.split(key, 3)
        bound = 1.0 / jnp.sqrt(jnp.float32(fan_in))
        params[f"w{idx}"] = jax.random.uniform(
            kw, (fan_in, fan_out), jnp.float32, minval=-bound, maxval=bound)
        params[f"b{idx}"] = jax.random.uniform(
            kb, (1, fan_out), jnp.float32, minval=-bound, maxval=bound)
    return params


def reference_forward(x, params):
    """Pure-JAX f32 reference of the same forward pass."""
    if x.ndim > 2:
        x = x.reshape(x.shape[0], -1)
    h = jnp.maximum(x @ params["w1"] + params["b1"], 0.0)
    h = jnp.maximum(h @ params["w2"] + params["b2"], 0.0)
    z = h @ params["w3"] + params["b3"]
    d = jnp.maximum(z @ params["w4"] + params["b4"], 0.0)
    d = jnp.maximum(d @ params["w5"] + params["b5"], 0.0)
    d = d @ params["w6"] + params["b6"]
    return d, z


if __name__ == "__main__":
    key = jax.random.PRNGKey(0)
    key, kx = jax.random.split(key)

    INPUT_DIM = 784   # 28 * 28 (MNIST-like)
    LATENT_DIM = 2
    BATCH = 2

    # NCHW image input, flattened inside the wrapper exactly like torch .view
    x = jax.random.normal(kx, (BATCH, 1, 28, 28), jnp.float32)

    params = init_params(key, INPUT_DIM, LATENT_DIM)

    # One-time weight prep (hoisted out of the jitted forward).
    prepared = jax.block_until_ready(prepare_params(params))

    decoded, encoded = autoencoder_forward(x, prepared, latent_dim=LATENT_DIM)
    decoded, encoded = jax.block_until_ready((decoded, encoded))

    # Sanity check against a plain-JAX f32 reference (kernel matmuls run with
    # bf16 inputs and f32 accumulation, so tolerances are loosened accordingly).
    ref_dec, ref_enc = reference_forward(x, params)
    assert decoded.shape == (BATCH, INPUT_DIM)
    assert encoded.shape == (BATCH, LATENT_DIM)
    assert jnp.allclose(decoded, ref_dec, atol=5e-2, rtol=5e-2), float(
        jnp.max(jnp.abs(decoded - ref_dec)))
    assert jnp.allclose(encoded, ref_enc, atol=5e-2, rtol=5e-2), float(
        jnp.max(jnp.abs(encoded - ref_enc)))

    print("KERNEL_OK")
</pallas_src>

<mosaic_0001>
module attributes {stable_mosaic.version = 11 : i64} {
  func.func @_autoencoder_kernel(%arg0: i32, %arg1: memref<16x784xf32, #tpu.memory_space<vmem>>, %arg2: memref<784x512xbf16, #tpu.memory_space<vmem>>, %arg3: memref<1x512xf32, #tpu.memory_space<vmem>>, %arg4: memref<512x128xbf16, #tpu.memory_space<vmem>>, %arg5: memref<1x128xf32, #tpu.memory_space<vmem>>, %arg6: memref<128x256xbf16, #tpu.memory_space<vmem>>, %arg7: memref<1x256xf32, #tpu.memory_space<vmem>>, %arg8: memref<128x512xbf16, #tpu.memory_space<vmem>>, %arg9: memref<1x512xf32, #tpu.memory_space<vmem>>, %arg10: memref<512x784xbf16, #tpu.memory_space<vmem>>, %arg11: memref<1x784xf32, #tpu.memory_space<vmem>>, %arg12: memref<16x784xf32, #tpu.memory_space<vmem>>, %arg13: memref<16x128xf32, #tpu.memory_space<vmem>>) attributes {dimension_semantics = [#tpu.dimension_semantics<parallel>], iteration_bounds = array<i64: 1>, scalar_prefetch = 0 : i64, scratch_operands = 0 : i64, tpu.core_type = #tpu.core_type<tc>, window_params = [{transform_indices = @transform_0, window_bounds = array<i64: 16, 784>}, {pipeline_mode = #tpu.pipeline_mode<synchronous>, transform_indices = @transform_1, window_bounds = array<i64: 784, 512>}, {pipeline_mode = #tpu.pipeline_mode<synchronous>, transform_indices = @transform_2, window_bounds = array<i64: 1, 512>}, {pipeline_mode = #tpu.pipeline_mode<synchronous>, transform_indices = @transform_3, window_bounds = array<i64: 512, 128>}, {pipeline_mode = #tpu.pipeline_mode<synchronous>, transform_indices = @transform_4, window_bounds = array<i64: 1, 128>}, {pipeline_mode = #tpu.pipeline_mode<synchronous>, transform_indices = @transform_5, window_bounds = array<i64: 128, 256>}, {pipeline_mode = #tpu.pipeline_mode<synchronous>, transform_indices = @transform_6, window_bounds = array<i64: 1, 256>}, {pipeline_mode = #tpu.pipeline_mode<synchronous>, transform_indices = @transform_7, window_bounds = array<i64: 128, 512>}, {pipeline_mode = #tpu.pipeline_mode<synchronous>, transform_indices = @transform_8, window_bounds = array<i64: 1, 512>}, {pipeline_mode = #tpu.pipeline_mode<synchronous>, transform_indices = @transform_9, window_bounds = array<i64: 512, 784>}, {pipeline_mode = #tpu.pipeline_mode<synchronous>, transform_indices = @transform_10, window_bounds = array<i64: 1, 784>}, {transform_indices = @transform_11, window_bounds = array<i64: 16, 784>}, {transform_indices = @transform_12, window_bounds = array<i64: 16, 128>}]} {
    %c0 = arith.constant 0 : index
    %c0_0 = arith.constant 0 : index
    %0 = vector.load %arg1[%c0, %c0_0] : memref<16x784xf32, #tpu.memory_space<vmem>>, vector<16x784xf32>
    %1 = arith.truncf %0 : vector<16x784xf32> to vector<16x784xbf16>
    %c0_1 = arith.constant 0 : index
    %c0_2 = arith.constant 0 : index
    %2 = vector.load %arg2[%c0_1, %c0_2] : memref<784x512xbf16, #tpu.memory_space<vmem>>, vector<784x512xbf16>
    %cst = arith.constant dense<0.000000e+00> : vector<16x512xf32>
    %3 = tpu.matmul %1, %2, %cst {dimension_numbers = #tpu.dot_dimension_numbers<[1], [0], [0], [1], [0, 0, 1, 1], [], []>} : vector<16x784xbf16>, vector<784x512xbf16>, vector<16x512xf32> -> vector<16x512xf32>
    %c0_3 = arith.constant 0 : index
    %c0_4 = arith.constant 0 : index
    %4 = vector.load %arg3[%c0_3, %c0_4] : memref<1x512xf32, #tpu.memory_space<vmem>>, vector<1x512xf32>
    %5 = vector.broadcast %4 : vector<1x512xf32> to vector<16x512xf32>
    %6 = arith.addf %3, %5 : vector<16x512xf32>
    %cst_5 = arith.constant 0.000000e+00 : f32
    %7 = vector.broadcast %cst_5 : f32 to vector<16x512xf32>
    %8 = arith.maximumf %6, %7 : vector<16x512xf32>
    %9 = arith.truncf %8 : vector<16x512xf32> to vector<16x512xbf16>
    %c0_6 = arith.constant 0 : index
    %c0_7 = arith.constant 0 : index
    %10 = vector.load %arg4[%c0_6, %c0_7] : memref<512x128xbf16, #tpu.memory_space<vmem>>, vector<512x128xbf16>
    %cst_8 = arith.constant dense<0.000000e+00> : vector<16x128xf32>
    %11 = tpu.matmul %9, %10, %cst_8 {dimension_numbers = #tpu.dot_dimension_numbers<[1], [0], [0], [1], [0, 0, 1, 1], [], []>} : vector<16x512xbf16>, vector<512x128xbf16>, vector<16x128xf32> -> vector<16x128xf32>
    %c0_9 = arith.constant 0 : index
    %c0_10 = arith.constant 0 : index
    %12 = vector.load %arg5[%c0_9, %c0_10] : memref<1x128xf32, #tpu.memory_space<vmem>>, vector<1x128xf32>
    %13 = vector.broadcast %12 : vector<1x128xf32> to vector<16x128xf32>
    %14 = arith.addf %11, %13 : vector<16x128xf32>
    %cst_11 = arith.constant 0.000000e+00 : f32
    %15 = vector.broadcast %cst_11 : f32 to vector<16x128xf32>
    %16 = arith.maximumf %14, %15 : vector<16x128xf32>
    %17 = arith.truncf %16 : vector<16x128xf32> to vector<16x128xbf16>
    %c0_12 = arith.constant 0 : index
    %c0_13 = arith.constant 0 : index
    %18 = vector.load %arg6[%c0_12, %c0_13] : memref<128x256xbf16, #tpu.memory_space<vmem>>, vector<128x256xbf16>
    %cst_14 = arith.constant dense<0.000000e+00> : vector<16x256xf32>
    %19 = tpu.matmul %17, %18, %cst_14 {dimension_numbers = #tpu.dot_dimension_numbers<[1], [0], [0], [1], [0, 0, 1, 1], [], []>} : vector<16x128xbf16>, vector<128x256xbf16>, vector<16x256xf32> -> vector<16x256xf32>
    %c0_15 = arith.constant 0 : index
    %c0_16 = arith.constant 0 : index
    %20 = vector.load %arg7[%c0_15, %c0_16] : memref<1x256xf32, #tpu.memory_space<vmem>>, vector<1x256xf32>
    %21 = vector.broadcast %20 : vector<1x256xf32> to vector<16x256xf32>
    %22 = arith.addf %19, %21 : vector<16x256xf32>
    %23 = vector.extract_strided_slice %22 {offsets = [0, 0], sizes = [16, 128], strides = [1, 1]} : vector<16x256xf32> to vector<16x128xf32>
    %24 = vector.extract_strided_slice %22 {offsets = [0, 128], sizes = [16, 128], strides = [1, 1]} : vector<16x256xf32> to vector<16x128xf32>
    %cst_17 = arith.constant 0.000000e+00 : f32
    %25 = vector.broadcast %cst_17 : f32 to vector<16x128xf32>
    %26 = arith.maximumf %24, %25 : vector<16x128xf32>
    %27 = arith.truncf %26 : vector<16x128xf32> to vector<16x128xbf16>
    %c0_18 = arith.constant 0 : index
    %c0_19 = arith.constant 0 : index
    %28 = vector.load %arg8[%c0_18, %c0_19] : memref<128x512xbf16, #tpu.memory_space<vmem>>, vector<128x512xbf16>
    %cst_20 = arith.constant dense<0.000000e+00> : vector<16x512xf32>
    %29 = tpu.matmul %27, %28, %cst_20 {dimension_numbers = #tpu.dot_dimension_numbers<[1], [0], [0], [1], [0, 0, 1, 1], [], []>} : vector<16x128xbf16>, vector<128x512xbf16>, vector<16x512xf32> -> vector<16x512xf32>
    %c0_21 = arith.constant 0 : index
    %c0_22 = arith.constant 0 : index
    %30 = vector.load %arg9[%c0_21, %c0_22] : memref<1x512xf32, #tpu.memory_space<vmem>>, vector<1x512xf32>
    %31 = vector.broadcast %30 : vector<1x512xf32> to vector<16x512xf32>
    %32 = arith.addf %29, %31 : vector<16x512xf32>
    %cst_23 = arith.constant 0.000000e+00 : f32
    %33 = vector.broadcast %cst_23 : f32 to vector<16x512xf32>
    %34 = arith.maximumf %32, %33 : vector<16x512xf32>
    %35 = arith.truncf %34 : vector<16x512xf32> to vector<16x512xbf16>
    %c0_24 = arith.constant 0 : index
    %c0_25 = arith.constant 0 : index
    %36 = vector.load %arg10[%c0_24, %c0_25] : memref<512x784xbf16, #tpu.memory_space<vmem>>, vector<512x784xbf16>
    %cst_26 = arith.constant dense<0.000000e+00> : vector<16x784xf32>
    %37 = tpu.matmul %35, %36, %cst_26 {dimension_numbers = #tpu.dot_dimension_numbers<[1], [0], [0], [1], [0, 0, 1, 1], [], []>} : vector<16x512xbf16>, vector<512x784xbf16>, vector<16x784xf32> -> vector<16x784xf32>
    %c0_27 = arith.constant 0 : index
    %c0_28 = arith.constant 0 : index
    %38 = vector.load %arg11[%c0_27, %c0_28] : memref<1x784xf32, #tpu.memory_space<vmem>>, vector<1x784xf32>
    %39 = vector.broadcast %38 : vector<1x784xf32> to vector<16x784xf32>
    %40 = arith.addf %37, %39 : vector<16x784xf32>
    %c0_29 = arith.constant 0 : index
    %c0_30 = arith.constant 0 : index
    %41 = vector.load %arg13[%c0_29, %c0_30] : memref<16x128xf32, #tpu.memory_space<vmem>>, vector<16x128xf32>
    tpu.vector_store %arg13[%c0_29, %c0_30], %23 {strides = array<i32>} : memref<16x128xf32, #tpu.memory_space<vmem>>, vector<16x128xf32>,
    %c0_31 = arith.constant 0 : index
    %c0_32 = arith.constant 0 : index
    %42 = vector.load %arg12[%c0_31, %c0_32] : memref<16x784xf32, #tpu.memory_space<vmem>>, vector<16x784xf32>
    tpu.vector_store %arg12[%c0_31, %c0_32], %40 {strides = array<i32>} : memref<16x784xf32, #tpu.memory_space<vmem>>, vector<16x784xf32>,
    return
  }
  func.func @transform_0(%arg0: i32) -> (i32, i32) {
    %c0_i32 = arith.constant 0 : i32
    %c0_i32_0 = arith.constant 0 : i32
    return %arg0, %c0_i32 : i32, i32
  }
  func.func @transform_1(%arg0: i32) -> (i32, i32) {
    %c0_i32 = arith.constant 0 : i32
    %c0_i32_0 = arith.constant 0 : i32
    %c0_i32_1 = arith.constant 0 : i32
    return %c0_i32, %c0_i32_0 : i32, i32
  }
  func.func @transform_2(%arg0: i32) -> (i32, i32) {
    %c0_i32 = arith.constant 0 : i32
    %c0_i32_0 = arith.constant 0 : i32
    %c0_i32_1 = arith.constant 0 : i32
    return %c0_i32, %c0_i32_0 : i32, i32
  }
  func.func @transform_3(%arg0: i32) -> (i32, i32) {
    %c0_i32 = arith.constant 0 : i32
    %c0_i32_0 = arith.constant 0 : i32
    %c0_i32_1 = arith.constant 0 : i32
    return %c0_i32, %c0_i32_0 : i32, i32
  }
  func.func @transform_4(%arg0: i32) -> (i32, i32) {
    %c0_i32 = arith.constant 0 : i32
    %c0_i32_0 = arith.constant 0 : i32
    %c0_i32_1 = arith.constant 0 : i32
    return %c0_i32, %c0_i32_0 : i32, i32
  }
  func.func @transform_5(%arg0: i32) -> (i32, i32) {
    %c0_i32 = arith.constant 0 : i32
    %c0_i32_0 = arith.constant 0 : i32
    %c0_i32_1 = arith.constant 0 : i32
    return %c0_i32, %c0_i32_0 : i32, i32
  }
  func.func @transform_6(%arg0: i32) -> (i32, i32) {
    %c0_i32 = arith.constant 0 : i32
    %c0_i32_0 = arith.constant 0 : i32
    %c0_i32_1 = arith.constant 0 : i32
    return %c0_i32, %c0_i32_0 : i32, i32
  }
  func.func @transform_7(%arg0: i32) -> (i32, i32) {
    %c0_i32 = arith.constant 0 : i32
    %c0_i32_0 = arith.constant 0 : i32
    %c0_i32_1 = arith.constant 0 : i32
    return %c0_i32, %c0_i32_0 : i32, i32
  }
  func.func @transform_8(%arg0: i32) -> (i32, i32) {
    %c0_i32 = arith.constant 0 : i32
    %c0_i32_0 = arith.constant 0 : i32
    %c0_i32_1 = arith.constant 0 : i32
    return %c0_i32, %c0_i32_0 : i32, i32
  }
  func.func @transform_9(%arg0: i32) -> (i32, i32) {
    %c0_i32 = arith.constant 0 : i32
    %c0_i32_0 = arith.constant 0 : i32
    %c0_i32_1 = arith.constant 0 : i32
    return %c0_i32, %c0_i32_0 : i32, i32
  }
  func.func @transform_10(%arg0: i32) -> (i32, i32) {
    %c0_i32 = arith.constant 0 : i32
    %c0_i32_0 = arith.constant 0 : i32
    %c0_i32_1 = arith.constant 0 : i32
    return %c0_i32, %c0_i32_0 : i32, i32
  }
  func.func @transform_11(%arg0: i32) -> (i32, i32) {
    %c0_i32 = arith.constant 0 : i32
    %c0_i32_0 = arith.constant 0 : i32
    return %arg0, %c0_i32 : i32, i32
  }
  func.func @transform_12(%arg0: i32) -> (i32, i32) {
    %c0_i32 = arith.constant 0 : i32
    %c0_i32_0 = arith.constant 0 : i32
    return %arg0, %c0_i32 : i32, i32
  }
}

</mosaic_0001>

<llo_original>
// kernel: autoencoder_forward.1
$region0: #{autoencoder_forward.1}
  #allocation0 [shape = 'u32[]', space=smem, size = 0x4, offset = 0x4, fixed_abs, tag = 'smem constant byte address 0x4 - core index']
  #allocation1 [shape = 'u32[144,128]{1,0:T(1,128)}', space=vmem, size = 0x12000, scoped, tag = 'internal scratch']
  %s0 = inlined_call_operand.vmem [shape: f32[16,784], index: 0, kind: input, shape index: {}]
  %s1 = inlined_call_operand.vmem [shape: bf16[784,512], index: 1, kind: input, shape index: {}]
  %s2 = inlined_call_operand.vmem [shape: f32[1,512], index: 2, kind: input, shape index: {}]
  %s3 = inlined_call_operand.vmem [shape: bf16[512,128], index: 3, kind: input, shape index: {}]
  %s4 = inlined_call_operand.vmem [shape: f32[1,128], index: 4, kind: input, shape index: {}]
  %s5 = inlined_call_operand.vmem [shape: bf16[128,256], index: 5, kind: input, shape index: {}]
  %s6 = inlined_call_operand.vmem [shape: f32[1,256], index: 6, kind: input, shape index: {}]
  %s7 = inlined_call_operand.vmem [shape: bf16[128,512], index: 7, kind: input, shape index: {}]
  %s8 = inlined_call_operand.vmem [shape: f32[1,512], index: 8, kind: input, shape index: {}]
  %s9 = inlined_call_operand.vmem [shape: bf16[512,784], index: 9, kind: input, shape index: {}]
  %s10 = inlined_call_operand.vmem [shape: f32[1,784], index: 10, kind: input, shape index: {}]
  %s11 = inlined_call_operand.vmem [shape: f32[16,784], index: 11, kind: output, shape index: {0}]
  %s12 = inlined_call_operand.vmem [shape: f32[16,128], index: 12, kind: output, shape index: {1}]
  %13 = xla_tuple %s11, %s12
  %s14 = sld [smem:[#allocation0]]
  $region62: #{autoencoder_forward.1} parent=0
    _
  %s16 = ssub.s32 1, %s14
  %s17 = scalar_select 0, %s16, %s14
  // Predicated region
  $region2: #{autoencoder_forward.1} parent=0 // pred_check
    _
  $region3: #{autoencoder_forward.1} parent=0 // pred_check_branch
    %19 = sbr.rel (0) target = $region5
  $region4: #{autoencoder_forward.1} parent=0 // pred_region
    _
  $region5: #{autoencoder_forward.1} parent=0 // pred_fallthru
    _
  // Predicated region
  $region6: #{autoencoder_forward.1} parent=0 // pred_check
    _
  $region7: #{autoencoder_forward.1} parent=0 // pred_check_branch
    %21 = sbr.rel (0) target = $region9
  $region8: #{autoencoder_forward.1} parent=0 // pred_region
    _
  $region9: #{autoencoder_forward.1} parent=0 // pred_fallthru
    _
  // Predicated region
  $region10: #{autoencoder_forward.1} parent=0 // pred_check
    _
  $region11: #{autoencoder_forward.1} parent=0 // pred_check_branch
    %23 = sbr.rel (0) target = $region13
  $region12: #{autoencoder_forward.1} parent=0 // pred_region
    _
  $region13: #{autoencoder_forward.1} parent=0 // pred_fallthru
    _
  // Predicated region
  $region14: #{autoencoder_forward.1} parent=0 // pred_check
    _
  $region15: #{autoencoder_forward.1} parent=0 // pred_check_branch
    %25 = sbr.rel (0) target = $region17
  $region16: #{autoencoder_forward.1} parent=0 // pred_region
    _
  $region17: #{autoencoder_forward.1} parent=0 // pred_fallthru
    _
  // Predicated region
  $region18: #{autoencoder_forward.1} parent=0 // pred_check
    _
  $region19: #{autoencoder_forward.1} parent=0 // pred_check_branch
    %27 = sbr.rel (0) target = $region21
  $region20: #{autoencoder_forward.1} parent=0 // pred_region
    _
  $region21: #{autoencoder_forward.1} parent=0 // pred_fallthru
    _
  // Predicated region
  $region22: #{autoencoder_forward.1} parent=0 // pred_check
    _
  $region23: #{autoencoder_forward.1} parent=0 // pred_check_branch
    %29 = sbr.rel (0) target = $region25
  $region24: #{autoencoder_forward.1} parent=0 // pred_region
    _
  $region25: #{autoencoder_forward.1} parent=0 // pred_fallthru
    _
  // Predicated region
  $region26: #{autoencoder_forward.1} parent=0 // pred_check
    _
  $region27: #{autoencoder_forward.1} parent=0 // pred_check_branch
    %31 = sbr.rel (0) target = $region29
  $region28: #{autoencoder_forward.1} parent=0 // pred_region
    _
  $region29: #{autoencoder_forward.1} parent=0 // pred_fallthru
    _
  // Predicated region
  $region30: #{autoencoder_forward.1} parent=0 // pred_check
    _
  $region31: #{autoencoder_forward.1} parent=0 // pred_check_branch
    %33 = sbr.rel (0) target = $region33
  $region32: #{autoencoder_forward.1} parent=0 // pred_region
    _
  $region33: #{autoencoder_forward.1} parent=0 // pred_fallthru
    _
  // Predicated region
  $region34: #{autoencoder_forward.1} parent=0 // pred_check
    _
  $region35: #{autoencoder_forward.1} parent=0 // pred_check_branch
    %35 = sbr.rel (0) target = $region37
  $region36: #{autoencoder_forward.1} parent=0 // pred_region
    _
  $region37: #{autoencoder_forward.1} parent=0 // pred_fallthru
    _
  // Predicated region
  $region38: #{autoencoder_forward.1} parent=0 // pred_check
    _
  $region39: #{autoencoder_forward.1} parent=0 // pred_check_branch
    %37 = sbr.rel (0) target = $region41
  $region40: #{autoencoder_forward.1} parent=0 // pred_region
    _
  $region41: #{autoencoder_forward.1} parent=0 // pred_fallthru
    _
  // Predicated region
  $region42: #{autoencoder_forward.1} parent=0 // pred_check
    _
  $region43: #{autoencoder_forward.1} parent=0 // pred_check_branch
    %39 = sbr.rel (0) target = $region45
  $region44: #{autoencoder_forward.1} parent=0 // pred_region
    _
  $region45: #{autoencoder_forward.1} parent=0 // pred_fallthru
    _
  %v41 = vld [vmem:[%s0] sm:$0xff]
  %v42 = vld [vmem:[%s0 + $0x8] sm:$0xff]
  %v43 = vld [vmem:[%s0 + $0x10] sm:$0xff]
  %v44 = vld [vmem:[%s0 + $0x18] sm:$0xff]
  %v45 = vld [vmem:[%s0 + $0x20] sm:$0xff]
  %v46 = vld [vmem:[%s0 + $0x28] sm:$0xff]
  %v47 = vld [vmem:[%s0 + $0x30] sm:$0xff]
  %v48 = vld [vmem:[%s0 + $0x38] sm:$0xff]
  %v49 = vld [vmem:[%s0 + $0x40] sm:$0xff]
  %v50 = vld [vmem:[%s0 + $0x48] sm:$0xff]
  %v51 = vld [vmem:[%s0 + $0x50] sm:$0xff]
  %v52 = vld [vmem:[%s0 + $0x58] sm:$0xff]
  %v53 = vld [vmem:[%s0 + $0x60] sm:$0xff]
  %v54 = vld [vmem:[%s0 + $0x68] sm:$0xff]
  %v55 = vpack.c.bf16 %v48, %v41
  %v56 = vpack.c.bf16 %v49, %v42
  %v57 = vpack.c.bf16 %v50, %v43
  %v58 = vpack.c.bf16 %v51, %v44
  %v59 = vpack.c.bf16 %v52, %v45
  %v60 = vpack.c.bf16 %v53, %v46
  %v61 = vpack.c.bf16 %v54, %v47
  %v62 = vld [vmem:[%s1] sm:$0xff]
  %v63 = vld [vmem:[%s1 + $0x8] sm:$0xff]
  %v64 = vld [vmem:[%s1 + $0x10] sm:$0xff]
  %v65 = vld [vmem:[%s1 + $0x18] sm:$0xff]
  %v66 = vld [vmem:[%s1 + $0x20] sm:$0xff]
  %v67 = vld [vmem:[%s1 + $0x28] sm:$0xff]
  %v68 = vld [vmem:[%s1 + $0x30] sm:$0xff]
  %v69 = vld [vmem:[%s1 + $0x38] sm:$0xff]
  %v70 = vld [vmem:[%s1 + $0x40] sm:$0xff]
  %v71 = vld [vmem:[%s1 + $0x48] sm:$0xff]
  %v72 = vld [vmem:[%s1 + $0x50] sm:$0xff]
  %v73 = vld [vmem:[%s1 + $0x58] sm:$0xff]
  %v74 = vld [vmem:[%s1 + $0x60] sm:$0xff]
  %v75 = vld [vmem:[%s1 + $0x68] sm:$0xff]
  %v76 = vld [vmem:[%s1 + $0x70] sm:$0xff]
  %v77 = vld [vmem:[%s1 + $0x78] sm:$0xff]
  %v78 = vld [vmem:[%s1 + $0x80] sm:$0xff]
  %v79 = vld [vmem:[%s1 + $0x88] sm:$0xff]
  %v80 = vld [vmem:[%s1 + $0x90] sm:$0xff]
  %v81 = vld [vmem:[%s1 + $0x98] sm:$0xff]
  %v82 = vld [vmem:[%s1 + $0xa0] sm:$0xff]
  %v83 = vld [vmem:[%s1 + $0xa8] sm:$0xff]
  %v84 = vld [vmem:[%s1 + $0xb0] sm:$0xff]
  %v85 = vld [vmem:[%s1 + $0xb8] sm:$0xff]
  %v86 = vld [vmem:[%s1 + $0xc0] sm:$0xff]
  %v87 = vld [vmem:[%s1 + $0xc8] sm:$0xff]
  %v88 = vld [vmem:[%s1 + $0xd0] sm:$0xff]
  %v89 = vld [vmem:[%s1 + $0xd8] sm:$0xff]
  %v90 = vld [vmem:[%s1 + $0xe0] sm:$0xff]
  %v91 = vld [vmem:[%s1 + $0xe8] sm:$0xff]
  %v92 = vld [vmem:[%s1 + $0xf0] sm:$0xff]
  %v93 = vld [vmem:[%s1 + $0xf8] sm:$0xff]
  %v94 = vld [vmem:[%s1 + $0x100] sm:$0xff]
  %v95 = vld [vmem:[%s1 + $0x108] sm:$0xff]
  %v96 = vld [vmem:[%s1 + $0x110] sm:$0xff]
  %v97 = vld [vmem:[%s1 + $0x118] sm:$0xff]
  %v98 = vld [vmem:[%s1 + $0x120] sm:$0xff]
  %v99 = vld [vmem:[%s1 + $0x128] sm:$0xff]
  %v100 = vld [vmem:[%s1 + $0x130] sm:$0xff]
  %v101 = vld [vmem:[%s1 + $0x138] sm:$0xff]
  %v102 = vld [vmem:[%s1 + $0x140] sm:$0xff]
  %v103 = vld [vmem:[%s1 + $0x148] sm:$0xff]
  %v104 = vld [vmem:[%s1 + $0x150] sm:$0xff]
  %v105 = vld [vmem:[%s1 + $0x158] sm:$0xff]
  %v106 = vld [vmem:[%s1 + $0x160] sm:$0xff]
  %v107 = vld [vmem:[%s1 + $0x168] sm:$0xff]
  %v108 = vld [vmem:[%s1 + $0x170] sm:$0xff]
  %v109 = vld [vmem:[%s1 + $0x178] sm:$0xff]
  %v110 = vld [vmem:[%s1 + $0x180] sm:$0xff]
  %v111 = vld [vmem:[%s1 + $0x188] sm:$0xff]
  %v112 = vld [vmem:[%s1 + $0x190] sm:$0xff]
  %v113 = vld [vmem:[%s1 + $0x198] sm:$0xff]
  %v114 = vld [vmem:[%s1 + $0x1a0] sm:$0xff]
  %v115 = vld [vmem:[%s1 + $0x1a8] sm:$0xff]
  %v116 = vld [vmem:[%s1 + $0x1b0] sm:$0xff]
  %v117 = vld [vmem:[%s1 + $0x1b8] sm:$0xff]
  %v118 = vld [vmem:[%s1 + $0x1c0] sm:$0xff]
  %v119 = vld [vmem:[%s1 + $0x1c8] sm:$0xff]
  %v120 = vld [vmem:[%s1 + $0x1d0] sm:$0xff]
  %v121 = vld [vmem:[%s1 + $0x1d8] sm:$0xff]
  %v122 = vld [vmem:[%s1 + $0x1e0] sm:$0xff]
  %v123 = vld [vmem:[%s1 + $0x1e8] sm:$0xff]
  %v124 = vld [vmem:[%s1 + $0x1f0] sm:$0xff]
  %v125 = vld [vmem:[%s1 + $0x1f8] sm:$0xff]
  %v126 = vld [vmem:[%s1 + $0x200] sm:$0xff]
  %v127 = vld [vmem:[%s1 + $0x208] sm:$0xff]
  %v128 = vld [vmem:[%s1 + $0x210] sm:$0xff]
  %v129 = vld [vmem:[%s1 + $0x218] sm:$0xff]
  %v130 = vld [vmem:[%s1 + $0x220] sm:$0xff]
  %v131 = vld [vmem:[%s1 + $0x228] sm:$0xff]
  %v132 = vld [vmem:[%s1 + $0x230] sm:$0xff]
  %v133 = vld [vmem:[%s1 + $0x238] sm:$0xff]
  %v134 = vld [vmem:[%s1 + $0x240] sm:$0xff]
  %v135 = vld [vmem:[%s1 + $0x248] sm:$0xff]
  %v136 = vld [vmem:[%s1 + $0x250] sm:$0xff]
  %v137 = vld [vmem:[%s1 + $0x258] sm:$0xff]
  %v138 = vld [vmem:[%s1 + $0x260] sm:$0xff]
  %v139 = vld [vmem:[%s1 + $0x268] sm:$0xff]
  %v140 = vld [vmem:[%s1 + $0x270] sm:$0xff]
  %v141 = vld [vmem:[%s1 + $0x278] sm:$0xff]
  %v142 = vld [vmem:[%s1 + $0x280] sm:$0xff]
  %v143 = vld [vmem:[%s1 + $0x288] sm:$0xff]
  %v144 = vld [vmem:[%s1 + $0x290] sm:$0xff]
  %v145 = vld [vmem:[%s1 + $0x298] sm:$0xff]
  %v146 = vld [vmem:[%s1 + $0x2a0] sm:$0xff]
  %v147 = vld [vmem:[%s1 + $0x2a8] sm:$0xff]
  %v148 = vld [vmem:[%s1 + $0x2b0] sm:$0xff]
  %v149 = vld [vmem:[%s1 + $0x2b8] sm:$0xff]
  %v150 = vld [vmem:[%s1 + $0x2c0] sm:$0xff]
  %v151 = vld [vmem:[%s1 + $0x2c8] sm:$0xff]
  %v152 = vld [vmem:[%s1 + $0x2d0] sm:$0xff]
  %v153 = vld [vmem:[%s1 + $0x2d8] sm:$0xff]
  %v154 = vld [vmem:[%s1 + $0x2e0] sm:$0xff]
  %v155 = vld [vmem:[%s1 + $0x2e8] sm:$0xff]
  %v156 = vld [vmem:[%s1 + $0x2f0] sm:$0xff]
  %v157 = vld [vmem:[%s1 + $0x2f8] sm:$0xff]
  %v158 = vld [vmem:[%s1 + $0x300] sm:$0xff]
  %v159 = vld [vmem:[%s1 + $0x308] sm:$0xff]
  %v160 = vld [vmem:[%s1 + $0x310] sm:$0xff]
  %v161 = vld [vmem:[%s1 + $0x318] sm:$0xff]
  %v162 = vld [vmem:[%s1 + $0x320] sm:$0xff]
  %v163 = vld [vmem:[%s1 + $0x328] sm:$0xff]
  %v164 = vld [vmem:[%s1 + $0x330] sm:$0xff]
  %v165 = vld [vmem:[%s1 + $0x338] sm:$0xff]
  %v166 = vld [vmem:[%s1 + $0x340] sm:$0xff]
  %v167 = vld [vmem:[%s1 + $0x348] sm:$0xff]
  %v168 = vld [vmem:[%s1 + $0x350] sm:$0xff]
  %v169 = vld [vmem:[%s1 + $0x358] sm:$0xff]
  %v170 = vld [vmem:[%s1 + $0x360] sm:$0xff]
  %v171 = vld [vmem:[%s1 + $0x368] sm:$0xff]
  %v172 = vld [vmem:[%s1 + $0x370] sm:$0xff]
  %v173 = vld [vmem:[%s1 + $0x378] sm:$0xff]
  %v174 = vld [vmem:[%s1 + $0x380] sm:$0xff]
  %v175 = vld [vmem:[%s1 + $0x388] sm:$0xff]
  %v176 = vld [vmem:[%s1 + $0x390] sm:$0xff]
  %v177 = vld [vmem:[%s1 + $0x398] sm:$0xff]
  %v178 = vld [vmem:[%s1 + $0x3a0] sm:$0xff]
  %v179 = vld [vmem:[%s1 + $0x3a8] sm:$0xff]
  %v180 = vld [vmem:[%s1 + $0x3b0] sm:$0xff]
  %v181 = vld [vmem:[%s1 + $0x3b8] sm:$0xff]
  %v182 = vld [vmem:[%s1 + $0x3c0] sm:$0xff]
  %v183 = vld [vmem:[%s1 + $0x3c8] sm:$0xff]
  %v184 = vld [vmem:[%s1 + $0x3d0] sm:$0xff]
  %v185 = vld [vmem:[%s1 + $0x3d8] sm:$0xff]
  %v186 = vld [vmem:[%s1 + $0x3e0] sm:$0xff]
  %v187 = vld [vmem:[%s1 + $0x3e8] sm:$0xff]
  %v188 = vld [vmem:[%s1 + $0x3f0] sm:$0xff]
  %v189 = vld [vmem:[%s1 + $0x3f8] sm:$0xff]
  %v190 = vld [vmem:[%s1 + $0x400] sm:$0xff]
  %v191 = vld [vmem:[%s1 + $0x408] sm:$0xff]
  %v192 = vld [vmem:[%s1 + $0x410] sm:$0xff]
  %v193 = vld [vmem:[%s1 + $0x418] sm:$0xff]
  %v194 = vld [vmem:[%s1 + $0x420] sm:$0xff]
  %v195 = vld [vmem:[%s1 + $0x428] sm:$0xff]
  %v196 = vld [vmem:[%s1 + $0x430] sm:$0xff]
  %v197 = vld [vmem:[%s1 + $0x438] sm:$0xff]
  %v198 = vld [vmem:[%s1 + $0x440] sm:$0xff]
  %v199 = vld [vmem:[%s1 + $0x448] sm:$0xff]
  %v200 = vld [vmem:[%s1 + $0x450] sm:$0xff]
  %v201 = vld [vmem:[%s1 + $0x458] sm:$0xff]
  %v202 = vld [vmem:[%s1 + $0x460] sm:$0xff]
  %v203 = vld [vmem:[%s1 + $0x468] sm:$0xff]
  %v204 = vld [vmem:[%s1 + $0x470] sm:$0xff]
  %v205 = vld [vmem:[%s1 + $0x478] sm:$0xff]
  %v206 = vld [vmem:[%s1 + $0x480] sm:$0xff]
  %v207 = vld [vmem:[%s1 + $0x488] sm:$0xff]
  %v208 = vld [vmem:[%s1 + $0x490] sm:$0xff]
  %v209 = vld [vmem:[%s1 + $0x498] sm:$0xff]
  %v210 = vld [vmem:[%s1 + $0x4a0] sm:$0xff]
  %v211 = vld [vmem:[%s1 + $0x4a8] sm:$0xff]
  %v212 = vld [vmem:[%s1 + $0x4b0] sm:$0xff]
  %v213 = vld [vmem:[%s1 + $0x4b8] sm:$0xff]
  %v214 = vld [vmem:[%s1 + $0x4c0] sm:$0xff]
  %v215 = vld [vmem:[%s1 + $0x4c8] sm:$0xff]
  %v216 = vld [vmem:[%s1 + $0x4d0] sm:$0xff]
  %v217 = vld [vmem:[%s1 + $0x4d8] sm:$0xff]
  %v218 = vld [vmem:[%s1 + $0x4e0] sm:$0xff]
  %v219 = vld [vmem:[%s1 + $0x4e8] sm:$0xff]
  %v220 = vld [vmem:[%s1 + $0x4f0] sm:$0xff]
  %v221 = vld [vmem:[%s1 + $0x4f8] sm:$0xff]
  %v222 = vld [vmem:[%s1 + $0x500] sm:$0xff]
  %v223 = vld [vmem:[%s1 + $0x508] sm:$0xff]
  %v224 = vld [vmem:[%s1 + $0x510] sm:$0xff]
  %v225 = vld [vmem:[%s1 + $0x518] sm:$0xff]
  %v226 = vld [vmem:[%s1 + $0x520] sm:$0xff]
  %v227 = vld [vmem:[%s1 + $0x528] sm:$0xff]
  %v228 = vld [vmem:[%s1 + $0x530] sm:$0xff]
  %v229 = vld [vmem:[%s1 + $0x538] sm:$0xff]
  %v230 = vld [vmem:[%s1 + $0x540] sm:$0xff]
  %v231 = vld [vmem:[%s1 + $0x548] sm:$0xff]
  %v232 = vld [vmem:[%s1 + $0x550] sm:$0xff]
  %v233 = vld [vmem:[%s1 + $0x558] sm:$0xff]
  %v234 = vld [vmem:[%s1 + $0x560] sm:$0xff]
  %v235 = vld [vmem:[%s1 + $0x568] sm:$0xff]
  %v236 = vld [vmem:[%s1 + $0x570] sm:$0xff]
  %v237 = vld [vmem:[%s1 + $0x578] sm:$0xff]
  %v238 = vld [vmem:[%s1 + $0x580] sm:$0xff]
  %v239 = vld [vmem:[%s1 + $0x588] sm:$0xff]
  %v240 = vld [vmem:[%s1 + $0x590] sm:$0xff]
  %v241 = vld [vmem:[%s1 + $0x598] sm:$0xff]
  %v242 = vld [vmem:[%s1 + $0x5a0] sm:$0xff]
  %v243 = vld [vmem:[%s1 + $0x5a8] sm:$0xff]
  %v244 = vld [vmem:[%s1 + $0x5b0] sm:$0xff]
  %v245 = vld [vmem:[%s1 + $0x5b8] sm:$0xff]
  %v246 = vld [vmem:[%s1 + $0x5c0] sm:$0xff]
  %v247 = vld [vmem:[%s1 + $0x5c8] sm:$0xff]
  %v248 = vld [vmem:[%s1 + $0x5d0] sm:$0xff]
  %v249 = vld [vmem:[%s1 + $0x5d8] sm:$0xff]
  %v250 = vld [vmem:[%s1 + $0x5e0] sm:$0xff]
  %v251 = vld [vmem:[%s1 + $0x5e8] sm:$0xff]
  %v252 = vld [vmem:[%s1 + $0x5f0] sm:$0xff]
  %v253 = vld [vmem:[%s1 + $0x5f8] sm:$0xff]
  %v254 = vld [vmem:[%s1 + $0x600] sm:$0xff]
  %v255 = vld [vmem:[%s1 + $0x608] sm:$0xff]
  %v256 = vld [vmem:[%s1 + $0x610] sm:$0xff]
  %v257 = vld [vmem:[%s1 + $0x618] sm:$0xff]
  %v258 = vld [vmem:[%s2] sm:$0xf]
  %v260 = vlaneseq
  %v261 = vshrl.u32 %v260, 7
  %v262 = vsub.s32 0, %v261
  %v263 = vrot.slane %v258, %v262
  %v264 = vlaneseq
  %v265 = vshrl.u32 %v264, 7
  %v266 = vsub.s32 1, %v265
  %v267 = vrot.slane %v258, %v266
  %v268 = vlaneseq
  %v269 = vshrl.u32 %v268, 7
  %v270 = vsub.s32 2, %v269
  %v271 = vrot.slane %v258, %v270
  %v272 = vlaneseq
  %v273 = vshrl.u32 %v272, 7
  %v274 = vsub.s32 3, %v273
  %v275 = vrot.slane %v258, %v274
  %v476 = vunpack.c.l.b16 %v62
  %v477 = vunpack.c.h.b16 %v62
  %v478 = vunpack.c.l.b16 %v63
  %v479 = vunpack.c.h.b16 %v63
  %v480 = vunpack.c.l.b16 %v64
  %v481 = vunpack.c.h.b16 %v64
  %v482 = vunpack.c.l.b16 %v65
  %v483 = vunpack.c.h.b16 %v65
  %v484 = vunpack.c.l.b16 %v66
  %v485 = vunpack.c.h.b16 %v66
  %v486 = vunpack.c.l.b16 %v67
  %v487 = vunpack.c.h.b16 %v67
  %v488 = vunpack.c.l.b16 %v68
  %v489 = vunpack.c.h.b16 %v68
  %v490 = vunpack.c.l.b16 %v69
  %v491 = vunpack.c.h.b16 %v69
  %v492 = vunpack.c.l.b16 %v70
  %v493 = vunpack.c.h.b16 %v70
  %v494 = vunpack.c.l.b16 %v71
  %v495 = vunpack.c.h.b16 %v71
  %v496 = vunpack.c.l.b16 %v72
  %v497 = vunpack.c.h.b16 %v72
  %v498 = vunpack.c.l.b16 %v73
  %v499 = vunpack.c.h.b16 %v73
  %v500 = vunpack.c.l.b16 %v74
  %v501 = vunpack.c.h.b16 %v74
  %v502 = vunpack.c.l.b16 %v75
  %v503 = vunpack.c.h.b16 %v75
  %v504 = vunpack.c.l.b16 %v76
  %v505 = vunpack.c.h.b16 %v76
  %v506 = vunpack.c.l.b16 %v77
  %v507 = vunpack.c.h.b16 %v77
  %v508 = vunpack.c.l.b16 %v78
  %v509 = vunpack.c.h.b16 %v78
  %v510 = vunpack.c.l.b16 %v79
  %v511 = vunpack.c.h.b16 %v79
  %v512 = vunpack.c.l.b16 %v80
  %v513 = vunpack.c.h.b16 %v80
  %v514 = vunpack.c.l.b16 %v81
  %v515 = vunpack.c.h.b16 %v81
  %v516 = vunpack.c.l.b16 %v82
  %v517 = vunpack.c.h.b16 %v82
  %v518 = vunpack.c.l.b16 %v83
  %v519 = vunpack.c.h.b16 %v83
  %v520 = vunpack.c.l.b16 %v84
  %v521 = vunpack.c.h.b16 %v84
  %v522 = vunpack.c.l.b16 %v85
  %v523 = vunpack.c.h.b16 %v85
  %v524 = vunpack.c.l.b16 %v86
  %v525 = vunpack.c.h.b16 %v86
  %v526 = vunpack.c.l.b16 %v87
  %v527 = vunpack.c.h.b16 %v87
  %v528 = vunpack.c.l.b16 %v88
  %v529 = vunpack.c.h.b16 %v88
  %v530 = vunpack.c.l.b16 %v89
  %v531 = vunpack.c.h.b16 %v89
  %v532 = vunpack.c.l.b16 %v90
  %v533 = vunpack.c.h.b16 %v90
  %v534 = vunpack.c.l.b16 %v91
  %v535 = vunpack.c.h.b16 %v91
  %v536 = vunpack.c.l.b16 %v92
  %v537 = vunpack.c.h.b16 %v92
  %v538 = vunpack.c.l.b16 %v93
  %v539 = vunpack.c.h.b16 %v93
  %v540 = vunpack.c.l.b16 %v94
  %v541 = vunpack.c.h.b16 %v94
  %v542 = vunpack.c.l.b16 %v95
  %v543 = vunpack.c.h.b16 %v95
  %v544 = vunpack.c.l.b16 %v96
  %v545 = vunpack.c.h.b16 %v96
  %v546 = vunpack.c.l.b16 %v97
  %v547 = vunpack.c.h.b16 %v97
  %v548 = vunpack.c.l.b16 %v98
  %v549 = vunpack.c.h.b16 %v98
  %v550 = vunpack.c.l.b16 %v99
  %v551 = vunpack.c.h.b16 %v99
  %v552 = vunpack.c.l.b16 %v100
  %v553 = vunpack.c.h.b16 %v100
  %v554 = vunpack.c.l.b16 %v101
  %v555 = vunpack.c.h.b16 %v101
  %v556 = vunpack.c.l.b16 %v102
  %v557 = vunpack.c.h.b16 %v102
  %v558 = vunpack.c.l.b16 %v103
  %v559 = vunpack.c.h.b16 %v103
  %v560 = vunpack.c.l.b16 %v104
  %v561 = vunpack.c.h.b16 %v104
  %v562 = vunpack.c.l.b16 %v105
  %v563 = vunpack.c.h.b16 %v105
  %v564 = vunpack.c.l.b16 %v106
  %v565 = vunpack.c.h.b16 %v106
  %v566 = vunpack.c.l.b16 %v107
  %v567 = vunpack.c.h.b16 %v107
  %v568 = vunpack.c.l.b16 %v108
  %v569 = vunpack.c.h.b16 %v108
  %v570 = vunpack.c.l.b16 %v109
  %v571 = vunpack.c.h.b16 %v109
  %v572 = vunpack.c.l.b16 %v110
  %v573 = vunpack.c.h.b16 %v110
  %v574 = vunpack.c.l.b16 %v111
  %v575 = vunpack.c.h.b16 %v111
  %v576 = vunpack.c.l.b16 %v112
  %v577 = vunpack.c.h.b16 %v112
  %v578 = vunpack.c.l.b16 %v113
  %v579 = vunpack.c.h.b16 %v113
  %v580 = vunpack.c.l.b16 %v114
  %v581 = vunpack.c.h.b16 %v114
  %v582 = vunpack.c.l.b16 %v115
  %v583 = vunpack.c.h.b16 %v115
  %v584 = vunpack.c.l.b16 %v116
  %v585 = vunpack.c.h.b16 %v116
  %v586 = vunpack.c.l.b16 %v117
  %v587 = vunpack.c.h.b16 %v117
  %v588 = vunpack.c.l.b16 %v118
  %v589 = vunpack.c.h.b16 %v118
  %v590 = vunpack.c.l.b16 %v119
  %v591 = vunpack.c.h.b16 %v119
  %v592 = vunpack.c.l.b16 %v120
  %v593 = vunpack.c.h.b16 %v120
  %v594 = vunpack.c.l.b16 %v121
  %v595 = vunpack.c.h.b16 %v121
  %v596 = vunpack.c.l.b16 %v122
  %v597 = vunpack.c.h.b16 %v122
  %v598 = vunpack.c.l.b16 %v123
  %v599 = vunpack.c.h.b16 %v123
  %v600 = vunpack.c.l.b16 %v124
  %v601 = vunpack.c.h.b16 %v124
  %v602 = vunpack.c.l.b16 %v125
  %v603 = vunpack.c.h.b16 %v125
  %v604 = vunpack.c.l.b16 %v126
  %v605 = vunpack.c.h.b16 %v126
  %v606 = vunpack.c.l.b16 %v127
  %v607 = vunpack.c.h.b16 %v127
  %v608 = vunpack.c.l.b16 %v128
  %v609 = vunpack.c.h.b16 %v128
  %v610 = vunpack.c.l.b16 %v129
  %v611 = vunpack.c.h.b16 %v129
  %v612 = vunpack.c.l.b16 %v130
  %v613 = vunpack.c.h.b16 %v130
  %v614 = vunpack.c.l.b16 %v131
  %v615 = vunpack.c.h.b16 %v131
  %v616 = vunpack.c.l.b16 %v132
  %v617 = vunpack.c.h.b16 %v132
  %v618 = vunpack.c.l.b16 %v133
  %v619 = vunpack.c.h.b16 %v133
  %v620 = vunpack.c.l.b16 %v134
  %v621 = vunpack.c.h.b16 %v134
  %v622 = vunpack.c.l.b16 %v135
  %v623 = vunpack.c.h.b16 %v135
  %v624 = vunpack.c.l.b16 %v136
  %v625 = vunpack.c.h.b16 %v136
  %v626 = vunpack.c.l.b16 %v137
  %v627 = vunpack.c.h.b16 %v137
  %v628 = vunpack.c.l.b16 %v138
  %v629 = vunpack.c.h.b16 %v138
  %v630 = vunpack.c.l.b16 %v139
  %v631 = vunpack.c.h.b16 %v139
  %v632 = vunpack.c.l.b16 %v140
  %v633 = vunpack.c.h.b16 %v140
  %v634 = vunpack.c.l.b16 %v141
  %v635 = vunpack.c.h.b16 %v141
  %v636 = vunpack.c.l.b16 %v142
  %v637 = vunpack.c.h.b16 %v142
  %v638 = vunpack.c.l.b16 %v143
  %v639 = vunpack.c.h.b16 %v143
  %v640 = vunpack.c.l.b16 %v144
  %v641 = vunpack.c.h.b16 %v144
  %v642 = vunpack.c.l.b16 %v145
  %v643 = vunpack.c.h.b16 %v145
  %v644 = vunpack.c.l.b16 %v146
  %v645 = vunpack.c.h.b16 %v146
  %v646 = vunpack.c.l.b16 %v147
  %v647 = vunpack.c.h.b16 %v147
  %v648 = vunpack.c.l.b16 %v148
  %v649 = vunpack.c.h.b16 %v148
  %v650 = vunpack.c.l.b16 %v149
  %v651 = vunpack.c.h.b16 %v149
  %v652 = vunpack.c.l.b16 %v150
  %v653 = vunpack.c.h.b16 %v150
  %v654 = vunpack.c.l.b16 %v151
  %v655 = vunpack.c.h.b16 %v151
  %v656 = vunpack.c.l.b16 %v152
  %v657 = vunpack.c.h.b16 %v152
  %v658 = vunpack.c.l.b16 %v153
  %v659 = vunpack.c.h.b16 %v153
  %v660 = vunpack.c.l.b16 %v154
  %v661 = vunpack.c.h.b16 %v154
  %v662 = vunpack.c.l.b16 %v155
  %v663 = vunpack.c.h.b16 %v155
  %v664 = vunpack.c.l.b16 %v156
  %v665 = vunpack.c.h.b16 %v156
  %v666 = vunpack.c.l.b16 %v157
  %v667 = vunpack.c.h.b16 %v157
  %v668 = vunpack.c.l.b16 %v158
  %v669 = vunpack.c.h.b16 %v158
  %v670 = vunpack.c.l.b16 %v159
  %v671 = vunpack.c.h.b16 %v159
  %v672 = vunpack.c.l.b16 %v160
  %v673 = vunpack.c.h.b16 %v160
  %v674 = vunpack.c.l.b16 %v161
  %v675 = vunpack.c.h.b16 %v161
  %v676 = vunpack.c.l.b16 %v162
  %v677 = vunpack.c.h.b16 %v162
  %v678 = vunpack.c.l.b16 %v163
  %v679 = vunpack.c.h.b16 %v163
  %v680 = vunpack.c.l.b16 %v164
  %v681 = vunpack.c.h.b16 %v164
  %v682 = vunpack.c.l.b16 %v165
  %v683 = vunpack.c.h.b16 %v165
  %v684 = vunpack.c.l.b16 %v166
  %v685 = vunpack.c.h.b16 %v166
  %v686 = vunpack.c.l.b16 %v167
  %v687 = vunpack.c.h.b16 %v167
  %v688 = vunpack.c.l.b16 %v168
  %v689 = vunpack.c.h.b16 %v168
  %v690 = vunpack.c.l.b16 %v169
  %v691 = vunpack.c.h.b16 %v169
  %v692 = vunpack.c.l.b16 %v170
  %v693 = vunpack.c.h.b16 %v170
  %v694 = vunpack.c.l.b16 %v171
  %v695 = vunpack.c.h.b16 %v171
  %v696 = vunpack.c.l.b16 %v172
  %v697 = vunpack.c.h.b16 %v172
  %v698 = vunpack.c.l.b16 %v173
  %v699 = vunpack.c.h.b16 %v173
  %v700 = vunpack.c.l.b16 %v174
  %v701 = vunpack.c.h.b16 %v174
  %v702 = vunpack.c.l.b16 %v175
  %v703 = vunpack.c.h.b16 %v175
  %v704 = vunpack.c.l.b16 %v176
  %v705 = vunpack.c.h.b16 %v176
  %v706 = vunpack.c.l.b16 %v177
  %v707 = vunpack.c.h.b16 %v177
  %v708 = vunpack.c.l.b16 %v178
  %v709 = vunpack.c.h.b16 %v178
  %v710 = vunpack.c.l.b16 %v179
  %v711 = vunpack.c.h.b16 %v179
  %v712 = vunpack.c.l.b16 %v180
  %v713 = vunpack.c.h.b16 %v180
  %v714 = vunpack.c.l.b16 %v181
  %v715 = vunpack.c.h.b16 %v181
  %v716 = vunpack.c.l.b16 %v182
  %v717 = vunpack.c.h.b16 %v182
  %v718 = vunpack.c.l.b16 %v183
  %v719 = vunpack.c.h.b16 %v183
  %v720 = vunpack.c.l.b16 %v184
  %v721 = vunpack.c.h.b16 %v184
  %v722 = vunpack.c.l.b16 %v185
  %v723 = vunpack.c.h.b16 %v185
  %v724 = vunpack.c.l.b16 %v186
  %v725 = vunpack.c.h.b16 %v186
  %v726 = vunpack.c.l.b16 %v187
  %v727 = vunpack.c.h.b16 %v187
  %v728 = vunpack.c.l.b16 %v188
  %v729 = vunpack.c.h.b16 %v188
  %v730 = vunpack.c.l.b16 %v189
  %v731 = vunpack.c.h.b16 %v189
  %v732 = vunpack.c.l.b16 %v190
  %v733 = vunpack.c.h.b16 %v190
  %v734 = vunpack.c.l.b16 %v191
  %v735 = vunpack.c.h.b16 %v191
  %v736 = vunpack.c.l.b16 %v192
  %v737 = vunpack.c.h.b16 %v192
  %v738 = vunpack.c.l.b16 %v193
  %v739 = vunpack.c.h.b16 %v193
  %v740 = vunpack.c.l.b16 %v194
  %v741 = vunpack.c.h.b16 %v194
  %v742 = vunpack.c.l.b16 %v195
  %v743 = vunpack.c.h.b16 %v195
  %v744 = vunpack.c.l.b16 %v196
  %v745 = vunpack.c.h.b16 %v196
  %v746 = vunpack.c.l.b16 %v197
  %v747 = vunpack.c.h.b16 %v197
  %v748 = vunpack.c.l.b16 %v198
  %v749 = vunpack.c.h.b16 %v198
  %v750 = vunpack.c.l.b16 %v199
  %v751 = vunpack.c.h.b16 %v199
  %v752 = vunpack.c.l.b16 %v200
  %v753 = vunpack.c.h.b16 %v200
  %v754 = vunpack.c.l.b16 %v201
  %v755 = vunpack.c.h.b16 %v201
  %v756 = vunpack.c.l.b16 %v202
  %v757 = vunpack.c.h.b16 %v202
  %v758 = vunpack.c.l.b16 %v203
  %v759 = vunpack.c.h.b16 %v203
  %v760 = vunpack.c.l.b16 %v204
  %v761 = vunpack.c.h.b16 %v204
  %v762 = vunpack.c.l.b16 %v205
  %v763 = vunpack.c.h.b16 %v205
  %v764 = vunpack.c.l.b16 %v206
  %v765 = vunpack.c.h.b16 %v206
  %v766 = vunpack.c.l.b16 %v207
  %v767 = vunpack.c.h.b16 %v207
  %v768 = vunpack.c.l.b16 %v208
  %v769 = vunpack.c.h.b16 %v208
  %v770 = vunpack.c.l.b16 %v209
  %v771 = vunpack.c.h.b16 %v209
  %v772 = vunpack.c.l.b16 %v210
  %v773 = vunpack.c.h.b16 %v210
  %v774 = vunpack.c.l.b16 %v211
  %v775 = vunpack.c.h.b16 %v211
  %v776 = vunpack.c.l.b16 %v212
  %v777 = vunpack.c.h.b16 %v212
  %v778 = vunpack.c.l.b16 %v213
  %v779 = vunpack.c.h.b16 %v213
  %v780 = vunpack.c.l.b16 %v214
  %v781 = vunpack.c.h.b16 %v214
  %v782 = vunpack.c.l.b16 %v215
  %v783 = vunpack.c.h.b16 %v215
  %v784 = vunpack.c.l.b16 %v216
  %v785 = vunpack.c.h.b16 %v216
  %v786 = vunpack.c.l.b16 %v217
  %v787 = vunpack.c.h.b16 %v217
  %v788 = vunpack.c.l.b16 %v218
  %v789 = vunpack.c.h.b16 %v218
  %v790 = vunpack.c.l.b16 %v219
  %v791 = vunpack.c.h.b16 %v219
  %v792 = vunpack.c.l.b16 %v220
  %v793 = vunpack.c.h.b16 %v220
  %v794 = vunpack.c.l.b16 %v221
  %v795 = vunpack.c.h.b16 %v221
  %v796 = vunpack.c.l.b16 %v222
  %v797 = vunpack.c.h.b16 %v222
  %v798 = vunpack.c.l.b16 %v223
  %v799 = vunpack.c.h.b16 %v223
  %v800 = vunpack.c.l.b16 %v224
  %v801 = vunpack.c.h.b16 %v224
  %v802 = vunpack.c.l.b16 %v225
  %v803 = vunpack.c.h.b16 %v225
  %v804 = vunpack.c.l.b16 %v226
  %v805 = vunpack.c.h.b16 %v226
  %v806 = vunpack.c.l.b16 %v227
  %v807 = vunpack.c.h.b16 %v227
  %v808 = vunpack.c.l.b16 %v228
  %v809 = vunpack.c.h.b16 %v228
  %v810 = vunpack.c.l.b16 %v229
  %v811 = vunpack.c.h.b16 %v229
  %v812 = vunpack.c.l.b16 %v230
  %v813 = vunpack.c.h.b16 %v230
  %v814 = vunpack.c.l.b16 %v231
  %v815 = vunpack.c.h.b16 %v231
  %v816 = vunpack.c.l.b16 %v232
  %v817 = vunpack.c.h.b16 %v232
  %v818 = vunpack.c.l.b16 %v233
  %v819 = vunpack.c.h.b16 %v233
  %v820 = vunpack.c.l.b16 %v234
  %v821 = vunpack.c.h.b16 %v234
  %v822 = vunpack.c.l.b16 %v235
  %v823 = vunpack.c.h.b16 %v235
  %v824 = vunpack.c.l.b16 %v236
  %v825 = vunpack.c.h.b16 %v236
  %v826 = vunpack.c.l.b16 %v237
  %v827 = vunpack.c.h.b16 %v237
  %v828 = vunpack.c.l.b16 %v238
  %v829 = vunpack.c.h.b16 %v238
  %v830 = vunpack.c.l.b16 %v239
  %v831 = vunpack.c.h.b16 %v239
  %v832 = vunpack.c.l.b16 %v240
  %v833 = vunpack.c.h.b16 %v240
  %v834 = vunpack.c.l.b16 %v241
  %v835 = vunpack.c.h.b16 %v241
  %v836 = vunpack.c.l.b16 %v242
  %v837 = vunpack.c.h.b16 %v242
  %v838 = vunpack.c.l.b16 %v243
  %v839 = vunpack.c.h.b16 %v243
  %v840 = vunpack.c.l.b16 %v244
  %v841 = vunpack.c.h.b16 %v244
  %v842 = vunpack.c.l.b16 %v245
  %v843 = vunpack.c.h.b16 %v245
  %v844 = vunpack.c.l.b16 %v246
  %v845 = vunpack.c.h.b16 %v246
  %v846 = vunpack.c.l.b16 %v247
  %v847 = vunpack.c.h.b16 %v247
  %v848 = vunpack.c.l.b16 %v248
  %v849 = vunpack.c.h.b16 %v248
  %v850 = vunpack.c.l.b16 %v249
  %v851 = vunpack.c.h.b16 %v249
  %v852 = vunpack.c.l.b16 %v250
  %v853 = vunpack.c.h.b16 %v250
  %v854 = vunpack.c.l.b16 %v251
  %v855 = vunpack.c.h.b16 %v251
  %v856 = vunpack.c.l.b16 %v252
  %v857 = vunpack.c.h.b16 %v252
  %v858 = vunpack.c.l.b16 %v253
  %v859 = vunpack.c.h.b16 %v253
  %v860 = vunpack.c.l.b16 %v254
  %v861 = vunpack.c.h.b16 %v254
  %v862 = vunpack.c.l.b16 %v255
  %v863 = vunpack.c.h.b16 %v255
  %v864 = vunpack.c.l.b16 %v256
  %v865 = vunpack.c.h.b16 %v256
  %v866 = vunpack.c.l.b16 %v257
  %v867 = vunpack.c.h.b16 %v257
  %v868 = vpack.c.b16 %v480, %v476
  %v869 = vpack.c.b16 %v481, %v477
  %v870 = vpack.c.b16 %v482, %v478
  %v871 = vpack.c.b16 %v483, %v479
  %v872 = vpack.c.b16 %v488, %v484
  %v873 = vpack.c.b16 %v489, %v485
  %v874 = vpack.c.b16 %v490, %v486
  %v875 = vpack.c.b16 %v491, %v487
  %v876 = vpack.c.b16 %v496, %v492
  %v877 = vpack.c.b16 %v497, %v493
  %v878 = vpack.c.b16 %v498, %v494
  %v879 = vpack.c.b16 %v499, %v495
  %v880 = vpack.c.b16 %v504, %v500
  %v881 = vpack.c.b16 %v505, %v501
  %v882 = vpack.c.b16 %v506, %v502
  %v883 = vpack.c.b16 %v507, %v503
  %v884 = vpack.c.b16 %v512, %v508
  %v885 = vpack.c.b16 %v513, %v509
  %v886 = vpack.c.b16 %v514, %v510
  %v887 = vpack.c.b16 %v515, %v511
  %v888 = vpack.c.b16 %v520, %v516
  %v889 = vpack.c.b16 %v521, %v517
  %v890 = vpack.c.b16 %v522, %v518
  %v891 = vpack.c.b16 %v523, %v519
  %v892 = vpack.c.b16 %v528, %v524
  %v893 = vpack.c.b16 %v529, %v525
  %v894 = vpack.c.b16 %v530, %v526
  %v895 = vpack.c.b16 %v531, %v527
  %v896 = vpack.c.b16 %v536, %v532
  %v897 = vpack.c.b16 %v537, %v533
  %v898 = vpack.c.b16 %v538, %v534
  %v899 = vpack.c.b16 %v539, %v535
  %v900 = vpack.c.b16 %v544, %v540
  %v901 = vpack.c.b16 %v545, %v541
  %v902 = vpack.c.b16 %v546, %v542
  %v903 = vpack.c.b16 %v547, %v543
  %v904 = vpack.c.b16 %v552, %v548
  %v905 = vpack.c.b16 %v553, %v549
  %v906 = vpack.c.b16 %v554, %v550
  %v907 = vpack.c.b16 %v555, %v551
  %v908 = vpack.c.b16 %v560, %v556
  %v909 = vpack.c.b16 %v561, %v557
  %v910 = vpack.c.b16 %v562, %v558
  %v911 = vpack.c.b16 %v563, %v559
  %v912 = vpack.c.b16 %v568, %v564
  %v913 = vpack.c.b16 %v569, %v565
  %v914 = vpack.c.b16 %v570, %v566
  %v915 = vpack.c.b16 %v571, %v567
  %v916 = vpack.c.b16 %v576, %v572
  %v917 = vpack.c.b16 %v577, %v573
  %v918 = vpack.c.b16 %v578, %v574
  %v919 = vpack.c.b16 %v579, %v575
  %v920 = vpack.c.b16 %v584, %v580
  %v921 = vpack.c.b16 %v585, %v581
  %v922 = vpack.c.b16 %v586, %v582
  %v923 = vpack.c.b16 %v587, %v583
  %v924 = vpack.c.b16 %v592, %v588
  %v925 = vpack.c.b16 %v593, %v589
  %v926 = vpack.c.b16 %v594, %v590
  %v927 = vpack.c.b16 %v595, %v591
  %v928 = vpack.c.b16 %v600, %v596
  %v929 = vpack.c.b16 %v601, %v597
  %v930 = vpack.c.b16 %v602, %v598
  %v931 = vpack.c.b16 %v603, %v599
  %v932 = vpack.c.b16 %v608, %v604
  %v933 = vpack.c.b16 %v609, %v605
  %v934 = vpack.c.b16 %v610, %v606
  %v935 = vpack.c.b16 %v611, %v607
  %v936 = vpack.c.b16 %v616, %v612
  %v937 = vpack.c.b16 %v617, %v613
  %v938 = vpack.c.b16 %v618, %v614
  %v939 = vpack.c.b16 %v619, %v615
  %v940 = vpack.c.b16 %v624, %v620
  %v941 = vpack.c.b16 %v625, %v621
  %v942 = vpack.c.b16 %v626, %v622
  %v943 = vpack.c.b16 %v627, %v623
  %v944 = vpack.c.b16 %v632, %v628
  %v945 = vpack.c.b16 %v633, %v629
  %v946 = vpack.c.b16 %v634, %v630
  %v947 = vpack.c.b16 %v635, %v631
  %v948 = vpack.c.b16 %v640, %v636
  %v949 = vpack.c.b16 %v641, %v637
  %v950 = vpack.c.b16 %v642, %v638
  %v951 = vpack.c.b16 %v643, %v639
  %v952 = vpack.c.b16 %v648, %v644
  %v953 = vpack.c.b16 %v649, %v645
  %v954 = vpack.c.b16 %v650, %v646
  %v955 = vpack.c.b16 %v651, %v647
  %v956 = vpack.c.b16 %v656, %v652
  %v957 = vpack.c.b16 %v657, %v653
  %v958 = vpack.c.b16 %v658, %v654
  %v959 = vpack.c.b16 %v659, %v655
  %v960 = vpack.c.b16 %v664, %v660
  %v961 = vpack.c.b16 %v665, %v661
  %v962 = vpack.c.b16 %v666, %v662
  %v963 = vpack.c.b16 %v667, %v663
  %v964 = vpack.c.b16 %v672, %v668
  %v965 = vpack.c.b16 %v673, %v669
  %v966 = vpack.c.b16 %v674, %v670
  %v967 = vpack.c.b16 %v675, %v671
  %v968 = vpack.c.b16 %v680, %v676
  %v969 = vpack.c.b16 %v681, %v677
  %v970 = vpack.c.b16 %v682, %v678
  %v971 = vpack.c.b16 %v683, %v679
  %v972 = vpack.c.b16 %v688, %v684
  %v973 = vpack.c.b16 %v689, %v685
  %v974 = vpack.c.b16 %v690, %v686
  %v975 = vpack.c.b16 %v691, %v687
  %v976 = vpack.c.b16 %v696, %v692
  %v977 = vpack.c.b16 %v697, %v693
  %v978 = vpack.c.b16 %v698, %v694
  %v979 = vpack.c.b16 %v699, %v695
  %v980 = vpack.c.b16 %v704, %v700
  %v981 = vpack.c.b16 %v705, %v701
  %v982 = vpack.c.b16 %v706, %v702
  %v983 = vpack.c.b16 %v707, %v703
  %v984 = vpack.c.b16 %v712, %v708
  %v985 = vpack.c.b16 %v713, %v709
  %v986 = vpack.c.b16 %v714, %v710
  %v987 = vpack.c.b16 %v715, %v711
  %v988 = vpack.c.b16 %v720, %v716
  %v989 = vpack.c.b16 %v721, %v717
  %v990 = vpack.c.b16 %v722, %v718
  %v991 = vpack.c.b16 %v723, %v719
  %v992 = vpack.c.b16 %v728, %v724
  %v993 = vpack.c.b16 %v729, %v725
  %v994 = vpack.c.b16 %v730, %v726
  %v995 = vpack.c.b16 %v731, %v727
  %v996 = vpack.c.b16 %v736, %v732
  %v997 = vpack.c.b16 %v737, %v733
  %v998 = vpack.c.b16 %v738, %v734
  %v999 = vpack.c.b16 %v739, %v735
  %v1000 = vpack.c.b16 %v744, %v740
  %v1001 = vpack.c.b16 %v745, %v741
  %v1002 = vpack.c.b16 %v746, %v742
  %v1003 = vpack.c.b16 %v747, %v743
  %v1004 = vpack.c.b16 %v752, %v748
  %v1005 = vpack.c.b16 %v753, %v749
  %v1006 = vpack.c.b16 %v754, %v750
  %v1007 = vpack.c.b16 %v755, %v751
  %v1008 = vpack.c.b16 %v760, %v756
  %v1009 = vpack.c.b16 %v761, %v757
  %v1010 = vpack.c.b16 %v762, %v758
  %v1011 = vpack.c.b16 %v763, %v759
  %v1012 = vpack.c.b16 %v768, %v764
  %v1013 = vpack.c.b16 %v769, %v765
  %v1014 = vpack.c.b16 %v770, %v766
  %v1015 = vpack.c.b16 %v771, %v767
  %v1016 = vpack.c.b16 %v776, %v772
  %v1017 = vpack.c.b16 %v777, %v773
  %v1018 = vpack.c.b16 %v778, %v774
  %v1019 = vpack.c.b16 %v779, %v775
  %v1020 = vpack.c.b16 %v784, %v780
  %v1021 = vpack.c.b16 %v785, %v781
  %v1022 = vpack.c.b16 %v786, %v782
  %v1023 = vpack.c.b16 %v787, %v783
  %v1024 = vpack.c.b16 %v792, %v788
  %v1025 = vpack.c.b16 %v793, %v789
  %v1026 = vpack.c.b16 %v794, %v790
  %v1027 = vpack.c.b16 %v795, %v791
  %v1028 = vpack.c.b16 %v800, %v796
  %v1029 = vpack.c.b16 %v801, %v797
  %v1030 = vpack.c.b16 %v802, %v798
  %v1031 = vpack.c.b16 %v803, %v799
  %v1032 = vpack.c.b16 %v808, %v804
  %v1033 = vpack.c.b16 %v809, %v805
  %v1034 = vpack.c.b16 %v810, %v806
  %v1035 = vpack.c.b16 %v811, %v807
  %v1036 = vpack.c.b16 %v816, %v812
  %v1037 = vpack.c.b16 %v817, %v813
  %v1038 = vpack.c.b16 %v818, %v814
  %v1039 = vpack.c.b16 %v819, %v815
  %v1040 = vpack.c.b16 %v824, %v820
  %v1041 = vpack.c.b16 %v825, %v821
  %v1042 = vpack.c.b16 %v826, %v822
  %v1043 = vpack.c.b16 %v827, %v823
  %v1044 = vpack.c.b16 %v832, %v828
  %v1045 = vpack.c.b16 %v833, %v829
  %v1046 = vpack.c.b16 %v834, %v830
  %v1047 = vpack.c.b16 %v835, %v831
  %v1048 = vpack.c.b16 %v840, %v836
  %v1049 = vpack.c.b16 %v841, %v837
  %v1050 = vpack.c.b16 %v842, %v838
  %v1051 = vpack.c.b16 %v843, %v839
  %v1052 = vpack.c.b16 %v848, %v844
  %v1053 = vpack.c.b16 %v849, %v845
  %v1054 = vpack.c.b16 %v850, %v846
  %v1055 = vpack.c.b16 %v851, %v847
  %v1056 = vpack.c.b16 %v856, %v852
  %v1057 = vpack.c.b16 %v857, %v853
  %v1058 = vpack.c.b16 %v858, %v854
  %v1059 = vpack.c.b16 %v859, %v855
  %v1060 = vpack.c.b16 %v864, %v860
  %v1061 = vpack.c.b16 %v865, %v861
  %v1062 = vpack.c.b16 %v866, %v862
  %v1063 = vpack.c.b16 %v867, %v863
  %vm1260 = vcmask 130048
  %v1262 = vsel %vm1260, %v61, 0
  %1264 = vmatprep.subr.bf16.mxu0 %v869
  %1265 = vmatpush1.bf16.msra.mxu0 %v868
  %1266 = vmatprep.subr.bf16.mxu0 %v873
  %1267 = vmatpush1.bf16.msra.mxu0 %v872
  %1268 = vmatprep.subr.bf16.mxu0 %v877
  %1269 = vmatpush1.bf16.msra.mxu0 %v876
  %1270 = vmatprep.subr.bf16.mxu0 %v881
  %1271 = vmatpush1.bf16.msra.mxu0 %v880
  %1272 = vmatprep.subr.bf16.mxu0 %v885
  %1273 = vmatpush1.bf16.msra.mxu0 %v884
  %1274 = vmatprep.subr.bf16.mxu0 %v889
  %1275 = vmatpush1.bf16.msra.mxu0 %v888
  %1276 = vmatprep.subr.bf16.mxu0 %v893
  %1277 = vmatpush1.bf16.msra.mxu0 %v892
  %1278 = vmatprep.subr.bf16.mxu0 %v897
  %1279 = vmatpush1.bf16.msra.mxu0 %v896
  %1280 = vmatprep.subr.bf16.mxu0 %v901
  %1281 = vmatpush1.bf16.msra.mxu0 %v900
  %1282 = vmatprep.subr.bf16.mxu0 %v905
  %1283 = vmatpush1.bf16.msra.mxu0 %v904
  %1284 = vmatprep.subr.bf16.mxu0 %v909
  %1285 = vmatpush1.bf16.msra.mxu0 %v908
  %1286 = vmatprep.subr.bf16.mxu0 %v913
  %1287 = vmatpush1.bf16.msra.mxu0 %v912
  %1288 = vmatprep.subr.bf16.mxu0 %v917
  %1289 = vmatpush1.bf16.msra.mxu0 %v916
  %1290 = vmatprep.subr.bf16.mxu0 %v921
  %1291 = vmatpush1.bf16.msra.mxu0 %v920
  %1292 = vmatprep.subr.bf16.mxu0 %v925
  %1293 = vmatpush1.bf16.msra.mxu0 %v924
  %1294 = vmatprep.subr.bf16.mxu0 %v929
  %1295 = vmatpush1.bf16.msra.mxu0 %v928
  %1296 = vmatprep.mubr.bf16.mxu0 %v56
  %1297 = vmatmul.mubr.bf16.gmra.mrb[0].mxu0 %v55
  %v1298 = vpop.f32.mrb[0].mxu0
  %v1299 = vadd.f32 %v263, %v1298
  %v1300 = vpop.f32.mrb[0].mxu0
  %v1301 = vadd.f32 %v267, %v1300
  %v1302 = vpop.f32.mrb[0].mxu0
  %v1303 = vadd.f32 %v263, %v1302
  %v1304 = vpop.f32.mrb[0].mxu0
  %v1305 = vadd.f32 %v267, %v1304
  %1306 = vdwg.mxu0
  %1307 = vmatprep.subr.bf16.mxu0 %v933
  %1308 = vmatpush1.bf16.msra.mxu0 %v932
  %1309 = vmatprep.subr.bf16.mxu0 %v937
  %1310 = vmatpush1.bf16.msra.mxu0 %v936
  %1311 = vmatprep.subr.bf16.mxu0 %v941
  %1312 = vmatpush1.bf16.msra.mxu0 %v940
  %1313 = vmatprep.subr.bf16.mxu0 %v945
  %1314 = vmatpush1.bf16.msra.mxu0 %v944
  %1315 = vmatprep.subr.bf16.mxu0 %v949
  %1316 = vmatpush1.bf16.msra.mxu0 %v948
  %1317 = vmatprep.subr.bf16.mxu0 %v953
  %1318 = vmatpush1.bf16.msra.mxu0 %v952
  %1319 = vmatprep.subr.bf16.mxu0 %v957
  %1320 = vmatpush1.bf16.msra.mxu0 %v956
  %1321 = vmatprep.subr.bf16.mxu0 %v961
  %1322 = vmatpush1.bf16.msra.mxu0 %v960
  %1323 = vmatprep.subr.bf16.mxu0 %v965
  %1324 = vmatpush1.bf16.msra.mxu0 %v964
  %1325 = vmatprep.subr.bf16.mxu0 %v969
  %1326 = vmatpush1.bf16.msra.mxu0 %v968
  %1327 = vmatprep.subr.bf16.mxu0 %v973
  %1328 = vmatpush1.bf16.msra.mxu0 %v972
  %1329 = vmatprep.subr.bf16.mxu0 %v977
  %1330 = vmatpush1.bf16.msra.mxu0 %v976
  %1331 = vmatprep.subr.bf16.mxu0 %v981
  %1332 = vmatpush1.bf16.msra.mxu0 %v980
  %1333 = vmatprep.subr.bf16.mxu0 %v985
  %1334 = vmatpush1.bf16.msra.mxu0 %v984
  %1335 = vmatprep.subr.bf16.mxu0 %v989
  %1336 = vmatpush1.bf16.msra.mxu0 %v988
  %1337 = vmatprep.subr.bf16.mxu0 %v993
  %1338 = vmatpush1.bf16.msra.mxu0 %v992
  %1339 = vmatprep.mubr.bf16.mxu0 %v58
  %1340 = vmatmul.mubr.bf16.gmra.mrb[0].mxu0 %v57
  %v1341 = vpop.f32.mrb[0].mxu0
  %v1342 = vadd.f32 %v1299, %v1341
  %v1343 = vpop.f32.mrb[0].mxu0
  %v1344 = vadd.f32 %v1301, %v1343
  %v1345 = vpop.f32.mrb[0].mxu0
  %v1346 = vadd.f32 %v1303, %v1345
  %v1347 = vpop.f32.mrb[0].mxu0
  %v1348 = vadd.f32 %v1305, %v1347
  %1349 = vdwg.mxu0
  %1350 = vmatprep.subr.bf16.mxu0 %v997
  %1351 = vmatpush1.bf16.msra.mxu0 %v996
  %1352 = vmatprep.subr.bf16.mxu0 %v1001
  %1353 = vmatpush1.bf16.msra.mxu0 %v1000
  %1354 = vmatprep.subr.bf16.mxu0 %v1005
  %1355 = vmatpush1.bf16.msra.mxu0 %v1004
  %1356 = vmatprep.subr.bf16.mxu0 %v1009
  %1357 = vmatpush1.bf16.msra.mxu0 %v1008
  %1358 = vmatprep.subr.bf16.mxu0 %v1013
  %1359 = vmatpush1.bf16.msra.mxu0 %v1012
  %1360 = vmatprep.subr.bf16.mxu0 %v1017
  %1361 = vmatpush1.bf16.msra.mxu0 %v1016
  %1362 = vmatprep.subr.bf16.mxu0 %v1021
  %1363 = vmatpush1.bf16.msra.mxu0 %v1020
  %1364 = vmatprep.subr.bf16.mxu0 %v1025
  %1365 = vmatpush1.bf16.msra.mxu0 %v1024
  %1366 = vmatprep.subr.bf16.mxu0 %v1029
  %1367 = vmatpush1.bf16.msra.mxu0 %v1028
  %1368 = vmatprep.subr.bf16.mxu0 %v1033
  %1369 = vmatpush1.bf16.msra.mxu0 %v1032
  %1370 = vmatprep.subr.bf16.mxu0 %v1037
  %1371 = vmatpush1.bf16.msra.mxu0 %v1036
  %1372 = vmatprep.subr.bf16.mxu0 %v1041
  %1373 = vmatpush1.bf16.msra.mxu0 %v1040
  %1374 = vmatprep.subr.bf16.mxu0 %v1045
  %1375 = vmatpush1.bf16.msra.mxu0 %v1044
  %1376 = vmatprep.subr.bf16.mxu0 %v1049
  %1377 = vmatpush1.bf16.msra.mxu0 %v1048
  %1378 = vmatprep.subr.bf16.mxu0 %v1053
  %1379 = vmatpush1.bf16.msra.mxu0 %v1052
  %1380 = vmatprep.subr.bf16.mxu0 %v1057
  %1381 = vmatpush1.bf16.msra.mxu0 %v1056
  %1382 = vmatprep.mubr.bf16.mxu0 %v60
  %1383 = vmatmul.mubr.bf16.gmra.mrb[0].mxu0 %v59
  %v1384 = vpop.f32.mrb[0].mxu0
  %v1385 = vadd.f32 %v1342, %v1384
  %v1386 = vpop.f32.mrb[0].mxu0
  %v1387 = vadd.f32 %v1344, %v1386
  %v1388 = vpop.f32.mrb[0].mxu0
  %v1389 = vadd.f32 %v1346, %v1388
  %v1390 = vpop.f32.mrb[0].mxu0
  %v1391 = vadd.f32 %v1348, %v1390
  %1392 = vdwg.mxu0
  %1393 = vmatprep.subr.bf16.mxu0 %v1061
  %1394 = vmatpush1.bf16.msra.mxu0 %v1060
  %1395 = vmatprep.subr.bf16.mxu0 0
  %1396 = vmatpush1.bf16.msra.mxu0 0
  %1397 = vmatprep.subr.bf16.mxu0 0
  %1398 = vmatpush1.bf16.msra.mxu0 0
  %1399 = vmatprep.subr.bf16.mxu0 0
  %1400 = vmatpush1.bf16.msra.mxu0 0
  %1401 = vmatprep.subr.bf16.mxu0 0
  %1402 = vmatpush1.bf16.msra.mxu0 0
  %1403 = vmatprep.subr.bf16.mxu0 0
  %1404 = vmatpush1.bf16.msra.mxu0 0
  %1405 = vmatprep.subr.bf16.mxu0 0
  %1406 = vmatpush1.bf16.msra.mxu0 0
  %1407 = vmatprep.subr.bf16.mxu0 0
  %1408 = vmatpush1.bf16.msra.mxu0 0
  %1409 = vmatprep.subr.bf16.mxu0 0
  %1410 = vmatpush1.bf16.msra.mxu0 0
  %1411 = vmatprep.subr.bf16.mxu0 0
  %1412 = vmatpush1.bf16.msra.mxu0 0
  %1413 = vmatprep.subr.bf16.mxu0 0
  %1414 = vmatpush1.bf16.msra.mxu0 0
  %1415 = vmatprep.subr.bf16.mxu0 0
  %1416 = vmatpush1.bf16.msra.mxu0 0
  %1417 = vmatprep.subr.bf16.mxu0 0
  %1418 = vmatpush1.bf16.msra.mxu0 0
  %1419 = vmatprep.subr.bf16.mxu0 0
  %1420 = vmatpush1.bf16.msra.mxu0 0
  %1421 = vmatprep.subr.bf16.mxu0 0
  %1422 = vmatpush1.bf16.msra.mxu0 0
  %1423 = vmatprep.subr.bf16.mxu0 0
  %1424 = vmatpush1.bf16.msra.mxu0 0
  %1425 = vmatprep.mubr.bf16.mxu0 0
  %1426 = vmatmul.mubr.bf16.gmra.mrb[0].mxu0 %v1262
  %v1427 = vpop.f32.mrb[0].mxu0
  %v1428 = vadd.f32 %v1385, %v1427
  %v1429 = vpop.f32.mrb[0].mxu0
  %v1430 = vadd.f32 %v1387, %v1429
  %v1431 = vpop.f32.mrb[0].mxu0
  %v1432 = vadd.f32 %v1389, %v1431
  %v1433 = vpop.f32.mrb[0].mxu0
  %v1434 = vadd.f32 %v1391, %v1433
  %1435 = vdwg.mxu0
  %1436 = vmatprep.subr.bf16.mxu0 %v871
  %1437 = vmatpush1.bf16.msra.mxu0 %v870
  %1438 = vmatprep.subr.bf16.mxu0 %v875
  %1439 = vmatpush1.bf16.msra.mxu0 %v874
  %1440 = vmatprep.subr.bf16.mxu0 %v879
  %1441 = vmatpush1.bf16.msra.mxu0 %v878
  %1442 = vmatprep.subr.bf16.mxu0 %v883
  %1443 = vmatpush1.bf16.msra.mxu0 %v882
  %1444 = vmatprep.subr.bf16.mxu0 %v887
  %1445 = vmatpush1.bf16.msra.mxu0 %v886
  %1446 = vmatprep.subr.bf16.mxu0 %v891
  %1447 = vmatpush1.bf16.msra.mxu0 %v890
  %1448 = vmatprep.subr.bf16.mxu0 %v895
  %1449 = vmatpush1.bf16.msra.mxu0 %v894
  %1450 = vmatprep.subr.bf16.mxu0 %v899
  %1451 = vmatpush1.bf16.msra.mxu0 %v898
  %1452 = vmatprep.subr.bf16.mxu0 %v903
  %1453 = vmatpush1.bf16.msra.mxu0 %v902
  %1454 = vmatprep.subr.bf16.mxu0 %v907
  %1455 = vmatpush1.bf16.msra.mxu0 %v906
  %1456 = vmatprep.subr.bf16.mxu0 %v911
  %1457 = vmatpush1.bf16.msra.mxu0 %v910
  %1458 = vmatprep.subr.bf16.mxu0 %v915
  %1459 = vmatpush1.bf16.msra.mxu0 %v914
  %1460 = vmatprep.subr.bf16.mxu0 %v919
  %1461 = vmatpush1.bf16.msra.mxu0 %v918
  %1462 = vmatprep.subr.bf16.mxu0 %v923
  %1463 = vmatpush1.bf16.msra.mxu0 %v922
  %1464 = vmatprep.subr.bf16.mxu0 %v927
  %1465 = vmatpush1.bf16.msra.mxu0 %v926
  %1466 = vmatprep.subr.bf16.mxu0 %v931
  %1467 = vmatpush1.bf16.msra.mxu0 %v930
  %1468 = vmatprep.mubr.bf16.mxu0 %v56
  %1469 = vmatmul.mubr.bf16.gmra.mrb[0].mxu0 %v55
  %v1470 = vpop.f32.mrb[0].mxu0
  %v1471 = vadd.f32 %v271, %v1470
  %v1472 = vpop.f32.mrb[0].mxu0
  %v1473 = vadd.f32 %v275, %v1472
  %v1474 = vpop.f32.mrb[0].mxu0
  %v1475 = vadd.f32 %v271, %v1474
  %v1476 = vpop.f32.mrb[0].mxu0
  %v1477 = vadd.f32 %v275, %v1476
  %1478 = vdwg.mxu0
  %1479 = vmatprep.subr.bf16.mxu0 %v935
  %1480 = vmatpush1.bf16.msra.mxu0 %v934
  %1481 = vmatprep.subr.bf16.mxu0 %v939
  %1482 = vmatpush1.bf16.msra.mxu0 %v938
  %1483 = vmatprep.subr.bf16.mxu0 %v943
  %1484 = vmatpush1.bf16.msra.mxu0 %v942
  %1485 = vmatprep.subr.bf16.mxu0 %v947
  %1486 = vmatpush1.bf16.msra.mxu0 %v946
  %1487 = vmatprep.subr.bf16.mxu0 %v951
  %1488 = vmatpush1.bf16.msra.mxu0 %v950
  %1489 = vmatprep.subr.bf16.mxu0 %v955
  %1490 = vmatpush1.bf16.msra.mxu0 %v954
  %1491 = vmatprep.subr.bf16.mxu0 %v959
  %1492 = vmatpush1.bf16.msra.mxu0 %v958
  %1493 = vmatprep.subr.bf16.mxu0 %v963
  %1494 = vmatpush1.bf16.msra.mxu0 %v962
  %1495 = vmatprep.subr.bf16.mxu0 %v967
  %1496 = vmatpush1.bf16.msra.mxu0 %v966
  %1497 = vmatprep.subr.bf16.mxu0 %v971
  %1498 = vmatpush1.bf16.msra.mxu0 %v970
  %1499 = vmatprep.subr.bf16.mxu0 %v975
  %1500 = vmatpush1.bf16.msra.mxu0 %v974
  %1501 = vmatprep.subr.bf16.mxu0 %v979
  %1502 = vmatpush1.bf16.msra.mxu0 %v978
  %1503 = vmatprep.subr.bf16.mxu0 %v983
  %1504 = vmatpush1.bf16.msra.mxu0 %v982
  %1505 = vmatprep.subr.bf16.mxu0 %v987
  %1506 = vmatpush1.bf16.msra.mxu0 %v986
  %1507 = vmatprep.subr.bf16.mxu0 %v991
  %1508 = vmatpush1.bf16.msra.mxu0 %v990
  %1509 = vmatprep.subr.bf16.mxu0 %v995
  %1510 = vmatpush1.bf16.msra.mxu0 %v994
  %1511 = vmatprep.mubr.bf16.mxu0 %v58
  %1512 = vmatmul.mubr.bf16.gmra.mrb[0].mxu0 %v57
  %v1513 = vpop.f32.mrb[0].mxu0
  %v1514 = vadd.f32 %v1471, %v1513
  %v1515 = vpop.f32.mrb[0].mxu0
  %v1516 = vadd.f32 %v1473, %v1515
  %v1517 = vpop.f32.mrb[0].mxu0
  %v1518 = vadd.f32 %v1475, %v1517
  %v1519 = vpop.f32.mrb[0].mxu0
  %v1520 = vadd.f32 %v1477, %v1519
  %1521 = vdwg.mxu0
  %1522 = vmatprep.subr.bf16.mxu0 %v999
  %1523 = vmatpush1.bf16.msra.mxu0 %v998
  %1524 = vmatprep.subr.bf16.mxu0 %v1003
  %1525 = vmatpush1.bf16.msra.mxu0 %v1002
  %1526 = vmatprep.subr.bf16.mxu0 %v1007
  %1527 = vmatpush1.bf16.msra.mxu0 %v1006
  %1528 = vmatprep.subr.bf16.mxu0 %v1011
  %1529 = vmatpush1.bf16.msra.mxu0 %v1010
  %1530 = vmatprep.subr.bf16.mxu0 %v1015
  %1531 = vmatpush1.bf16.msra.mxu0 %v1014
  %1532 = vmatprep.subr.bf16.mxu0 %v1019
  %1533 = vmatpush1.bf16.msra.mxu0 %v1018
  %1534 = vmatprep.subr.bf16.mxu0 %v1023
  %1535 = vmatpush1.bf16.msra.mxu0 %v1022
  %1536 = vmatprep.subr.bf16.mxu0 %v1027
  %1537 = vmatpush1.bf16.msra.mxu0 %v1026
  %1538 = vmatprep.subr.bf16.mxu0 %v1031
  %1539 = vmatpush1.bf16.msra.mxu0 %v1030
  %1540 = vmatprep.subr.bf16.mxu0 %v1035
  %1541 = vmatpush1.bf16.msra.mxu0 %v1034
  %1542 = vmatprep.subr.bf16.mxu0 %v1039
  %1543 = vmatpush1.bf16.msra.mxu0 %v1038
  %1544 = vmatprep.subr.bf16.mxu0 %v1043
  %1545 = vmatpush1.bf16.msra.mxu0 %v1042
  %1546 = vmatprep.subr.bf16.mxu0 %v1047
  %1547 = vmatpush1.bf16.msra.mxu0 %v1046
  %1548 = vmatprep.subr.bf16.mxu0 %v1051
  %1549 = vmatpush1.bf16.msra.mxu0 %v1050
  %1550 = vmatprep.subr.bf16.mxu0 %v1055
  %1551 = vmatpush1.bf16.msra.mxu0 %v1054
  %1552 = vmatprep.subr.bf16.mxu0 %v1059
  %1553 = vmatpush1.bf16.msra.mxu0 %v1058
  %1554 = vmatprep.mubr.bf16.mxu0 %v60
  %1555 = vmatmul.mubr.bf16.gmra.mrb[0].mxu0 %v59
  %v1556 = vpop.f32.mrb[0].mxu0
  %v1557 = vadd.f32 %v1514, %v1556
  %v1558 = vpop.f32.mrb[0].mxu0
  %v1559 = vadd.f32 %v1516, %v1558
  %v1560 = vpop.f32.mrb[0].mxu0
  %v1561 = vadd.f32 %v1518, %v1560
  %v1562 = vpop.f32.mrb[0].mxu0
  %v1563 = vadd.f32 %v1520, %v1562
  %1564 = vdwg.mxu0
  %1565 = vmatprep.subr.bf16.mxu0 %v1063
  %1566 = vmatpush1.bf16.msra.mxu0 %v1062
  %1567 = vmatprep.subr.bf16.mxu0 0
  %1568 = vmatpush1.bf16.msra.mxu0 0
  %1569 = vmatprep.subr.bf16.mxu0 0
  %1570 = vmatpush1.bf16.msra.mxu0 0
  %1571 = vmatprep.subr.bf16.mxu0 0
  %1572 = vmatpush1.bf16.msra.mxu0 0
  %1573 = vmatprep.subr.bf16.mxu0 0
  %1574 = vmatpush1.bf16.msra.mxu0 0
  %1575 = vmatprep.subr.bf16.mxu0 0
  %1576 = vmatpush1.bf16.msra.mxu0 0
  %1577 = vmatprep.subr.bf16.mxu0 0
  %1578 = vmatpush1.bf16.msra.mxu0 0
  %1579 = vmatprep.subr.bf16.mxu0 0
  %1580 = vmatpush1.bf16.msra.mxu0 0
  %1581 = vmatprep.subr.bf16.mxu0 0
  %1582 = vmatpush1.bf16.msra.mxu0 0
  %1583 = vmatprep.subr.bf16.mxu0 0
  %1584 = vmatpush1.bf16.msra.mxu0 0
  %1585 = vmatprep.subr.bf16.mxu0 0
  %1586 = vmatpush1.bf16.msra.mxu0 0
  %1587 = vmatprep.subr.bf16.mxu0 0
  %1588 = vmatpush1.bf16.msra.mxu0 0
  %1589 = vmatprep.subr.bf16.mxu0 0
  %1590 = vmatpush1.bf16.msra.mxu0 0
  %1591 = vmatprep.subr.bf16.mxu0 0
  %1592 = vmatpush1.bf16.msra.mxu0 0
  %1593 = vmatprep.subr.bf16.mxu0 0
  %1594 = vmatpush1.bf16.msra.mxu0 0
  %1595 = vmatprep.subr.bf16.mxu0 0
  %1596 = vmatpush1.bf16.msra.mxu0 0
  %1597 = vmatprep.mubr.bf16.mxu0 0
  %1598 = vmatmul.mubr.bf16.gmra.mrb[0].mxu0 %v1262
  %v1599 = vpop.f32.mrb[0].mxu0
  %v1600 = vadd.f32 %v1557, %v1599
  %v1601 = vpop.f32.mrb[0].mxu0
  %v1602 = vadd.f32 %v1559, %v1601
  %v1603 = vpop.f32.mrb[0].mxu0
  %v1604 = vadd.f32 %v1561, %v1603
  %v1605 = vpop.f32.mrb[0].mxu0
  %v1606 = vadd.f32 %v1563, %v1605
  %1607 = vdwg.mxu0
  %v1608 = vmax.f32 %v1428, 0.0
  %v1609 = vmax.f32 %v1430, 0.0
  %v1610 = vmax.f32 %v1600, 0.0
  %v1611 = vmax.f32 %v1602, 0.0
  %v1612 = vmax.f32 %v1432, 0.0
  %v1613 = vmax.f32 %v1434, 0.0
  %v1614 = vmax.f32 %v1604, 0.0
  %v1615 = vmax.f32 %v1606, 0.0
  %v1616 = vpack.c.bf16 %v1612, %v1608
  %v1617 = vpack.c.bf16 %v1613, %v1609
  %v1618 = vpack.c.bf16 %v1614, %v1610
  %v1619 = vpack.c.bf16 %v1615, %v1611
  %v1620 = vld [vmem:[%s3] sm:$0xf]
  %v1621 = vld [vmem:[%s3 + $0x4] sm:$0xf]
  %v1622 = vld [vmem:[%s3 + $0x8] sm:$0xf]
  %v1623 = vld [vmem:[%s3 + $0xc] sm:$0xf]
  %v1624 = vld [vmem:[%s3 + $0x10] sm:$0xf]
  %v1625 = vld [vmem:[%s3 + $0x14] sm:$0xf]
  %v1626 = vld [vmem:[%s3 + $0x18] sm:$0xf]
  %v1627 = vld [vmem:[%s3 + $0x1c] sm:$0xf]
  %v1628 = vld [vmem:[%s3 + $0x20] sm:$0xf]
  %v1629 = vld [vmem:[%s3 + $0x24] sm:$0xf]
  %v1630 = vld [vmem:[%s3 + $0x28] sm:$0xf]
  %v1631 = vld [vmem:[%s3 + $0x2c] sm:$0xf]
  %v1632 = vld [vmem:[%s3 + $0x30] sm:$0xf]
  %v1633 = vld [vmem:[%s3 + $0x34] sm:$0xf]
  %v1634 = vld [vmem:[%s3 + $0x38] sm:$0xf]
  %v1635 = vld [vmem:[%s3 + $0x3c] sm:$0xf]
  %v1636 = vld [vmem:[%s3 + $0x40] sm:$0xf]
  %v1637 = vld [vmem:[%s3 + $0x44] sm:$0xf]
  %v1638 = vld [vmem:[%s3 + $0x48] sm:$0xf]
  %v1639 = vld [vmem:[%s3 + $0x4c] sm:$0xf]
  %v1640 = vld [vmem:[%s3 + $0x50] sm:$0xf]
  %v1641 = vld [vmem:[%s3 + $0x54] sm:$0xf]
  %v1642 = vld [vmem:[%s3 + $0x58] sm:$0xf]
  %v1643 = vld [vmem:[%s3 + $0x5c] sm:$0xf]
  %v1644 = vld [vmem:[%s3 + $0x60] sm:$0xf]
  %v1645 = vld [vmem:[%s3 + $0x64] sm:$0xf]
  %v1646 = vld [vmem:[%s3 + $0x68] sm:$0xf]
  %v1647 = vld [vmem:[%s3 + $0x6c] sm:$0xf]
  %v1648 = vld [vmem:[%s3 + $0x70] sm:$0xf]
  %v1649 = vld [vmem:[%s3 + $0x74] sm:$0xf]
  %v1650 = vld [vmem:[%s3 + $0x78] sm:$0xf]
  %v1651 = vld [vmem:[%s3 + $0x7c] sm:$0xf]
  %v1652 = vld [vmem:[%s3 + $0x80] sm:$0xf]
  %v1653 = vld [vmem:[%s3 + $0x84] sm:$0xf]
  %v1654 = vld [vmem:[%s3 + $0x88] sm:$0xf]
  %v1655 = vld [vmem:[%s3 + $0x8c] sm:$0xf]
  %v1656 = vld [vmem:[%s3 + $0x90] sm:$0xf]
  %v1657 = vld [vmem:[%s3 + $0x94] sm:$0xf]
  %v1658 = vld [vmem:[%s3 + $0x98] sm:$0xf]
  %v1659 = vld [vmem:[%s3 + $0x9c] sm:$0xf]
  %v1660 = vld [vmem:[%s3 + $0xa0] sm:$0xf]
  %v1661 = vld [vmem:[%s3 + $0xa4] sm:$0xf]
  %v1662 = vld [vmem:[%s3 + $0xa8] sm:$0xf]
  %v1663 = vld [vmem:[%s3 + $0xac] sm:$0xf]
  %v1664 = vld [vmem:[%s3 + $0xb0] sm:$0xf]
  %v1665 = vld [vmem:[%s3 + $0xb4] sm:$0xf]
  %v1666 = vld [vmem:[%s3 + $0xb8] sm:$0xf]
  %v1667 = vld [vmem:[%s3 + $0xbc] sm:$0xf]
  %v1668 = vld [vmem:[%s3 + $0xc0] sm:$0xf]
  %v1669 = vld [vmem:[%s3 + $0xc4] sm:$0xf]
  %v1670 = vld [vmem:[%s3 + $0xc8] sm:$0xf]
  %v1671 = vld [vmem:[%s3 + $0xcc] sm:$0xf]
  %v1672 = vld [vmem:[%s3 + $0xd0] sm:$0xf]
  %v1673 = vld [vmem:[%s3 + $0xd4] sm:$0xf]
  %v1674 = vld [vmem:[%s3 + $0xd8] sm:$0xf]
  %v1675 = vld [vmem:[%s3 + $0xdc] sm:$0xf]
  %v1676 = vld [vmem:[%s3 + $0xe0] sm:$0xf]
  %v1677 = vld [vmem:[%s3 + $0xe4] sm:$0xf]
  %v1678 = vld [vmem:[%s3 + $0xe8] sm:$0xf]
  %v1679 = vld [vmem:[%s3 + $0xec] sm:$0xf]
  %v1680 = vld [vmem:[%s3 + $0xf0] sm:$0xf]
  %v1681 = vld [vmem:[%s3 + $0xf4] sm:$0xf]
  %v1682 = vld [vmem:[%s3 + $0xf8] sm:$0xf]
  %v1683 = vld [vmem:[%s3 + $0xfc] sm:$0xf]
  %v1684 = vld [vmem:[%s4] sm:$0x1]
  %v1686 = vlaneseq
  %v1687 = vshrl.u32 %v1686, 7
  %v1688 = vsub.s32 0, %v1687
  %v1689 = vrot.slane %v1684, %v1688
  %v1755 = vunpack.c.l.b16 %v1620
  %v1756 = vunpack.c.l.b16 %v1621
  %v1757 = vunpack.c.l.b16 %v1622
  %v1758 = vunpack.c.l.b16 %v1623
  %v1759 = vunpack.c.l.b16 %v1624
  %v1760 = vunpack.c.l.b16 %v1625
  %v1761 = vunpack.c.l.b16 %v1626
  %v1762 = vunpack.c.l.b16 %v1627
  %v1763 = vunpack.c.l.b16 %v1628
  %v1764 = vunpack.c.l.b16 %v1629
  %v1765 = vunpack.c.l.b16 %v1630
  %v1766 = vunpack.c.l.b16 %v1631
  %v1767 = vunpack.c.l.b16 %v1632
  %v1768 = vunpack.c.l.b16 %v1633
  %v1769 = vunpack.c.l.b16 %v1634
  %v1770 = vunpack.c.l.b16 %v1635
  %v1771 = vunpack.c.l.b16 %v1636
  %v1772 = vunpack.c.l.b16 %v1637
  %v1773 = vunpack.c.l.b16 %v1638
  %v1774 = vunpack.c.l.b16 %v1639
  %v1775 = vunpack.c.l.b16 %v1640
  %v1776 = vunpack.c.l.b16 %v1641
  %v1777 = vunpack.c.l.b16 %v1642
  %v1778 = vunpack.c.l.b16 %v1643
  %v1779 = vunpack.c.l.b16 %v1644
  %v1780 = vunpack.c.l.b16 %v1645
  %v1781 = vunpack.c.l.b16 %v1646
  %v1782 = vunpack.c.l.b16 %v1647
  %v1783 = vunpack.c.l.b16 %v1648
  %v1784 = vunpack.c.l.b16 %v1649
  %v1785 = vunpack.c.l.b16 %v1650
  %v1786 = vunpack.c.l.b16 %v1651
  %v1787 = vunpack.c.l.b16 %v1652
  %v1788 = vunpack.c.l.b16 %v1653
  %v1789 = vunpack.c.l.b16 %v1654
  %v1790 = vunpack.c.l.b16 %v1655
  %v1791 = vunpack.c.l.b16 %v1656
  %v1792 = vunpack.c.l.b16 %v1657
  %v1793 = vunpack.c.l.b16 %v1658
  %v1794 = vunpack.c.l.b16 %v1659
  %v1795 = vunpack.c.l.b16 %v1660
  %v1796 = vunpack.c.l.b16 %v1661
  %v1797 = vunpack.c.l.b16 %v1662
  %v1798 = vunpack.c.l.b16 %v1663
  %v1799 = vunpack.c.l.b16 %v1664
  %v1800 = vunpack.c.l.b16 %v1665
  %v1801 = vunpack.c.l.b16 %v1666
  %v1802 = vunpack.c.l.b16 %v1667
  %v1803 = vunpack.c.l.b16 %v1668
  %v1804 = vunpack.c.l.b16 %v1669
  %v1805 = vunpack.c.l.b16 %v1670
  %v1806 = vunpack.c.l.b16 %v1671
  %v1807 = vunpack.c.l.b16 %v1672
  %v1808 = vunpack.c.l.b16 %v1673
  %v1809 = vunpack.c.l.b16 %v1674
  %v1810 = vunpack.c.l.b16 %v1675
  %v1811 = vunpack.c.l.b16 %v1676
  %v1812 = vunpack.c.l.b16 %v1677
  %v1813 = vunpack.c.l.b16 %v1678
  %v1814 = vunpack.c.l.b16 %v1679
  %v1815 = vunpack.c.l.b16 %v1680
  %v1816 = vunpack.c.l.b16 %v1681
  %v1817 = vunpack.c.l.b16 %v1682
  %v1818 = vunpack.c.l.b16 %v1683
  %v1819 = vpack.c.b16 %v1756, %v1755
  %v1820 = vpack.c.b16 %v1758, %v1757
  %v1821 = vpack.c.b16 %v1760, %v1759
  %v1822 = vpack.c.b16 %v1762, %v1761
  %v1823 = vpack.c.b16 %v1764, %v1763
  %v1824 = vpack.c.b16 %v1766, %v1765
  %v1825 = vpack.c.b16 %v1768, %v1767
  %v1826 = vpack.c.b16 %v1770, %v1769
  %v1827 = vpack.c.b16 %v1772, %v1771
  %v1828 = vpack.c.b16 %v1774, %v1773
  %v1829 = vpack.c.b16 %v1776, %v1775
  %v1830 = vpack.c.b16 %v1778, %v1777
  %v1831 = vpack.c.b16 %v1780, %v1779
  %v1832 = vpack.c.b16 %v1782, %v1781
  %v1833 = vpack.c.b16 %v1784, %v1783
  %v1834 = vpack.c.b16 %v1786, %v1785
  %v1835 = vpack.c.b16 %v1788, %v1787
  %v1836 = vpack.c.b16 %v1790, %v1789
  %v1837 = vpack.c.b16 %v1792, %v1791
  %v1838 = vpack.c.b16 %v1794, %v1793
  %v1839 = vpack.c.b16 %v1796, %v1795
  %v1840 = vpack.c.b16 %v1798, %v1797
  %v1841 = vpack.c.b16 %v1800, %v1799
  %v1842 = vpack.c.b16 %v1802, %v1801
  %v1843 = vpack.c.b16 %v1804, %v1803
  %v1844 = vpack.c.b16 %v1806, %v1805
  %v1845 = vpack.c.b16 %v1808, %v1807
  %v1846 = vpack.c.b16 %v1810, %v1809
  %v1847 = vpack.c.b16 %v1812, %v1811
  %v1848 = vpack.c.b16 %v1814, %v1813
  %v1849 = vpack.c.b16 %v1816, %v1815
  %v1850 = vpack.c.b16 %v1818, %v1817
  %1883 = vmatprep.subr.bf16.mxu0 0
  %1884 = vmatpush1.bf16.msra.mxu0 %v1819
  %1885 = vmatprep.subr.bf16.mxu0 0
  %1886 = vmatpush1.bf16.msra.mxu0 %v1820
  %1887 = vmatprep.subr.bf16.mxu0 0
  %1888 = vmatpush1.bf16.msra.mxu0 %v1821
  %1889 = vmatprep.subr.bf16.mxu0 0
  %1890 = vmatpush1.bf16.msra.mxu0 %v1822
  %1891 = vmatprep.subr.bf16.mxu0 0
  %1892 = vmatpush1.bf16.msra.mxu0 %v1823
  %1893 = vmatprep.subr.bf16.mxu0 0
  %1894 = vmatpush1.bf16.msra.mxu0 %v1824
  %1895 = vmatprep.subr.bf16.mxu0 0
  %1896 = vmatpush1.bf16.msra.mxu0 %v1825
  %1897 = vmatprep.subr.bf16.mxu0 0
  %1898 = vmatpush1.bf16.msra.mxu0 %v1826
  %1899 = vmatprep.subr.bf16.mxu0 0
  %1900 = vmatpush1.bf16.msra.mxu0 %v1827
  %1901 = vmatprep.subr.bf16.mxu0 0
  %1902 = vmatpush1.bf16.msra.mxu0 %v1828
  %1903 = vmatprep.subr.bf16.mxu0 0
  %1904 = vmatpush1.bf16.msra.mxu0 %v1829
  %1905 = vmatprep.subr.bf16.mxu0 0
  %1906 = vmatpush1.bf16.msra.mxu0 %v1830
  %1907 = vmatprep.subr.bf16.mxu0 0
  %1908 = vmatpush1.bf16.msra.mxu0 %v1831
  %1909 = vmatprep.subr.bf16.mxu0 0
  %1910 = vmatpush1.bf16.msra.mxu0 %v1832
  %1911 = vmatprep.subr.bf16.mxu0 0
  %1912 = vmatpush1.bf16.msra.mxu0 %v1833
  %1913 = vmatprep.subr.bf16.mxu0 0
  %1914 = vmatpush1.bf16.msra.mxu0 %v1834
  %1915 = vmatprep.mubr.bf16.mxu0 %v1617
  %1916 = vmatmul.mubr.bf16.gmra.mrb[0].mxu0 %v1616
  %v1917 = vpop.f32.mrb[0].mxu0
  %v1918 = vadd.f32 %v1689, %v1917
  %v1919 = vpop.f32.mrb[0].mxu0
  %v1920 = vpop.f32.mrb[0].mxu0
  %v1921 = vadd.f32 %v1689, %v1920
  %v1922 = vpop.f32.mrb[0].mxu0
  %1923 = vdwg.mxu0
  %1924 = vmatprep.subr.bf16.mxu0 0
  %1925 = vmatpush1.bf16.msra.mxu0 %v1835
  %1926 = vmatprep.subr.bf16.mxu0 0
  %1927 = vmatpush1.bf16.msra.mxu0 %v1836
  %1928 = vmatprep.subr.bf16.mxu0 0
  %1929 = vmatpush1.bf16.msra.mxu0 %v1837
  %1930 = vmatprep.subr.bf16.mxu0 0
  %1931 = vmatpush1.bf16.msra.mxu0 %v1838
  %1932 = vmatprep.subr.bf16.mxu0 0
  %1933 = vmatpush1.bf16.msra.mxu0 %v1839
  %1934 = vmatprep.subr.bf16.mxu0 0
  %1935 = vmatpush1.bf16.msra.mxu0 %v1840
  %1936 = vmatprep.subr.bf16.mxu0 0
  %1937 = vmatpush1.bf16.msra.mxu0 %v1841
  %1938 = vmatprep.subr.bf16.mxu0 0
  %1939 = vmatpush1.bf16.msra.mxu0 %v1842
  %1940 = vmatprep.subr.bf16.mxu0 0
  %1941 = vmatpush1.bf16.msra.mxu0 %v1843
  %1942 = vmatprep.subr.bf16.mxu0 0
  %1943 = vmatpush1.bf16.msra.mxu0 %v1844
  %1944 = vmatprep.subr.bf16.mxu0 0
  %1945 = vmatpush1.bf16.msra.mxu0 %v1845
  %1946 = vmatprep.subr.bf16.mxu0 0
  %1947 = vmatpush1.bf16.msra.mxu0 %v1846
  %1948 = vmatprep.subr.bf16.mxu0 0
  %1949 = vmatpush1.bf16.msra.mxu0 %v1847
  %1950 = vmatprep.subr.bf16.mxu0 0
  %1951 = vmatpush1.bf16.msra.mxu0 %v1848
  %1952 = vmatprep.subr.bf16.mxu0 0
  %1953 = vmatpush1.bf16.msra.mxu0 %v1849
  %1954 = vmatprep.subr.bf16.mxu0 0
  %1955 = vmatpush1.bf16.msra.mxu0 %v1850
  %1956 = vmatprep.mubr.bf16.mxu0 %v1619
  %1957 = vmatmul.mubr.bf16.gmra.mrb[0].mxu0 %v1618
  %v1958 = vpop.f32.mrb[0].mxu0
  %v1959 = vadd.f32 %v1918, %v1958
  %v1960 = vpop.f32.mrb[0].mxu0
  %v1961 = vpop.f32.mrb[0].mxu0
  %v1962 = vadd.f32 %v1921, %v1961
  %v1963 = vpop.f32.mrb[0].mxu0
  %1964 = vdwg.mxu0
  %v1965 = vmax.f32 %v1959, 0.0
  %v1966 = vmax.f32 %v1962, 0.0
  %v1967 = vpack.c.bf16 %v1966, %v1965
  %v1968 = vld [vmem:[%s5] sm:$0xff]
  %v1969 = vld [vmem:[%s5 + $0x8] sm:$0xff]
  %v1970 = vld [vmem:[%s5 + $0x10] sm:$0xff]
  %v1971 = vld [vmem:[%s5 + $0x18] sm:$0xff]
  %v1972 = vld [vmem:[%s5 + $0x20] sm:$0xff]
  %v1973 = vld [vmem:[%s5 + $0x28] sm:$0xff]
  %v1974 = vld [vmem:[%s5 + $0x30] sm:$0xff]
  %v1975 = vld [vmem:[%s5 + $0x38] sm:$0xff]
  %v1976 = vld [vmem:[%s5 + $0x40] sm:$0xff]
  %v1977 = vld [vmem:[%s5 + $0x48] sm:$0xff]
  %v1978 = vld [vmem:[%s5 + $0x50] sm:$0xff]
  %v1979 = vld [vmem:[%s5 + $0x58] sm:$0xff]
  %v1980 = vld [vmem:[%s5 + $0x60] sm:$0xff]
  %v1981 = vld [vmem:[%s5 + $0x68] sm:$0xff]
  %v1982 = vld [vmem:[%s5 + $0x70] sm:$0xff]
  %v1983 = vld [vmem:[%s5 + $0x78] sm:$0xff]
  %v1984 = vld [vmem:[%s6] sm:$0x3]
  %v1986 = vlaneseq
  %v1987 = vshrl.u32 %v1986, 7
  %v1988 = vsub.s32 0, %v1987
  %v1989 = vrot.slane %v1984, %v1988
  %v1990 = vlaneseq
  %v1991 = vshrl.u32 %v1990, 7
  %v1992 = vsub.s32 1, %v1991
  %v1993 = vrot.slane %v1984, %v1992
  %v2012 = vunpack.c.l.b16 %v1968
  %v2013 = vunpack.c.h.b16 %v1968
  %v2014 = vunpack.c.l.b16 %v1969
  %v2015 = vunpack.c.h.b16 %v1969
  %v2016 = vunpack.c.l.b16 %v1970
  %v2017 = vunpack.c.h.b16 %v1970
  %v2018 = vunpack.c.l.b16 %v1971
  %v2019 = vunpack.c.h.b16 %v1971
  %v2020 = vunpack.c.l.b16 %v1972
  %v2021 = vunpack.c.h.b16 %v1972
  %v2022 = vunpack.c.l.b16 %v1973
  %v2023 = vunpack.c.h.b16 %v1973
  %v2024 = vunpack.c.l.b16 %v1974
  %v2025 = vunpack.c.h.b16 %v1974
  %v2026 = vunpack.c.l.b16 %v1975
  %v2027 = vunpack.c.h.b16 %v1975
  %v2028 = vunpack.c.l.b16 %v1976
  %v2029 = vunpack.c.h.b16 %v1976
  %v2030 = vunpack.c.l.b16 %v1977
  %v2031 = vunpack.c.h.b16 %v1977
  %v2032 = vunpack.c.l.b16 %v1978
  %v2033 = vunpack.c.h.b16 %v1978
  %v2034 = vunpack.c.l.b16 %v1979
  %v2035 = vunpack.c.h.b16 %v1979
  %v2036 = vunpack.c.l.b16 %v1980
  %v2037 = vunpack.c.h.b16 %v1980
  %v2038 = vunpack.c.l.b16 %v1981
  %v2039 = vunpack.c.h.b16 %v1981
  %v2040 = vunpack.c.l.b16 %v1982
  %v2041 = vunpack.c.h.b16 %v1982
  %v2042 = vunpack.c.l.b16 %v1983
  %v2043 = vunpack.c.h.b16 %v1983
  %v2044 = vpack.c.b16 %v2014, %v2012
  %v2045 = vpack.c.b16 %v2015, %v2013
  %v2046 = vpack.c.b16 %v2018, %v2016
  %v2047 = vpack.c.b16 %v2019, %v2017
  %v2048 = vpack.c.b16 %v2022, %v2020
  %v2049 = vpack.c.b16 %v2023, %v2021
  %v2050 = vpack.c.b16 %v2026, %v2024
  %v2051 = vpack.c.b16 %v2027, %v2025
  %v2052 = vpack.c.b16 %v2030, %v2028
  %v2053 = vpack.c.b16 %v2031, %v2029
  %v2054 = vpack.c.b16 %v2034, %v2032
  %v2055 = vpack.c.b16 %v2035, %v2033
  %v2056 = vpack.c.b16 %v2038, %v2036
  %v2057 = vpack.c.b16 %v2039, %v2037
  %v2058 = vpack.c.b16 %v2042, %v2040
  %v2059 = vpack.c.b16 %v2043, %v2041
  %2076 = vmatprep.subr.bf16.mxu0 %v2045
  %2077 = vmatpush1.bf16.msra.mxu0 %v2044
  %2078 = vmatprep.subr.bf16.mxu0 %v2047
  %2079 = vmatpush1.bf16.msra.mxu0 %v2046
  %2080 = vmatprep.subr.bf16.mxu0 %v2049
  %2081 = vmatpush1.bf16.msra.mxu0 %v2048
  %2082 = vmatprep.subr.bf16.mxu0 %v2051
  %2083 = vmatpush1.bf16.msra.mxu0 %v2050
  %2084 = vmatprep.subr.bf16.mxu0 %v2053
  %2085 = vmatpush1.bf16.msra.mxu0 %v2052
  %2086 = vmatprep.subr.bf16.mxu0 %v2055
  %2087 = vmatpush1.bf16.msra.mxu0 %v2054
  %2088 = vmatprep.subr.bf16.mxu0 %v2057
  %2089 = vmatpush1.bf16.msra.mxu0 %v2056
  %2090 = vmatprep.subr.bf16.mxu0 %v2059
  %2091 = vmatpush1.bf16.msra.mxu0 %v2058
  %2092 = vmatprep.subr.bf16.mxu0 0
  %2093 = vmatpush1.bf16.msra.mxu0 0
  %2094 = vmatprep.subr.bf16.mxu0 0
  %2095 = vmatpush1.bf16.msra.mxu0 0
  %2096 = vmatprep.subr.bf16.mxu0 0
  %2097 = vmatpush1.bf16.msra.mxu0 0
  %2098 = vmatprep.subr.bf16.mxu0 0
  %2099 = vmatpush1.bf16.msra.mxu0 0
  %2100 = vmatprep.subr.bf16.mxu0 0
  %2101 = vmatpush1.bf16.msra.mxu0 0
  %2102 = vmatprep.subr.bf16.mxu0 0
  %2103 = vmatpush1.bf16.msra.mxu0 0
  %2104 = vmatprep.subr.bf16.mxu0 0
  %2105 = vmatpush1.bf16.msra.mxu0 0
  %2106 = vmatprep.subr.bf16.mxu0 0
  %2107 = vmatpush1.bf16.msra.mxu0 0
  %2108 = vmatprep.mubr.bf16.mxu0 0
  %2109 = vmatmul.mubr.bf16.gmra.mrb[0].mxu0 %v1967
  %v2110 = vpop.f32.mrb[0].mxu0
  %v2111 = vadd.f32 %v1989, %v2110
  %v2112 = vpop.f32.mrb[0].mxu0
  %v2113 = vadd.f32 %v1993, %v2112
  %v2114 = vpop.f32.mrb[0].mxu0
  %v2115 = vadd.f32 %v1989, %v2114
  %v2116 = vpop.f32.mrb[0].mxu0
  %v2117 = vadd.f32 %v1993, %v2116
  %2118 = vdwg.mxu0
  %v2119 = vmax.f32 %v2113, 0.0
  %v2120 = vmax.f32 %v2117, 0.0
  %v2121 = vpack.c.bf16 %v2120, %v2119
  %v2122 = vld [vmem:[%s7] sm:$0xff]
  %v2123 = vld [vmem:[%s7 + $0x8] sm:$0xff]
  %v2124 = vld [vmem:[%s7 + $0x10] sm:$0xff]
  %v2125 = vld [vmem:[%s7 + $0x18] sm:$0xff]
  %v2126 = vld [vmem:[%s7 + $0x20] sm:$0xff]
  %v2127 = vld [vmem:[%s7 + $0x28] sm:$0xff]
  %v2128 = vld [vmem:[%s7 + $0x30] sm:$0xff]
  %v2129 = vld [vmem:[%s7 + $0x38] sm:$0xff]
  %v2130 = vld [vmem:[%s7 + $0x40] sm:$0xff]
  %v2131 = vld [vmem:[%s7 + $0x48] sm:$0xff]
  %v2132 = vld [vmem:[%s7 + $0x50] sm:$0xff]
  %v2133 = vld [vmem:[%s7 + $0x58] sm:$0xff]
  %v2134 = vld [vmem:[%s7 + $0x60] sm:$0xff]
  %v2135 = vld [vmem:[%s7 + $0x68] sm:$0xff]
  %v2136 = vld [vmem:[%s7 + $0x70] sm:$0xff]
  %v2137 = vld [vmem:[%s7 + $0x78] sm:$0xff]
  %v2138 = vld [vmem:[%s7 + $0x80] sm:$0xff]
  %v2139 = vld [vmem:[%s7 + $0x88] sm:$0xff]
  %v2140 = vld [vmem:[%s7 + $0x90] sm:$0xff]
  %v2141 = vld [vmem:[%s7 + $0x98] sm:$0xff]
  %v2142 = vld [vmem:[%s7 + $0xa0] sm:$0xff]
  %v2143 = vld [vmem:[%s7 + $0xa8] sm:$0xff]
  %v2144 = vld [vmem:[%s7 + $0xb0] sm:$0xff]
  %v2145 = vld [vmem:[%s7 + $0xb8] sm:$0xff]
  %v2146 = vld [vmem:[%s7 + $0xc0] sm:$0xff]
  %v2147 = vld [vmem:[%s7 + $0xc8] sm:$0xff]
  %v2148 = vld [vmem:[%s7 + $0xd0] sm:$0xff]
  %v2149 = vld [vmem:[%s7 + $0xd8] sm:$0xff]
  %v2150 = vld [vmem:[%s7 + $0xe0] sm:$0xff]
  %v2151 = vld [vmem:[%s7 + $0xe8] sm:$0xff]
  %v2152 = vld [vmem:[%s7 + $0xf0] sm:$0xff]
  %v2153 = vld [vmem:[%s7 + $0xf8] sm:$0xff]
  %v2154 = vld [vmem:[%s8] sm:$0xf]
  %v2156 = vlaneseq
  %v2157 = vshrl.u32 %v2156, 7
  %v2158 = vsub.s32 0, %v2157
  %v2159 = vrot.slane %v2154, %v2158
  %v2160 = vlaneseq
  %v2161 = vshrl.u32 %v2160, 7
  %v2162 = vsub.s32 1, %v2161
  %v2163 = vrot.slane %v2154, %v2162
  %v2164 = vlaneseq
  %v2165 = vshrl.u32 %v2164, 7
  %v2166 = vsub.s32 2, %v2165
  %v2167 = vrot.slane %v2154, %v2166
  %v2168 = vlaneseq
  %v2169 = vshrl.u32 %v2168, 7
  %v2170 = vsub.s32 3, %v2169
  %v2171 = vrot.slane %v2154, %v2170
  %v2208 = vunpack.c.l.b16 %v2122
  %v2209 = vunpack.c.h.b16 %v2122
  %v2210 = vunpack.c.l.b16 %v2123
  %v2211 = vunpack.c.h.b16 %v2123
  %v2212 = vunpack.c.l.b16 %v2124
  %v2213 = vunpack.c.h.b16 %v2124
  %v2214 = vunpack.c.l.b16 %v2125
  %v2215 = vunpack.c.h.b16 %v2125
  %v2216 = vunpack.c.l.b16 %v2126
  %v2217 = vunpack.c.h.b16 %v2126
  %v2218 = vunpack.c.l.b16 %v2127
  %v2219 = vunpack.c.h.b16 %v2127
  %v2220 = vunpack.c.l.b16 %v2128
  %v2221 = vunpack.c.h.b16 %v2128
  %v2222 = vunpack.c.l.b16 %v2129
  %v2223 = vunpack.c.h.b16 %v2129
  %v2224 = vunpack.c.l.b16 %v2130
  %v2225 = vunpack.c.h.b16 %v2130
  %v2226 = vunpack.c.l.b16 %v2131
  %v2227 = vunpack.c.h.b16 %v2131
  %v2228 = vunpack.c.l.b16 %v2132
  %v2229 = vunpack.c.h.b16 %v2132
  %v2230 = vunpack.c.l.b16 %v2133
  %v2231 = vunpack.c.h.b16 %v2133
  %v2232 = vunpack.c.l.b16 %v2134
  %v2233 = vunpack.c.h.b16 %v2134
  %v2234 = vunpack.c.l.b16 %v2135
  %v2235 = vunpack.c.h.b16 %v2135
  %v2236 = vunpack.c.l.b16 %v2136
  %v2237 = vunpack.c.h.b16 %v2136
  %v2238 = vunpack.c.l.b16 %v2137
  %v2239 = vunpack.c.h.b16 %v2137
  %v2240 = vunpack.c.l.b16 %v2138
  %v2241 = vunpack.c.h.b16 %v2138
  %v2242 = vunpack.c.l.b16 %v2139
  %v2243 = vunpack.c.h.b16 %v2139
  %v2244 = vunpack.c.l.b16 %v2140
  %v2245 = vunpack.c.h.b16 %v2140
  %v2246 = vunpack.c.l.b16 %v2141
  %v2247 = vunpack.c.h.b16 %v2141
  %v2248 = vunpack.c.l.b16 %v2142
  %v2249 = vunpack.c.h.b16 %v2142
  %v2250 = vunpack.c.l.b16 %v2143
  %v2251 = vunpack.c.h.b16 %v2143
  %v2252 = vunpack.c.l.b16 %v2144
  %v2253 = vunpack.c.h.b16 %v2144
  %v2254 = vunpack.c.l.b16 %v2145
  %v2255 = vunpack.c.h.b16 %v2145
  %v2256 = vunpack.c.l.b16 %v2146
  %v2257 = vunpack.c.h.b16 %v2146
  %v2258 = vunpack.c.l.b16 %v2147
  %v2259 = vunpack.c.h.b16 %v2147
  %v2260 = vunpack.c.l.b16 %v2148
  %v2261 = vunpack.c.h.b16 %v2148
  %v2262 = vunpack.c.l.b16 %v2149
  %v2263 = vunpack.c.h.b16 %v2149
  %v2264 = vunpack.c.l.b16 %v2150
  %v2265 = vunpack.c.h.b16 %v2150
  %v2266 = vunpack.c.l.b16 %v2151
  %v2267 = vunpack.c.h.b16 %v2151
  %v2268 = vunpack.c.l.b16 %v2152
  %v2269 = vunpack.c.h.b16 %v2152
  %v2270 = vunpack.c.l.b16 %v2153
  %v2271 = vunpack.c.h.b16 %v2153
  %v2272 = vpack.c.b16 %v2212, %v2208
  %v2273 = vpack.c.b16 %v2213, %v2209
  %v2274 = vpack.c.b16 %v2214, %v2210
  %v2275 = vpack.c.b16 %v2215, %v2211
  %v2276 = vpack.c.b16 %v2220, %v2216
  %v2277 = vpack.c.b16 %v2221, %v2217
  %v2278 = vpack.c.b16 %v2222, %v2218
  %v2279 = vpack.c.b16 %v2223, %v2219
  %v2280 = vpack.c.b16 %v2228, %v2224
  %v2281 = vpack.c.b16 %v2229, %v2225
  %v2282 = vpack.c.b16 %v2230, %v2226
  %v2283 = vpack.c.b16 %v2231, %v2227
  %v2284 = vpack.c.b16 %v2236, %v2232
  %v2285 = vpack.c.b16 %v2237, %v2233
  %v2286 = vpack.c.b16 %v2238, %v2234
  %v2287 = vpack.c.b16 %v2239, %v2235
  %v2288 = vpack.c.b16 %v2244, %v2240
  %v2289 = vpack.c.b16 %v2245, %v2241
  %v2290 = vpack.c.b16 %v2246, %v2242
  %v2291 = vpack.c.b16 %v2247, %v2243
  %v2292 = vpack.c.b16 %v2252, %v2248
  %v2293 = vpack.c.b16 %v2253, %v2249
  %v2294 = vpack.c.b16 %v2254, %v2250
  %v2295 = vpack.c.b16 %v2255, %v2251
  %v2296 = vpack.c.b16 %v2260, %v2256
  %v2297 = vpack.c.b16 %v2261, %v2257
  %v2298 = vpack.c.b16 %v2262, %v2258
  %v2299 = vpack.c.b16 %v2263, %v2259
  %v2300 = vpack.c.b16 %v2268, %v2264
  %v2301 = vpack.c.b16 %v2269, %v2265
  %v2302 = vpack.c.b16 %v2270, %v2266
  %v2303 = vpack.c.b16 %v2271, %v2267
  %2336 = vmatprep.subr.bf16.mxu0 %v2273
  %2337 = vmatpush1.bf16.msra.mxu0 %v2272
  %2338 = vmatprep.subr.bf16.mxu0 %v2277
  %2339 = vmatpush1.bf16.msra.mxu0 %v2276
  %2340 = vmatprep.subr.bf16.mxu0 %v2281
  %2341 = vmatpush1.bf16.msra.mxu0 %v2280
  %2342 = vmatprep.subr.bf16.mxu0 %v2285
  %2343 = vmatpush1.bf16.msra.mxu0 %v2284
  %2344 = vmatprep.subr.bf16.mxu0 %v2289
  %2345 = vmatpush1.bf16.msra.mxu0 %v2288
  %2346 = vmatprep.subr.bf16.mxu0 %v2293
  %2347 = vmatpush1.bf16.msra.mxu0 %v2292
  %2348 = vmatprep.subr.bf16.mxu0 %v2297
  %2349 = vmatpush1.bf16.msra.mxu0 %v2296
  %2350 = vmatprep.subr.bf16.mxu0 %v2301
  %2351 = vmatpush1.bf16.msra.mxu0 %v2300
  %2352 = vmatprep.subr.bf16.mxu0 0
  %2353 = vmatpush1.bf16.msra.mxu0 0
  %2354 = vmatprep.subr.bf16.mxu0 0
  %2355 = vmatpush1.bf16.msra.mxu0 0
  %2356 = vmatprep.subr.bf16.mxu0 0
  %2357 = vmatpush1.bf16.msra.mxu0 0
  %2358 = vmatprep.subr.bf16.mxu0 0
  %2359 = vmatpush1.bf16.msra.mxu0 0
  %2360 = vmatprep.subr.bf16.mxu0 0
  %2361 = vmatpush1.bf16.msra.mxu0 0
  %2362 = vmatprep.subr.bf16.mxu0 0
  %2363 = vmatpush1.bf16.msra.mxu0 0
  %2364 = vmatprep.subr.bf16.mxu0 0
  %2365 = vmatpush1.bf16.msra.mxu0 0
  %2366 = vmatprep.subr.bf16.mxu0 0
  %2367 = vmatpush1.bf16.msra.mxu0 0
  %2368 = vmatprep.mubr.bf16.mxu0 0
  %2369 = vmatmul.mubr.bf16.gmra.mrb[0].mxu0 %v2121
  %v2370 = vpop.f32.mrb[0].mxu0
  %v2371 = vadd.f32 %v2159, %v2370
  %v2372 = vpop.f32.mrb[0].mxu0
  %v2373 = vadd.f32 %v2163, %v2372
  %v2374 = vpop.f32.mrb[0].mxu0
  %v2375 = vadd.f32 %v2159, %v2374
  %v2376 = vpop.f32.mrb[0].mxu0
  %v2377 = vadd.f32 %v2163, %v2376
  %2378 = vdwg.mxu0
  %2379 = vmatprep.subr.bf16.mxu0 %v2275
  %2380 = vmatpush1.bf16.msra.mxu0 %v2274
  %2381 = vmatprep.subr.bf16.mxu0 %v2279
  %2382 = vmatpush1.bf16.msra.mxu0 %v2278
  %2383 = vmatprep.subr.bf16.mxu0 %v2283
  %2384 = vmatpush1.bf16.msra.mxu0 %v2282
  %2385 = vmatprep.subr.bf16.mxu0 %v2287
  %2386 = vmatpush1.bf16.msra.mxu0 %v2286
  %2387 = vmatprep.subr.bf16.mxu0 %v2291
  %2388 = vmatpush1.bf16.msra.mxu0 %v2290
  %2389 = vmatprep.subr.bf16.mxu0 %v2295
  %2390 = vmatpush1.bf16.msra.mxu0 %v2294
  %2391 = vmatprep.subr.bf16.mxu0 %v2299
  %2392 = vmatpush1.bf16.msra.mxu0 %v2298
  %2393 = vmatprep.subr.bf16.mxu0 %v2303
  %2394 = vmatpush1.bf16.msra.mxu0 %v2302
  %2395 = vmatprep.subr.bf16.mxu0 0
  %2396 = vmatpush1.bf16.msra.mxu0 0
  %2397 = vmatprep.subr.bf16.mxu0 0
  %2398 = vmatpush1.bf16.msra.mxu0 0
  %2399 = vmatprep.subr.bf16.mxu0 0
  %2400 = vmatpush1.bf16.msra.mxu0 0
  %2401 = vmatprep.subr.bf16.mxu0 0
  %2402 = vmatpush1.bf16.msra.mxu0 0
  %2403 = vmatprep.subr.bf16.mxu0 0
  %2404 = vmatpush1.bf16.msra.mxu0 0
  %2405 = vmatprep.subr.bf16.mxu0 0
  %2406 = vmatpush1.bf16.msra.mxu0 0
  %2407 = vmatprep.subr.bf16.mxu0 0
  %2408 = vmatpush1.bf16.msra.mxu0 0
  %2409 = vmatprep.subr.bf16.mxu0 0
  %2410 = vmatpush1.bf16.msra.mxu0 0
  %2411 = vmatprep.mubr.bf16.mxu0 0
  %2412 = vmatmul.mubr.bf16.gmra.mrb[0].mxu0 %v2121
  %v2413 = vpop.f32.mrb[0].mxu0
  %v2414 = vadd.f32 %v2167, %v2413
  %v2415 = vpop.f32.mrb[0].mxu0
  %v2416 = vadd.f32 %v2171, %v2415
  %v2417 = vpop.f32.mrb[0].mxu0
  %v2418 = vadd.f32 %v2167, %v2417
  %v2419 = vpop.f32.mrb[0].mxu0
  %v2420 = vadd.f32 %v2171, %v2419
  %2421 = vdwg.mxu0
  %v2422 = vmax.f32 %v2371, 0.0
  %v2423 = vmax.f32 %v2373, 0.0
  %v2424 = vmax.f32 %v2414, 0.0
  %v2425 = vmax.f32 %v2416, 0.0
  %v2426 = vmax.f32 %v2375, 0.0
  %v2427 = vmax.f32 %v2377, 0.0
  %v2428 = vmax.f32 %v2418, 0.0
  %v2429 = vmax.f32 %v2420, 0.0
  %v2430 = vpack.c.bf16 %v2426, %v2422
  %v2431 = vpack.c.bf16 %v2427, %v2423
  %v2432 = vpack.c.bf16 %v2428, %v2424
  %v2433 = vpack.c.bf16 %v2429, %v2425
  %v2434 = vld [vmem:[%s9] sm:$0xff]
  %v2435 = vld [vmem:[%s9 + $0x8] sm:$0xff]
  %v2436 = vld [vmem:[%s9 + $0x10] sm:$0xff]
  %v2437 = vld [vmem:[%s9 + $0x18] sm:$0xf]
  %v2438 = vld [vmem:[%s9 + $0x1c] sm:$0xff]
  %v2439 = vld [vmem:[%s9 + $0x24] sm:$0xff]
  %v2440 = vld [vmem:[%s9 + $0x2c] sm:$0xff]
  %v2441 = vld [vmem:[%s9 + $0x34] sm:$0xf]
  %v2442 = vld [vmem:[%s9 + $0x38] sm:$0xff]
  %v2443 = vld [vmem:[%s9 + $0x40] sm:$0xff]
  %v2444 = vld [vmem:[%s9 + $0x48] sm:$0xff]
  %v2445 = vld [vmem:[%s9 + $0x50] sm:$0xf]
  %v2446 = vld [vmem:[%s9 + $0x54] sm:$0xff]
  %v2447 = vld [vmem:[%s9 + $0x5c] sm:$0xff]
  %v2448 = vld [vmem:[%s9 + $0x64] sm:$0xff]
  %v2449 = vld [vmem:[%s9 + $0x6c] sm:$0xf]
  %v2450 = vld [vmem:[%s9 + $0x70] sm:$0xff]
  %v2451 = vld [vmem:[%s9 + $0x78] sm:$0xff]
  %v2452 = vld [vmem:[%s9 + $0x80] sm:$0xff]
  %v2453 = vld [vmem:[%s9 + $0x88] sm:$0xf]
  %v2454 = vld [vmem:[%s9 + $0x8c] sm:$0xff]
  %v2455 = vld [vmem:[%s9 + $0x94] sm:$0xff]
  %v2456 = vld [vmem:[%s9 + $0x9c] sm:$0xff]
  %v2457 = vld [vmem:[%s9 + $0xa4] sm:$0xf]
  %v2458 = vld [vmem:[%s9 + $0xa8] sm:$0xff]
  %v2459 = vld [vmem:[%s9 + $0xb0] sm:$0xff]
  %v2460 = vld [vmem:[%s9 + $0xb8] sm:$0xff]
  %v2461 = vld [vmem:[%s9 + $0xc0] sm:$0xf]
  %v2462 = vld [vmem:[%s9 + $0xc4] sm:$0xff]
  %v2463 = vld [vmem:[%s9 + $0xcc] sm:$0xff]
  %v2464 = vld [vmem:[%s9 + $0xd4] sm:$0xff]
  %v2465 = vld [vmem:[%s9 + $0xdc] sm:$0xf]
  %v2466 = vld [vmem:[%s9 + $0xe0] sm:$0xff]
  %v2467 = vld [vmem:[%s9 + $0xe8] sm:$0xff]
  %v2468 = vld [vmem:[%s9 + $0xf0] sm:$0xff]
  %v2469 = vld [vmem:[%s9 + $0xf8] sm:$0xf]
  %v2470 = vld [vmem:[%s9 + $0xfc] sm:$0xff]
  %v2471 = vld [vmem:[%s9 + $0x104] sm:$0xff]
  %v2472 = vld [vmem:[%s9 + $0x10c] sm:$0xff]
  %v2473 = vld [vmem:[%s9 + $0x114] sm:$0xf]
  %v2474 = vld [vmem:[%s9 + $0x118] sm:$0xff]
  %v2475 = vld [vmem:[%s9 + $0x120] sm:$0xff]
  %v2476 = vld [vmem:[%s9 + $0x128] sm:$0xff]
  %v2477 = vld [vmem:[%s9 + $0x130] sm:$0xf]
  %v2478 = vld [vmem:[%s9 + $0x134] sm:$0xff]
  %v2479 = vld [vmem:[%s9 + $0x13c] sm:$0xff]
  %v2480 = vld [vmem:[%s9 + $0x144] sm:$0xff]
  %v2481 = vld [vmem:[%s9 + $0x14c] sm:$0xf]
  %v2482 = vld [vmem:[%s9 + $0x150] sm:$0xff]
  %v2483 = vld [vmem:[%s9 + $0x158] sm:$0xff]
  %v2484 = vld [vmem:[%s9 + $0x160] sm:$0xff]
  %v2485 = vld [vmem:[%s9 + $0x168] sm:$0xf]
  %v2486 = vld [vmem:[%s9 + $0x16c] sm:$0xff]
  %v2487 = vld [vmem:[%s9 + $0x174] sm:$0xff]
  %v2488 = vld [vmem:[%s9 + $0x17c] sm:$0xff]
  %v2489 = vld [vmem:[%s9 + $0x184] sm:$0xf]
  %v2490 = vld [vmem:[%s9 + $0x188] sm:$0xff]
  %v2491 = vld [vmem:[%s9 + $0x190] sm:$0xff]
  %v2492 = vld [vmem:[%s9 + $0x198] sm:$0xff]
  %v2493 = vld [vmem:[%s9 + $0x1a0] sm:$0xf]
  %v2494 = vld [vmem:[%s9 + $0x1a4] sm:$0xff]
  %v2495 = vld [vmem:[%s9 + $0x1ac] sm:$0xff]
  %v2496 = vld [vmem:[%s9 + $0x1b4] sm:$0xff]
  %v2497 = vld [vmem:[%s9 + $0x1bc] sm:$0xf]
  %v2498 = vld [vmem:[%s9 + $0x1c0] sm:$0xff]
  %v2499 = vld [vmem:[%s9 + $0x1c8] sm:$0xff]
  %v2500 = vld [vmem:[%s9 + $0x1d0] sm:$0xff]
  %v2501 = vld [vmem:[%s9 + $0x1d8] sm:$0xf]
  %v2502 = vld [vmem:[%s9 + $0x1dc] sm:$0xff]
  %v2503 = vld [vmem:[%s9 + $0x1e4] sm:$0xff]
  %v2504 = vld [vmem:[%s9 + $0x1ec] sm:$0xff]
  %v2505 = vld [vmem:[%s9 + $0x1f4] sm:$0xf]
  %v2506 = vld [vmem:[%s9 + $0x1f8] sm:$0xff]
  %v2507 = vld [vmem:[%s9 + $0x200] sm:$0xff]
  %v2508 = vld [vmem:[%s9 + $0x208] sm:$0xff]
  %v2509 = vld [vmem:[%s9 + $0x210] sm:$0xf]
  %v2510 = vld [vmem:[%s9 + $0x214] sm:$0xff]
  %v2511 = vld [vmem:[%s9 + $0x21c] sm:$0xff]
  %v2512 = vld [vmem:[%s9 + $0x224] sm:$0xff]
  %v2513 = vld [vmem:[%s9 + $0x22c] sm:$0xf]
  %v2514 = vld [vmem:[%s9 + $0x230] sm:$0xff]
  %v2515 = vld [vmem:[%s9 + $0x238] sm:$0xff]
  %v2516 = vld [vmem:[%s9 + $0x240] sm:$0xff]
  %v2517 = vld [vmem:[%s9 + $0x248] sm:$0xf]
  %v2518 = vld [vmem:[%s9 + $0x24c] sm:$0xff]
  %v2519 = vld [vmem:[%s9 + $0x254] sm:$0xff]
  %v2520 = vld [vmem:[%s9 + $0x25c] sm:$0xff]
  %v2521 = vld [vmem:[%s9 + $0x264] sm:$0xf]
  %v2522 = vld [vmem:[%s9 + $0x268] sm:$0xff]
  %v2523 = vld [vmem:[%s9 + $0x270] sm:$0xff]
  %v2524 = vld [vmem:[%s9 + $0x278] sm:$0xff]
  %v2525 = vld [vmem:[%s9 + $0x280] sm:$0xf]
  %v2526 = vld [vmem:[%s9 + $0x284] sm:$0xff]
  %v2527 = vld [vmem:[%s9 + $0x28c] sm:$0xff]
  %v2528 = vld [vmem:[%s9 + $0x294] sm:$0xff]
  %v2529 = vld [vmem:[%s9 + $0x29c] sm:$0xf]
  %v2530 = vld [vmem:[%s9 + $0x2a0] sm:$0xff]
  %v2531 = vld [vmem:[%s9 + $0x2a8] sm:$0xff]
  %v2532 = vld [vmem:[%s9 + $0x2b0] sm:$0xff]
  %v2533 = vld [vmem:[%s9 + $0x2b8] sm:$0xf]
  %v2534 = vld [vmem:[%s9 + $0x2bc] sm:$0xff]
  %v2535 = vld [vmem:[%s9 + $0x2c4] sm:$0xff]
  %v2536 = vld [vmem:[%s9 + $0x2cc] sm:$0xff]
  %v2537 = vld [vmem:[%s9 + $0x2d4] sm:$0xf]
  %v2538 = vld [vmem:[%s9 + $0x2d8] sm:$0xff]
  %v2539 = vld [vmem:[%s9 + $0x2e0] sm:$0xff]
  %v2540 = vld [vmem:[%s9 + $0x2e8] sm:$0xff]
  %v2541 = vld [vmem:[%s9 + $0x2f0] sm:$0xf]
  %v2542 = vld [vmem:[%s9 + $0x2f4] sm:$0xff]
  %v2543 = vld [vmem:[%s9 + $0x2fc] sm:$0xff]
  %v2544 = vld [vmem:[%s9 + $0x304] sm:$0xff]
  %v2545 = vld [vmem:[%s9 + $0x30c] sm:$0xf]
  %v2546 = vld [vmem:[%s9 + $0x310] sm:$0xff]
  %v2547 = vld [vmem:[%s9 + $0x318] sm:$0xff]
  %v2548 = vld [vmem:[%s9 + $0x320] sm:$0xff]
  %v2549 = vld [vmem:[%s9 + $0x328] sm:$0xf]
  %v2550 = vld [vmem:[%s9 + $0x32c] sm:$0xff]
  %v2551 = vld [vmem:[%s9 + $0x334] sm:$0xff]
  %v2552 = vld [vmem:[%s9 + $0x33c] sm:$0xff]
  %v2553 = vld [vmem:[%s9 + $0x344] sm:$0xf]
  %v2554 = vld [vmem:[%s9 + $0x348] sm:$0xff]
  %v2555 = vld [vmem:[%s9 + $0x350] sm:$0xff]
  %v2556 = vld [vmem:[%s9 + $0x358] sm:$0xff]
  %v2557 = vld [vmem:[%s9 + $0x360] sm:$0xf]
  %v2558 = vld [vmem:[%s9 + $0x364] sm:$0xff]
  %v2559 = vld [vmem:[%s9 + $0x36c] sm:$0xff]
  %v2560 = vld [vmem:[%s9 + $0x374] sm:$0xff]
  %v2561 = vld [vmem:[%s9 + $0x37c] sm:$0xf]
  %v2562 = vld [vmem:[%s9 + $0x380] sm:$0xff]
  %v2563 = vld [vmem:[%s9 + $0x388] sm:$0xff]
  %v2564 = vld [vmem:[%s9 + $0x390] sm:$0xff]
  %v2565 = vld [vmem:[%s9 + $0x398] sm:$0xf]
  %v2566 = vld [vmem:[%s9 + $0x39c] sm:$0xff]
  %v2567 = vld [vmem:[%s9 + $0x3a4] sm:$0xff]
  %v2568 = vld [vmem:[%s9 + $0x3ac] sm:$0xff]
  %v2569 = vld [vmem:[%s9 + $0x3b4] sm:$0xf]
  %v2570 = vld [vmem:[%s9 + $0x3b8] sm:$0xff]
  %v2571 = vld [vmem:[%s9 + $0x3c0] sm:$0xff]
  %v2572 = vld [vmem:[%s9 + $0x3c8] sm:$0xff]
  %v2573 = vld [vmem:[%s9 + $0x3d0] sm:$0xf]
  %v2574 = vld [vmem:[%s9 + $0x3d4] sm:$0xff]
  %v2575 = vld [vmem:[%s9 + $0x3dc] sm:$0xff]
  %v2576 = vld [vmem:[%s9 + $0x3e4] sm:$0xff]
  %v2577 = vld [vmem:[%s9 + $0x3ec] sm:$0xf]
  %v2578 = vld [vmem:[%s9 + $0x3f0] sm:$0xff]
  %v2579 = vld [vmem:[%s9 + $0x3f8] sm:$0xff]
  %v2580 = vld [vmem:[%s9 + $0x400] sm:$0xff]
  %v2581 = vld [vmem:[%s9 + $0x408] sm:$0xf]
  %v2582 = vld [vmem:[%s9 + $0x40c] sm:$0xff]
  %v2583 = vld [vmem:[%s9 + $0x414] sm:$0xff]
  %v2584 = vld [vmem:[%s9 + $0x41c] sm:$0xff]
  %v2585 = vld [vmem:[%s9 + $0x424] sm:$0xf]
  %v2586 = vld [vmem:[%s9 + $0x428] sm:$0xff]
  %v2587 = vld [vmem:[%s9 + $0x430] sm:$0xff]
  %v2588 = vld [vmem:[%s9 + $0x438] sm:$0xff]
  %v2589 = vld [vmem:[%s9 + $0x440] sm:$0xf]
  %v2590 = vld [vmem:[%s9 + $0x444] sm:$0xff]
  %v2591 = vld [vmem:[%s9 + $0x44c] sm:$0xff]
  %v2592 = vld [vmem:[%s9 + $0x454] sm:$0xff]
  %v2593 = vld [vmem:[%s9 + $0x45c] sm:$0xf]
  %v2594 = vld [vmem:[%s9 + $0x460] sm:$0xff]
  %v2595 = vld [vmem:[%s9 + $0x468] sm:$0xff]
  %v2596 = vld [vmem:[%s9 + $0x470] sm:$0xff]
  %v2597 = vld [vmem:[%s9 + $0x478] sm:$0xf]
  %v2598 = vld [vmem:[%s9 + $0x47c] sm:$0xff]
  %v2599 = vld [vmem:[%s9 + $0x484] sm:$0xff]
  %v2600 = vld [vmem:[%s9 + $0x48c] sm:$0xff]
  %v2601 = vld [vmem:[%s9 + $0x494] sm:$0xf]
  %v2602 = vld [vmem:[%s9 + $0x498] sm:$0xff]
  %v2603 = vld [vmem:[%s9 + $0x4a0] sm:$0xff]
  %v2604 = vld [vmem:[%s9 + $0x4a8] sm:$0xff]
  %v2605 = vld [vmem:[%s9 + $0x4b0] sm:$0xf]
  %v2606 = vld [vmem:[%s9 + $0x4b4] sm:$0xff]
  %v2607 = vld [vmem:[%s9 + $0x4bc] sm:$0xff]
  %v2608 = vld [vmem:[%s9 + $0x4c4] sm:$0xff]
  %v2609 = vld [vmem:[%s9 + $0x4cc] sm:$0xf]
  %v2610 = vld [vmem:[%s9 + $0x4d0] sm:$0xff]
  %v2611 = vld [vmem:[%s9 + $0x4d8] sm:$0xff]
  %v2612 = vld [vmem:[%s9 + $0x4e0] sm:$0xff]
  %v2613 = vld [vmem:[%s9 + $0x4e8] sm:$0xf]
  %v2614 = vld [vmem:[%s9 + $0x4ec] sm:$0xff]
  %v2615 = vld [vmem:[%s9 + $0x4f4] sm:$0xff]
  %v2616 = vld [vmem:[%s9 + $0x4fc] sm:$0xff]
  %v2617 = vld [vmem:[%s9 + $0x504] sm:$0xf]
  %v2618 = vld [vmem:[%s9 + $0x508] sm:$0xff]
  %v2619 = vld [vmem:[%s9 + $0x510] sm:$0xff]
  %v2620 = vld [vmem:[%s9 + $0x518] sm:$0xff]
  %v2621 = vld [vmem:[%s9 + $0x520] sm:$0xf]
  %v2622 = vld [vmem:[%s9 + $0x524] sm:$0xff]
  %v2623 = vld [vmem:[%s9 + $0x52c] sm:$0xff]
  %v2624 = vld [vmem:[%s9 + $0x534] sm:$0xff]
  %v2625 = vld [vmem:[%s9 + $0x53c] sm:$0xf]
  %v2626 = vld [vmem:[%s9 + $0x540] sm:$0xff]
  %v2627 = vld [vmem:[%s9 + $0x548] sm:$0xff]
  %v2628 = vld [vmem:[%s9 + $0x550] sm:$0xff]
  %v2629 = vld [vmem:[%s9 + $0x558] sm:$0xf]
  %v2630 = vld [vmem:[%s9 + $0x55c] sm:$0xff]
  %v2631 = vld [vmem:[%s9 + $0x564] sm:$0xff]
  %v2632 = vld [vmem:[%s9 + $0x56c] sm:$0xff]
  %v2633 = vld [vmem:[%s9 + $0x574] sm:$0xf]
  %v2634 = vld [vmem:[%s9 + $0x578] sm:$0xff]
  %v2635 = vld [vmem:[%s9 + $0x580] sm:$0xff]
  %v2636 = vld [vmem:[%s9 + $0x588] sm:$0xff]
  %v2637 = vld [vmem:[%s9 + $0x590] sm:$0xf]
  %v2638 = vld [vmem:[%s9 + $0x594] sm:$0xff]
  %v2639 = vld [vmem:[%s9 + $0x59c] sm:$0xff]
  %v2640 = vld [vmem:[%s9 + $0x5a4] sm:$0xff]
  %v2641 = vld [vmem:[%s9 + $0x5ac] sm:$0xf]
  %v2642 = vld [vmem:[%s9 + $0x5b0] sm:$0xff]
  %v2643 = vld [vmem:[%s9 + $0x5b8] sm:$0xff]
  %v2644 = vld [vmem:[%s9 + $0x5c0] sm:$0xff]
  %v2645 = vld [vmem:[%s9 + $0x5c8] sm:$0xf]
  %v2646 = vld [vmem:[%s9 + $0x5cc] sm:$0xff]
  %v2647 = vld [vmem:[%s9 + $0x5d4] sm:$0xff]
  %v2648 = vld [vmem:[%s9 + $0x5dc] sm:$0xff]
  %v2649 = vld [vmem:[%s9 + $0x5e4] sm:$0xf]
  %v2650 = vld [vmem:[%s9 + $0x5e8] sm:$0xff]
  %v2651 = vld [vmem:[%s9 + $0x5f0] sm:$0xff]
  %v2652 = vld [vmem:[%s9 + $0x5f8] sm:$0xff]
  %v2653 = vld [vmem:[%s9 + $0x600] sm:$0xf]
  %v2654 = vld [vmem:[%s9 + $0x604] sm:$0xff]
  %v2655 = vld [vmem:[%s9 + $0x60c] sm:$0xff]
  %v2656 = vld [vmem:[%s9 + $0x614] sm:$0xff]
  %v2657 = vld [vmem:[%s9 + $0x61c] sm:$0xf]
  %v2658 = vld [vmem:[%s9 + $0x620] sm:$0xff]
  %v2659 = vld [vmem:[%s9 + $0x628] sm:$0xff]
  %v2660 = vld [vmem:[%s9 + $0x630] sm:$0xff]
  %v2661 = vld [vmem:[%s9 + $0x638] sm:$0xf]
  %v2662 = vld [vmem:[%s9 + $0x63c] sm:$0xff]
  %v2663 = vld [vmem:[%s9 + $0x644] sm:$0xff]
  %v2664 = vld [vmem:[%s9 + $0x64c] sm:$0xff]
  %v2665 = vld [vmem:[%s9 + $0x654] sm:$0xf]
  %v2666 = vld [vmem:[%s9 + $0x658] sm:$0xff]
  %v2667 = vld [vmem:[%s9 + $0x660] sm:$0xff]
  %v2668 = vld [vmem:[%s9 + $0x668] sm:$0xff]
  %v2669 = vld [vmem:[%s9 + $0x670] sm:$0xf]
  %v2670 = vld [vmem:[%s9 + $0x674] sm:$0xff]
  %v2671 = vld [vmem:[%s9 + $0x67c] sm:$0xff]
  %v2672 = vld [vmem:[%s9 + $0x684] sm:$0xff]
  %v2673 = vld [vmem:[%s9 + $0x68c] sm:$0xf]
  %v2674 = vld [vmem:[%s9 + $0x690] sm:$0xff]
  %v2675 = vld [vmem:[%s9 + $0x698] sm:$0xff]
  %v2676 = vld [vmem:[%s9 + $0x6a0] sm:$0xff]
  %v2677 = vld [vmem:[%s9 + $0x6a8] sm:$0xf]
  %v2678 = vld [vmem:[%s9 + $0x6ac] sm:$0xff]
  %v2679 = vld [vmem:[%s9 + $0x6b4] sm:$0xff]
  %v2680 = vld [vmem:[%s9 + $0x6bc] sm:$0xff]
  %v2681 = vld [vmem:[%s9 + $0x6c4] sm:$0xf]
  %v2682 = vld [vmem:[%s9 + $0x6c8] sm:$0xff]
  %v2683 = vld [vmem:[%s9 + $0x6d0] sm:$0xff]
  %v2684 = vld [vmem:[%s9 + $0x6d8] sm:$0xff]
  %v2685 = vld [vmem:[%s9 + $0x6e0] sm:$0xf]
  %v2686 = vld [vmem:[%s9 + $0x6e4] sm:$0xff]
  %v2687 = vld [vmem:[%s9 + $0x6ec] sm:$0xff]
  %v2688 = vld [vmem:[%s9 + $0x6f4] sm:$0xff]
  %v2689 = vld [vmem:[%s9 + $0x6fc] sm:$0xf]
  %v2690 = vld [vmem:[%s10] sm:$0x7f]
  %v2692 = vlaneseq
  %v2693 = vshrl.u32 %v2692, 7
  %v2694 = vsub.s32 0, %v2693
  %v2695 = vrot.slane %v2690, %v2694
  %v2696 = vlaneseq
  %v2697 = vshrl.u32 %v2696, 7
  %v2698 = vsub.s32 1, %v2697
  %v2699 = vrot.slane %v2690, %v2698
  %v2700 = vlaneseq
  %v2701 = vshrl.u32 %v2700, 7
  %v2702 = vsub.s32 2, %v2701
  %v2703 = vrot.slane %v2690, %v2702
  %v2704 = vlaneseq
  %v2705 = vshrl.u32 %v2704, 7
  %v2706 = vsub.s32 3, %v2705
  %v2707 = vrot.slane %v2690, %v2706
  %v2708 = vlaneseq
  %v2709 = vshrl.u32 %v2708, 7
  %v2710 = vsub.s32 4, %v2709
  %v2711 = vrot.slane %v2690, %v2710
  %v2712 = vlaneseq
  %v2713 = vshrl.u32 %v2712, 7
  %v2714 = vsub.s32 5, %v2713
  %v2715 = vrot.slane %v2690, %v2714
  %v2716 = vlaneseq
  %v2717 = vshrl.u32 %v2716, 7
  %v2718 = vsub.s32 6, %v2717
  %v2719 = vrot.slane %v2690, %v2718
  %v2983 = vunpack.c.l.b16 %v2434
  %v2984 = vunpack.c.h.b16 %v2434
  %v2985 = vunpack.c.l.b16 %v2435
  %v2986 = vunpack.c.h.b16 %v2435
  %v2987 = vunpack.c.l.b16 %v2436
  %v2988 = vunpack.c.h.b16 %v2436
  %v2989 = vunpack.c.l.b16 %v2437
  %v2990 = vunpack.c.l.b16 %v2438
  %v2991 = vunpack.c.h.b16 %v2438
  %v2992 = vunpack.c.l.b16 %v2439
  %v2993 = vunpack.c.h.b16 %v2439
  %v2994 = vunpack.c.l.b16 %v2440
  %v2995 = vunpack.c.h.b16 %v2440
  %v2996 = vunpack.c.l.b16 %v2441
  %v2997 = vunpack.c.l.b16 %v2442
  %v2998 = vunpack.c.h.b16 %v2442
  %v2999 = vunpack.c.l.b16 %v2443
  %v3000 = vunpack.c.h.b16 %v2443
  %v3001 = vunpack.c.l.b16 %v2444
  %v3002 = vunpack.c.h.b16 %v2444
  %v3003 = vunpack.c.l.b16 %v2445
  %v3004 = vunpack.c.l.b16 %v2446
  %v3005 = vunpack.c.h.b16 %v2446
  %v3006 = vunpack.c.l.b16 %v2447
  %v3007 = vunpack.c.h.b16 %v2447
  %v3008 = vunpack.c.l.b16 %v2448
  %v3009 = vunpack.c.h.b16 %v2448
  %v3010 = vunpack.c.l.b16 %v2449
  %v3011 = vunpack.c.l.b16 %v2450
  %v3012 = vunpack.c.h.b16 %v2450
  %v3013 = vunpack.c.l.b16 %v2451
  %v3014 = vunpack.c.h.b16 %v2451
  %v3015 = vunpack.c.l.b16 %v2452
  %v3016 = vunpack.c.h.b16 %v2452
  %v3017 = vunpack.c.l.b16 %v2453
  %v3018 = vunpack.c.l.b16 %v2454
  %v3019 = vunpack.c.h.b16 %v2454
  %v3020 = vunpack.c.l.b16 %v2455
  %v3021 = vunpack.c.h.b16 %v2455
  %v3022 = vunpack.c.l.b16 %v2456
  %v3023 = vunpack.c.h.b16 %v2456
  %v3024 = vunpack.c.l.b16 %v2457
  %v3025 = vunpack.c.l.b16 %v2458
  %v3026 = vunpack.c.h.b16 %v2458
  %v3027 = vunpack.c.l.b16 %v2459
  %v3028 = vunpack.c.h.b16 %v2459
  %v3029 = vunpack.c.l.b16 %v2460
  %v3030 = vunpack.c.h.b16 %v2460
  %v3031 = vunpack.c.l.b16 %v2461
  %v3032 = vunpack.c.l.b16 %v2462
  %v3033 = vunpack.c.h.b16 %v2462
  %v3034 = vunpack.c.l.b16 %v2463
  %v3035 = vunpack.c.h.b16 %v2463
  %v3036 = vunpack.c.l.b16 %v2464
  %v3037 = vunpack.c.h.b16 %v2464
  %v3038 = vunpack.c.l.b16 %v2465
  %v3039 = vunpack.c.l.b16 %v2466
  %v3040 = vunpack.c.h.b16 %v2466
  %v3041 = vunpack.c.l.b16 %v2467
  %v3042 = vunpack.c.h.b16 %v2467
  %v3043 = vunpack.c.l.b16 %v2468
  %v3044 = vunpack.c.h.b16 %v2468
  %v3045 = vunpack.c.l.b16 %v2469
  %v3046 = vunpack.c.l.b16 %v2470
  %v3047 = vunpack.c.h.b16 %v2470
  %v3048 = vunpack.c.l.b16 %v2471
  %v3049 = vunpack.c.h.b16 %v2471
  %v3050 = vunpack.c.l.b16 %v2472
  %v3051 = vunpack.c.h.b16 %v2472
  %v3052 = vunpack.c.l.b16 %v2473
  %v3053 = vunpack.c.l.b16 %v2474
  %v3054 = vunpack.c.h.b16 %v2474
  %v3055 = vunpack.c.l.b16 %v2475
  %v3056 = vunpack.c.h.b16 %v2475
  %v3057 = vunpack.c.l.b16 %v2476
  %v3058 = vunpack.c.h.b16 %v2476
  %v3059 = vunpack.c.l.b16 %v2477
  %v3060 = vunpack.c.l.b16 %v2478
  %v3061 = vunpack.c.h.b16 %v2478
  %v3062 = vunpack.c.l.b16 %v2479
  %v3063 = vunpack.c.h.b16 %v2479
  %v3064 = vunpack.c.l.b16 %v2480
  %v3065 = vunpack.c.h.b16 %v2480
  %v3066 = vunpack.c.l.b16 %v2481
  %v3067 = vunpack.c.l.b16 %v2482
  %v3068 = vunpack.c.h.b16 %v2482
  %v3069 = vunpack.c.l.b16 %v2483
  %v3070 = vunpack.c.h.b16 %v2483
  %v3071 = vunpack.c.l.b16 %v2484
  %v3072 = vunpack.c.h.b16 %v2484
  %v3073 = vunpack.c.l.b16 %v2485
  %v3074 = vunpack.c.l.b16 %v2486
  %v3075 = vunpack.c.h.b16 %v2486
  %v3076 = vunpack.c.l.b16 %v2487
  %v3077 = vunpack.c.h.b16 %v2487
  %v3078 = vunpack.c.l.b16 %v2488
  %v3079 = vunpack.c.h.b16 %v2488
  %v3080 = vunpack.c.l.b16 %v2489
  %v3081 = vunpack.c.l.b16 %v2490
  %v3082 = vunpack.c.h.b16 %v2490
  %v3083 = vunpack.c.l.b16 %v2491
  %v3084 = vunpack.c.h.b16 %v2491
  %v3085 = vunpack.c.l.b16 %v2492
  %v3086 = vunpack.c.h.b16 %v2492
  %v3087 = vunpack.c.l.b16 %v2493
  %v3088 = vunpack.c.l.b16 %v2494
  %v3089 = vunpack.c.h.b16 %v2494
  %v3090 = vunpack.c.l.b16 %v2495
  %v3091 = vunpack.c.h.b16 %v2495
  %v3092 = vunpack.c.l.b16 %v2496
  %v3093 = vunpack.c.h.b16 %v2496
  %v3094 = vunpack.c.l.b16 %v2497
  %v3095 = vunpack.c.l.b16 %v2498
  %v3096 = vunpack.c.h.b16 %v2498
  %v3097 = vunpack.c.l.b16 %v2499
  %v3098 = vunpack.c.h.b16 %v2499
  %v3099 = vunpack.c.l.b16 %v2500
  %v3100 = vunpack.c.h.b16 %v2500
  %v3101 = vunpack.c.l.b16 %v2501
  %v3102 = vunpack.c.l.b16 %v2502
  %v3103 = vunpack.c.h.b16 %v2502
  %v3104 = vunpack.c.l.b16 %v2503
  %v3105 = vunpack.c.h.b16 %v2503
  %v3106 = vunpack.c.l.b16 %v2504
  %v3107 = vunpack.c.h.b16 %v2504
  %v3108 = vunpack.c.l.b16 %v2505
  %v3109 = vunpack.c.l.b16 %v2506
  %v3110 = vunpack.c.h.b16 %v2506
  %v3111 = vunpack.c.l.b16 %v2507
  %v3112 = vunpack.c.h.b16 %v2507
  %v3113 = vunpack.c.l.b16 %v2508
  %v3114 = vunpack.c.h.b16 %v2508
  %v3115 = vunpack.c.l.b16 %v2509
  %v3116 = vunpack.c.l.b16 %v2510
  %v3117 = vunpack.c.h.b16 %v2510
  %v3118 = vunpack.c.l.b16 %v2511
  %v3119 = vunpack.c.h.b16 %v2511
  %v3120 = vunpack.c.l.b16 %v2512
  %v3121 = vunpack.c.h.b16 %v2512
  %v3122 = vunpack.c.l.b16 %v2513
  %v3123 = vunpack.c.l.b16 %v2514
  %v3124 = vunpack.c.h.b16 %v2514
  %v3125 = vunpack.c.l.b16 %v2515
  %v3126 = vunpack.c.h.b16 %v2515
  %v3127 = vunpack.c.l.b16 %v2516
  %v3128 = vunpack.c.h.b16 %v2516
  %v3129 = vunpack.c.l.b16 %v2517
  %v3130 = vunpack.c.l.b16 %v2518
  %v3131 = vunpack.c.h.b16 %v2518
  %v3132 = vunpack.c.l.b16 %v2519
  %v3133 = vunpack.c.h.b16 %v2519
  %v3134 = vunpack.c.l.b16 %v2520
  %v3135 = vunpack.c.h.b16 %v2520
  %v3136 = vunpack.c.l.b16 %v2521
  %v3137 = vunpack.c.l.b16 %v2522
  %v3138 = vunpack.c.h.b16 %v2522
  %v3139 = vunpack.c.l.b16 %v2523
  %v3140 = vunpack.c.h.b16 %v2523
  %v3141 = vunpack.c.l.b16 %v2524
  %v3142 = vunpack.c.h.b16 %v2524
  %v3143 = vunpack.c.l.b16 %v2525
  %v3144 = vunpack.c.l.b16 %v2526
  %v3145 = vunpack.c.h.b16 %v2526
  %v3146 = vunpack.c.l.b16 %v2527
  %v3147 = vunpack.c.h.b16 %v2527
  %v3148 = vunpack.c.l.b16 %v2528
  %v3149 = vunpack.c.h.b16 %v2528
  %v3150 = vunpack.c.l.b16 %v2529
  %v3151 = vunpack.c.l.b16 %v2530
  %v3152 = vunpack.c.h.b16 %v2530
  %v3153 = vunpack.c.l.b16 %v2531
  %v3154 = vunpack.c.h.b16 %v2531
  %v3155 = vunpack.c.l.b16 %v2532
  %v3156 = vunpack.c.h.b16 %v2532
  %v3157 = vunpack.c.l.b16 %v2533
  %v3158 = vunpack.c.l.b16 %v2534
  %v3159 = vunpack.c.h.b16 %v2534
  %v3160 = vunpack.c.l.b16 %v2535
  %v3161 = vunpack.c.h.b16 %v2535
  %v3162 = vunpack.c.l.b16 %v2536
  %v3163 = vunpack.c.h.b16 %v2536
  %v3164 = vunpack.c.l.b16 %v2537
  %v3165 = vunpack.c.l.b16 %v2538
  %v3166 = vunpack.c.h.b16 %v2538
  %v3167 = vunpack.c.l.b16 %v2539
  %v3168 = vunpack.c.h.b16 %v2539
  %v3169 = vunpack.c.l.b16 %v2540
  %v3170 = vunpack.c.h.b16 %v2540
  %v3171 = vunpack.c.l.b16 %v2541
  %v3172 = vunpack.c.l.b16 %v2542
  %v3173 = vunpack.c.h.b16 %v2542
  %v3174 = vunpack.c.l.b16 %v2543
  %v3175 = vunpack.c.h.b16 %v2543
  %v3176 = vunpack.c.l.b16 %v2544
  %v3177 = vunpack.c.h.b16 %v2544
  %v3178 = vunpack.c.l.b16 %v2545
  %v3179 = vunpack.c.l.b16 %v2546
  %v3180 = vunpack.c.h.b16 %v2546
  %v3181 = vunpack.c.l.b16 %v2547
  %v3182 = vunpack.c.h.b16 %v2547
  %v3183 = vunpack.c.l.b16 %v2548
  %v3184 = vunpack.c.h.b16 %v2548
  %v3185 = vunpack.c.l.b16 %v2549
  %v3186 = vunpack.c.l.b16 %v2550
  %v3187 = vunpack.c.h.b16 %v2550
  %v3188 = vunpack.c.l.b16 %v2551
  %v3189 = vunpack.c.h.b16 %v2551
  %v3190 = vunpack.c.l.b16 %v2552
  %v3191 = vunpack.c.h.b16 %v2552
  %v3192 = vunpack.c.l.b16 %v2553
  %v3193 = vunpack.c.l.b16 %v2554
  %v3194 = vunpack.c.h.b16 %v2554
  %v3195 = vunpack.c.l.b16 %v2555
  %v3196 = vunpack.c.h.b16 %v2555
  %v3197 = vunpack.c.l.b16 %v2556
  %v3198 = vunpack.c.h.b16 %v2556
  %v3199 = vunpack.c.l.b16 %v2557
  %v3200 = vunpack.c.l.b16 %v2558
  %v3201 = vunpack.c.h.b16 %v2558
  %v3202 = vunpack.c.l.b16 %v2559
  %v3203 = vunpack.c.h.b16 %v2559
  %v3204 = vunpack.c.l.b16 %v2560
  %v3205 = vunpack.c.h.b16 %v2560
  %v3206 = vunpack.c.l.b16 %v2561
  %v3207 = vunpack.c.l.b16 %v2562
  %v3208 = vunpack.c.h.b16 %v2562
  %v3209 = vunpack.c.l.b16 %v2563
  %v3210 = vunpack.c.h.b16 %v2563
  %v3211 = vunpack.c.l.b16 %v2564
  %v3212 = vunpack.c.h.b16 %v2564
  %v3213 = vunpack.c.l.b16 %v2565
  %v3214 = vunpack.c.l.b16 %v2566
  %v3215 = vunpack.c.h.b16 %v2566
  %v3216 = vunpack.c.l.b16 %v2567
  %v3217 = vunpack.c.h.b16 %v2567
  %v3218 = vunpack.c.l.b16 %v2568
  %v3219 = vunpack.c.h.b16 %v2568
  %v3220 = vunpack.c.l.b16 %v2569
  %v3221 = vunpack.c.l.b16 %v2570
  %v3222 = vunpack.c.h.b16 %v2570
  %v3223 = vunpack.c.l.b16 %v2571
  %v3224 = vunpack.c.h.b16 %v2571
  %v3225 = vunpack.c.l.b16 %v2572
  %v3226 = vunpack.c.h.b16 %v2572
  %v3227 = vunpack.c.l.b16 %v2573
  %v3228 = vunpack.c.l.b16 %v2574
  %v3229 = vunpack.c.h.b16 %v2574
  %v3230 = vunpack.c.l.b16 %v2575
  %v3231 = vunpack.c.h.b16 %v2575
  %v3232 = vunpack.c.l.b16 %v2576
  %v3233 = vunpack.c.h.b16 %v2576
  %v3234 = vunpack.c.l.b16 %v2577
  %v3235 = vunpack.c.l.b16 %v2578
  %v3236 = vunpack.c.h.b16 %v2578
  %v3237 = vunpack.c.l.b16 %v2579
  %v3238 = vunpack.c.h.b16 %v2579
  %v3239 = vunpack.c.l.b16 %v2580
  %v3240 = vunpack.c.h.b16 %v2580
  %v3241 = vunpack.c.l.b16 %v2581
  %v3242 = vunpack.c.l.b16 %v2582
  %v3243 = vunpack.c.h.b16 %v2582
  %v3244 = vunpack.c.l.b16 %v2583
  %v3245 = vunpack.c.h.b16 %v2583
  %v3246 = vunpack.c.l.b16 %v2584
  %v3247 = vunpack.c.h.b16 %v2584
  %v3248 = vunpack.c.l.b16 %v2585
  %v3249 = vunpack.c.l.b16 %v2586
  %v3250 = vunpack.c.h.b16 %v2586
  %v3251 = vunpack.c.l.b16 %v2587
  %v3252 = vunpack.c.h.b16 %v2587
  %v3253 = vunpack.c.l.b16 %v2588
  %v3254 = vunpack.c.h.b16 %v2588
  %v3255 = vunpack.c.l.b16 %v2589
  %v3256 = vunpack.c.l.b16 %v2590
  %v3257 = vunpack.c.h.b16 %v2590
  %v3258 = vunpack.c.l.b16 %v2591
  %v3259 = vunpack.c.h.b16 %v2591
  %v3260 = vunpack.c.l.b16 %v2592
  %v3261 = vunpack.c.h.b16 %v2592
  %v3262 = vunpack.c.l.b16 %v2593
  %v3263 = vunpack.c.l.b16 %v2594
  %v3264 = vunpack.c.h.b16 %v2594
  %v3265 = vunpack.c.l.b16 %v2595
  %v3266 = vunpack.c.h.b16 %v2595
  %v3267 = vunpack.c.l.b16 %v2596
  %v3268 = vunpack.c.h.b16 %v2596
  %v3269 = vunpack.c.l.b16 %v2597
  %v3270 = vunpack.c.l.b16 %v2598
  %v3271 = vunpack.c.h.b16 %v2598
  %v3272 = vunpack.c.l.b16 %v2599
  %v3273 = vunpack.c.h.b16 %v2599
  %v3274 = vunpack.c.l.b16 %v2600
  %v3275 = vunpack.c.h.b16 %v2600
  %v3276 = vunpack.c.l.b16 %v2601
  %v3277 = vunpack.c.l.b16 %v2602
  %v3278 = vunpack.c.h.b16 %v2602
  %v3279 = vunpack.c.l.b16 %v2603
  %v3280 = vunpack.c.h.b16 %v2603
  %v3281 = vunpack.c.l.b16 %v2604
  %v3282 = vunpack.c.h.b16 %v2604
  %v3283 = vunpack.c.l.b16 %v2605
  %v3284 = vunpack.c.l.b16 %v2606
  %v3285 = vunpack.c.h.b16 %v2606
  %v3286 = vunpack.c.l.b16 %v2607
  %v3287 = vunpack.c.h.b16 %v2607
  %v3288 = vunpack.c.l.b16 %v2608
  %v3289 = vunpack.c.h.b16 %v2608
  %v3290 = vunpack.c.l.b16 %v2609
  %v3291 = vunpack.c.l.b16 %v2610
  %v3292 = vunpack.c.h.b16 %v2610
  %v3293 = vunpack.c.l.b16 %v2611
  %v3294 = vunpack.c.h.b16 %v2611
  %v3295 = vunpack.c.l.b16 %v2612
  %v3296 = vunpack.c.h.b16 %v2612
  %v3297 = vunpack.c.l.b16 %v2613
  %v3298 = vunpack.c.l.b16 %v2614
  %v3299 = vunpack.c.h.b16 %v2614
  %v3300 = vunpack.c.l.b16 %v2615
  %v3301 = vunpack.c.h.b16 %v2615
  %v3302 = vunpack.c.l.b16 %v2616
  %v3303 = vunpack.c.h.b16 %v2616
  %v3304 = vunpack.c.l.b16 %v2617
  %v3305 = vunpack.c.l.b16 %v2618
  %v3306 = vunpack.c.h.b16 %v2618
  %v3307 = vunpack.c.l.b16 %v2619
  %v3308 = vunpack.c.h.b16 %v2619
  %v3309 = vunpack.c.l.b16 %v2620
  %v3310 = vunpack.c.h.b16 %v2620
  %v3311 = vunpack.c.l.b16 %v2621
  %v3312 = vunpack.c.l.b16 %v2622
  %v3313 = vunpack.c.h.b16 %v2622
  %v3314 = vunpack.c.l.b16 %v2623
  %v3315 = vunpack.c.h.b16 %v2623
  %v3316 = vunpack.c.l.b16 %v2624
  %v3317 = vunpack.c.h.b16 %v2624
  %v3318 = vunpack.c.l.b16 %v2625
  %v3319 = vunpack.c.l.b16 %v2626
  %v3320 = vunpack.c.h.b16 %v2626
  %v3321 = vunpack.c.l.b16 %v2627
  %v3322 = vunpack.c.h.b16 %v2627
  %v3323 = vunpack.c.l.b16 %v2628
  %v3324 = vunpack.c.h.b16 %v2628
  %v3325 = vunpack.c.l.b16 %v2629
  %v3326 = vunpack.c.l.b16 %v2630
  %v3327 = vunpack.c.h.b16 %v2630
  %v3328 = vunpack.c.l.b16 %v2631
  %v3329 = vunpack.c.h.b16 %v2631
  %v3330 = vunpack.c.l.b16 %v2632
  %v3331 = vunpack.c.h.b16 %v2632
  %v3332 = vunpack.c.l.b16 %v2633
  %v3333 = vunpack.c.l.b16 %v2634
  %v3334 = vunpack.c.h.b16 %v2634
  %v3335 = vunpack.c.l.b16 %v2635
  %v3336 = vunpack.c.h.b16 %v2635
  %v3337 = vunpack.c.l.b16 %v2636
  %v3338 = vunpack.c.h.b16 %v2636
  %v3339 = vunpack.c.l.b16 %v2637
  %v3340 = vunpack.c.l.b16 %v2638
  %v3341 = vunpack.c.h.b16 %v2638
  %v3342 = vunpack.c.l.b16 %v2639
  %v3343 = vunpack.c.h.b16 %v2639
  %v3344 = vunpack.c.l.b16 %v2640
  %v3345 = vunpack.c.h.b16 %v2640
  %v3346 = vunpack.c.l.b16 %v2641
  %v3347 = vunpack.c.l.b16 %v2642
  %v3348 = vunpack.c.h.b16 %v2642
  %v3349 = vunpack.c.l.b16 %v2643
  %v3350 = vunpack.c.h.b16 %v2643
  %v3351 = vunpack.c.l.b16 %v2644
  %v3352 = vunpack.c.h.b16 %v2644
  %v3353 = vunpack.c.l.b16 %v2645
  %v3354 = vunpack.c.l.b16 %v2646
  %v3355 = vunpack.c.h.b16 %v2646
  %v3356 = vunpack.c.l.b16 %v2647
  %v3357 = vunpack.c.h.b16 %v2647
  %v3358 = vunpack.c.l.b16 %v2648
  %v3359 = vunpack.c.h.b16 %v2648
  %v3360 = vunpack.c.l.b16 %v2649
  %v3361 = vunpack.c.l.b16 %v2650
  %v3362 = vunpack.c.h.b16 %v2650
  %v3363 = vunpack.c.l.b16 %v2651
  %v3364 = vunpack.c.h.b16 %v2651
  %v3365 = vunpack.c.l.b16 %v2652
  %v3366 = vunpack.c.h.b16 %v2652
  %v3367 = vunpack.c.l.b16 %v2653
  %v3368 = vunpack.c.l.b16 %v2654
  %v3369 = vunpack.c.h.b16 %v2654
  %v3370 = vunpack.c.l.b16 %v2655
  %v3371 = vunpack.c.h.b16 %v2655
  %v3372 = vunpack.c.l.b16 %v2656
  %v3373 = vunpack.c.h.b16 %v2656
  %v3374 = vunpack.c.l.b16 %v2657
  %v3375 = vunpack.c.l.b16 %v2658
  %v3376 = vunpack.c.h.b16 %v2658
  %v3377 = vunpack.c.l.b16 %v2659
  %v3378 = vunpack.c.h.b16 %v2659
  %v3379 = vunpack.c.l.b16 %v2660
  %v3380 = vunpack.c.h.b16 %v2660
  %v3381 = vunpack.c.l.b16 %v2661
  %v3382 = vunpack.c.l.b16 %v2662
  %v3383 = vunpack.c.h.b16 %v2662
  %v3384 = vunpack.c.l.b16 %v2663
  %v3385 = vunpack.c.h.b16 %v2663
  %v3386 = vunpack.c.l.b16 %v2664
  %v3387 = vunpack.c.h.b16 %v2664
  %v3388 = vunpack.c.l.b16 %v2665
  %v3389 = vunpack.c.l.b16 %v2666
  %v3390 = vunpack.c.h.b16 %v2666
  %v3391 = vunpack.c.l.b16 %v2667
  %v3392 = vunpack.c.h.b16 %v2667
  %v3393 = vunpack.c.l.b16 %v2668
  %v3394 = vunpack.c.h.b16 %v2668
  %v3395 = vunpack.c.l.b16 %v2669
  %v3396 = vunpack.c.l.b16 %v2670
  %v3397 = vunpack.c.h.b16 %v2670
  %v3398 = vunpack.c.l.b16 %v2671
  %v3399 = vunpack.c.h.b16 %v2671
  %v3400 = vunpack.c.l.b16 %v2672
  %v3401 = vunpack.c.h.b16 %v2672
  %v3402 = vunpack.c.l.b16 %v2673
  %v3403 = vunpack.c.l.b16 %v2674
  %v3404 = vunpack.c.h.b16 %v2674
  %v3405 = vunpack.c.l.b16 %v2675
  %v3406 = vunpack.c.h.b16 %v2675
  %v3407 = vunpack.c.l.b16 %v2676
  %v3408 = vunpack.c.h.b16 %v2676
  %v3409 = vunpack.c.l.b16 %v2677
  %v3410 = vunpack.c.l.b16 %v2678
  %v3411 = vunpack.c.h.b16 %v2678
  %v3412 = vunpack.c.l.b16 %v2679
  %v3413 = vunpack.c.h.b16 %v2679
  %v3414 = vunpack.c.l.b16 %v2680
  %v3415 = vunpack.c.h.b16 %v2680
  %v3416 = vunpack.c.l.b16 %v2681
  %v3417 = vunpack.c.l.b16 %v2682
  %v3418 = vunpack.c.h.b16 %v2682
  %v3419 = vunpack.c.l.b16 %v2683
  %v3420 = vunpack.c.h.b16 %v2683
  %v3421 = vunpack.c.l.b16 %v2684
  %v3422 = vunpack.c.h.b16 %v2684
  %v3423 = vunpack.c.l.b16 %v2685
  %v3424 = vunpack.c.l.b16 %v2686
  %v3425 = vunpack.c.h.b16 %v2686
  %v3426 = vunpack.c.l.b16 %v2687
  %v3427 = vunpack.c.h.b16 %v2687
  %v3428 = vunpack.c.l.b16 %v2688
  %v3429 = vunpack.c.h.b16 %v2688
  %v3430 = vunpack.c.l.b16 %v2689
  %v3431 = vpack.c.b16 %v2990, %v2983
  %v3432 = vpack.c.b16 %v2991, %v2984
  %v3433 = vpack.c.b16 %v2992, %v2985
  %v3434 = vpack.c.b16 %v2993, %v2986
  %v3435 = vpack.c.b16 %v2994, %v2987
  %v3436 = vpack.c.b16 %v2995, %v2988
  %v3437 = vpack.c.b16 %v2996, %v2989
  %v3438 = vpack.c.b16 %v3004, %v2997
  %v3439 = vpack.c.b16 %v3005, %v2998
  %v3440 = vpack.c.b16 %v3006, %v2999
  %v3441 = vpack.c.b16 %v3007, %v3000
  %v3442 = vpack.c.b16 %v3008, %v3001
  %v3443 = vpack.c.b16 %v3009, %v3002
  %v3444 = vpack.c.b16 %v3010, %v3003
  %v3445 = vpack.c.b16 %v3018, %v3011
  %v3446 = vpack.c.b16 %v3019, %v3012
  %v3447 = vpack.c.b16 %v3020, %v3013
  %v3448 = vpack.c.b16 %v3021, %v3014
  %v3449 = vpack.c.b16 %v3022, %v3015
  %v3450 = vpack.c.b16 %v3023, %v3016
  %v3451 = vpack.c.b16 %v3024, %v3017
  %v3452 = vpack.c.b16 %v3032, %v3025
  %v3453 = vpack.c.b16 %v3033, %v3026
  %v3454 = vpack.c.b16 %v3034, %v3027
  %v3455 = vpack.c.b16 %v3035, %v3028
  %v3456 = vpack.c.b16 %v3036, %v3029
  %v3457 = vpack.c.b16 %v3037, %v3030
  %v3458 = vpack.c.b16 %v3038, %v3031
  %v3459 = vpack.c.b16 %v3046, %v3039
  %v3460 = vpack.c.b16 %v3047, %v3040
  %v3461 = vpack.c.b16 %v3048, %v3041
  %v3462 = vpack.c.b16 %v3049, %v3042
  %v3463 = vpack.c.b16 %v3050, %v3043
  %v3464 = vpack.c.b16 %v3051, %v3044
  %v3465 = vpack.c.b16 %v3052, %v3045
  %v3466 = vpack.c.b16 %v3060, %v3053
  %v3467 = vpack.c.b16 %v3061, %v3054
  %v3468 = vpack.c.b16 %v3062, %v3055
  %v3469 = vpack.c.b16 %v3063, %v3056
  %v3470 = vpack.c.b16 %v3064, %v3057
  %v3471 = vpack.c.b16 %v3065, %v3058
  %v3472 = vpack.c.b16 %v3066, %v3059
  %v3473 = vpack.c.b16 %v3074, %v3067
  %v3474 = vpack.c.b16 %v3075, %v3068
  %v3475 = vpack.c.b16 %v3076, %v3069
  %v3476 = vpack.c.b16 %v3077, %v3070
  %v3477 = vpack.c.b16 %v3078, %v3071
  %v3478 = vpack.c.b16 %v3079, %v3072
  %v3479 = vpack.c.b16 %v3080, %v3073
  %v3480 = vpack.c.b16 %v3088, %v3081
  %v3481 = vpack.c.b16 %v3089, %v3082
  %v3482 = vpack.c.b16 %v3090, %v3083
  %v3483 = vpack.c.b16 %v3091, %v3084
  %v3484 = vpack.c.b16 %v3092, %v3085
  %v3485 = vpack.c.b16 %v3093, %v3086
  %v3486 = vpack.c.b16 %v3094, %v3087
  %v3487 = vpack.c.b16 %v3102, %v3095
  %v3488 = vpack.c.b16 %v3103, %v3096
  %v3489 = vpack.c.b16 %v3104, %v3097
  %v3490 = vpack.c.b16 %v3105, %v3098
  %v3491 = vpack.c.b16 %v3106, %v3099
  %v3492 = vpack.c.b16 %v3107, %v3100
  %v3493 = vpack.c.b16 %v3108, %v3101
  %v3494 = vpack.c.b16 %v3116, %v3109
  %v3495 = vpack.c.b16 %v3117, %v3110
  %v3496 = vpack.c.b16 %v3118, %v3111
  %v3497 = vpack.c.b16 %v3119, %v3112
  %v3498 = vpack.c.b16 %v3120, %v3113
  %v3499 = vpack.c.b16 %v3121, %v3114
  %v3500 = vpack.c.b16 %v3122, %v3115
  %v3501 = vpack.c.b16 %v3130, %v3123
  %v3502 = vpack.c.b16 %v3131, %v3124
  %v3503 = vpack.c.b16 %v3132, %v3125
  %v3504 = vpack.c.b16 %v3133, %v3126
  %v3505 = vpack.c.b16 %v3134, %v3127
  %v3506 = vpack.c.b16 %v3135, %v3128
  %v3507 = vpack.c.b16 %v3136, %v3129
  %v3508 = vpack.c.b16 %v3144, %v3137
  %v3509 = vpack.c.b16 %v3145, %v3138
  %v3510 = vpack.c.b16 %v3146, %v3139
  %v3511 = vpack.c.b16 %v3147, %v3140
  %v3512 = vpack.c.b16 %v3148, %v3141
  %v3513 = vpack.c.b16 %v3149, %v3142
  %v3514 = vpack.c.b16 %v3150, %v3143
  %v3515 = vpack.c.b16 %v3158, %v3151
  %v3516 = vpack.c.b16 %v3159, %v3152
  %v3517 = vpack.c.b16 %v3160, %v3153
  %v3518 = vpack.c.b16 %v3161, %v3154
  %v3519 = vpack.c.b16 %v3162, %v3155
  %v3520 = vpack.c.b16 %v3163, %v3156
  %v3521 = vpack.c.b16 %v3164, %v3157
  %v3522 = vpack.c.b16 %v3172, %v3165
  %v3523 = vpack.c.b16 %v3173, %v3166
  %v3524 = vpack.c.b16 %v3174, %v3167
  %v3525 = vpack.c.b16 %v3175, %v3168
  %v3526 = vpack.c.b16 %v3176, %v3169
  %v3527 = vpack.c.b16 %v3177, %v3170
  %v3528 = vpack.c.b16 %v3178, %v3171
  %v3529 = vpack.c.b16 %v3186, %v3179
  %v3530 = vpack.c.b16 %v3187, %v3180
  %v3531 = vpack.c.b16 %v3188, %v3181
  %v3532 = vpack.c.b16 %v3189, %v3182
  %v3533 = vpack.c.b16 %v3190, %v3183
  %v3534 = vpack.c.b16 %v3191, %v3184
  %v3535 = vpack.c.b16 %v3192, %v3185
  %v3536 = vpack.c.b16 %v3200, %v3193
  %v3537 = vpack.c.b16 %v3201, %v3194
  %v3538 = vpack.c.b16 %v3202, %v3195
  %v3539 = vpack.c.b16 %v3203, %v3196
  %v3540 = vpack.c.b16 %v3204, %v3197
  %v3541 = vpack.c.b16 %v3205, %v3198
  %v3542 = vpack.c.b16 %v3206, %v3199
  %v3543 = vpack.c.b16 %v3214, %v3207
  %v3544 = vpack.c.b16 %v3215, %v3208
  %v3545 = vpack.c.b16 %v3216, %v3209
  %v3546 = vpack.c.b16 %v3217, %v3210
  %v3547 = vpack.c.b16 %v3218, %v3211
  %v3548 = vpack.c.b16 %v3219, %v3212
  %v3549 = vpack.c.b16 %v3220, %v3213
  %v3550 = vpack.c.b16 %v3228, %v3221
  %v3551 = vpack.c.b16 %v3229, %v3222
  %v3552 = vpack.c.b16 %v3230, %v3223
  %v3553 = vpack.c.b16 %v3231, %v3224
  %v3554 = vpack.c.b16 %v3232, %v3225
  %v3555 = vpack.c.b16 %v3233, %v3226
  %v3556 = vpack.c.b16 %v3234, %v3227
  %v3557 = vpack.c.b16 %v3242, %v3235
  %v3558 = vpack.c.b16 %v3243, %v3236
  %v3559 = vpack.c.b16 %v3244, %v3237
  %v3560 = vpack.c.b16 %v3245, %v3238
  %v3561 = vpack.c.b16 %v3246, %v3239
  %v3562 = vpack.c.b16 %v3247, %v3240
  %v3563 = vpack.c.b16 %v3248, %v3241
  %v3564 = vpack.c.b16 %v3256, %v3249
  %v3565 = vpack.c.b16 %v3257, %v3250
  %v3566 = vpack.c.b16 %v3258, %v3251
  %v3567 = vpack.c.b16 %v3259, %v3252
  %v3568 = vpack.c.b16 %v3260, %v3253
  %v3569 = vpack.c.b16 %v3261, %v3254
  %v3570 = vpack.c.b16 %v3262, %v3255
  %v3571 = vpack.c.b16 %v3270, %v3263
  %v3572 = vpack.c.b16 %v3271, %v3264
  %v3573 = vpack.c.b16 %v3272, %v3265
  %v3574 = vpack.c.b16 %v3273, %v3266
  %v3575 = vpack.c.b16 %v3274, %v3267
  %v3576 = vpack.c.b16 %v3275, %v3268
  %v3577 = vpack.c.b16 %v3276, %v3269
  %v3578 = vpack.c.b16 %v3284, %v3277
  %v3579 = vpack.c.b16 %v3285, %v3278
  %v3580 = vpack.c.b16 %v3286, %v3279
  %v3581 = vpack.c.b16 %v3287, %v3280
  %v3582 = vpack.c.b16 %v3288, %v3281
  %v3583 = vpack.c.b16 %v3289, %v3282
  %v3584 = vpack.c.b16 %v3290, %v3283
  %v3585 = vpack.c.b16 %v3298, %v3291
  %v3586 = vpack.c.b16 %v3299, %v3292
  %v3587 = vpack.c.b16 %v3300, %v3293
  %v3588 = vpack.c.b16 %v3301, %v3294
  %v3589 = vpack.c.b16 %v3302, %v3295
  %v3590 = vpack.c.b16 %v3303, %v3296
  %v3591 = vpack.c.b16 %v3304, %v3297
  %v3592 = vpack.c.b16 %v3312, %v3305
  %v3593 = vpack.c.b16 %v3313, %v3306
  %v3594 = vpack.c.b16 %v3314, %v3307
  %v3595 = vpack.c.b16 %v3315, %v3308
  %v3596 = vpack.c.b16 %v3316, %v3309
  %v3597 = vpack.c.b16 %v3317, %v3310
  %v3598 = vpack.c.b16 %v3318, %v3311
  %v3599 = vpack.c.b16 %v3326, %v3319
  %v3600 = vpack.c.b16 %v3327, %v3320
  %v3601 = vpack.c.b16 %v3328, %v3321
  %v3602 = vpack.c.b16 %v3329, %v3322
  %v3603 = vpack.c.b16 %v3330, %v3323
  %v3604 = vpack.c.b16 %v3331, %v3324
  %v3605 = vpack.c.b16 %v3332, %v3325
  %v3606 = vpack.c.b16 %v3340, %v3333
  %v3607 = vpack.c.b16 %v3341, %v3334
  %v3608 = vpack.c.b16 %v3342, %v3335
  %v3609 = vpack.c.b16 %v3343, %v3336
  %v3610 = vpack.c.b16 %v3344, %v3337
  %v3611 = vpack.c.b16 %v3345, %v3338
  %v3612 = vpack.c.b16 %v3346, %v3339
  %v3613 = vpack.c.b16 %v3354, %v3347
  %v3614 = vpack.c.b16 %v3355, %v3348
  %v3615 = vpack.c.b16 %v3356, %v3349
  %v3616 = vpack.c.b16 %v3357, %v3350
  %v3617 = vpack.c.b16 %v3358, %v3351
  %v3618 = vpack.c.b16 %v3359, %v3352
  %v3619 = vpack.c.b16 %v3360, %v3353
  %v3620 = vpack.c.b16 %v3368, %v3361
  %v3621 = vpack.c.b16 %v3369, %v3362
  %v3622 = vpack.c.b16 %v3370, %v3363
  %v3623 = vpack.c.b16 %v3371, %v3364
  %v3624 = vpack.c.b16 %v3372, %v3365
  %v3625 = vpack.c.b16 %v3373, %v3366
  %v3626 = vpack.c.b16 %v3374, %v3367
  %v3627 = vpack.c.b16 %v3382, %v3375
  %v3628 = vpack.c.b16 %v3383, %v3376
  %v3629 = vpack.c.b16 %v3384, %v3377
  %v3630 = vpack.c.b16 %v3385, %v3378
  %v3631 = vpack.c.b16 %v3386, %v3379
  %v3632 = vpack.c.b16 %v3387, %v3380
  %v3633 = vpack.c.b16 %v3388, %v3381
  %v3634 = vpack.c.b16 %v3396, %v3389
  %v3635 = vpack.c.b16 %v3397, %v3390
  %v3636 = vpack.c.b16 %v3398, %v3391
  %v3637 = vpack.c.b16 %v3399, %v3392
  %v3638 = vpack.c.b16 %v3400, %v3393
  %v3639 = vpack.c.b16 %v3401, %v3394
  %v3640 = vpack.c.b16 %v3402, %v3395
  %v3641 = vpack.c.b16 %v3410, %v3403
  %v3642 = vpack.c.b16 %v3411, %v3404
  %v3643 = vpack.c.b16 %v3412, %v3405
  %v3644 = vpack.c.b16 %v3413, %v3406
  %v3645 = vpack.c.b16 %v3414, %v3407
  %v3646 = vpack.c.b16 %v3415, %v3408
  %v3647 = vpack.c.b16 %v3416, %v3409
  %v3648 = vpack.c.b16 %v3424, %v3417
  %v3649 = vpack.c.b16 %v3425, %v3418
  %v3650 = vpack.c.b16 %v3426, %v3419
  %v3651 = vpack.c.b16 %v3427, %v3420
  %v3652 = vpack.c.b16 %v3428, %v3421
  %v3653 = vpack.c.b16 %v3429, %v3422
  %v3654 = vpack.c.b16 %v3430, %v3423
  %3879 = vmatprep.subr.bf16.mxu0 %v3432
  %3880 = vmatpush1.bf16.msra.mxu0 %v3431
  %3881 = vmatprep.subr.bf16.mxu0 %v3439
  %3882 = vmatpush1.bf16.msra.mxu0 %v3438
  %3883 = vmatprep.subr.bf16.mxu0 %v3446
  %3884 = vmatpush1.bf16.msra.mxu0 %v3445
  %3885 = vmatprep.subr.bf16.mxu0 %v3453
  %3886 = vmatpush1.bf16.msra.mxu0 %v3452
  %3887 = vmatprep.subr.bf16.mxu0 %v3460
  %3888 = vmatpush1.bf16.msra.mxu0 %v3459
  %3889 = vmatprep.subr.bf16.mxu0 %v3467
  %3890 = vmatpush1.bf16.msra.mxu0 %v3466
  %3891 = vmatprep.subr.bf16.mxu0 %v3474
  %3892 = vmatpush1.bf16.msra.mxu0 %v3473
  %3893 = vmatprep.subr.bf16.mxu0 %v3481
  %3894 = vmatpush1.bf16.msra.mxu0 %v3480
  %3895 = vmatprep.subr.bf16.mxu0 %v3488
  %3896 = vmatpush1.bf16.msra.mxu0 %v3487
  %3897 = vmatprep.subr.bf16.mxu0 %v3495
  %3898 = vmatpush1.bf16.msra.mxu0 %v3494
  %3899 = vmatprep.subr.bf16.mxu0 %v3502
  %3900 = vmatpush1.bf16.msra.mxu0 %v3501
  %3901 = vmatprep.subr.bf16.mxu0 %v3509
  %3902 = vmatpush1.bf16.msra.mxu0 %v3508
  %3903 = vmatprep.subr.bf16.mxu0 %v3516
  %3904 = vmatpush1.bf16.msra.mxu0 %v3515
  %3905 = vmatprep.subr.bf16.mxu0 %v3523
  %3906 = vmatpush1.bf16.msra.mxu0 %v3522
  %3907 = vmatprep.subr.bf16.mxu0 %v3530
  %3908 = vmatpush1.bf16.msra.mxu0 %v3529
  %3909 = vmatprep.subr.bf16.mxu0 %v3537
  %3910 = vmatpush1.bf16.msra.mxu0 %v3536
  %3911 = vmatprep.mubr.bf16.mxu0 %v2431
  %3912 = vmatmul.mubr.bf16.gmra.mrb[0].mxu0 %v2430
  %v3913 = vpop.f32.mrb[0].mxu0
  %v3914 = vadd.f32 %v2695, %v3913
  %v3915 = vpop.f32.mrb[0].mxu0
  %v3916 = vadd.f32 %v2699, %v3915
  %v3917 = vpop.f32.mrb[0].mxu0
  %v3918 = vadd.f32 %v2695, %v3917
  %v3919 = vpop.f32.mrb[0].mxu0
  %v3920 = vadd.f32 %v2699, %v3919
  %3921 = vdwg.mxu0
  %3922 = vmatprep.subr.bf16.mxu0 %v3544
  %3923 = vmatpush1.bf16.msra.mxu0 %v3543
  %3924 = vmatprep.subr.bf16.mxu0 %v3551
  %3925 = vmatpush1.bf16.msra.mxu0 %v3550
  %3926 = vmatprep.subr.bf16.mxu0 %v3558
  %3927 = vmatpush1.bf16.msra.mxu0 %v3557
  %3928 = vmatprep.subr.bf16.mxu0 %v3565
  %3929 = vmatpush1.bf16.msra.mxu0 %v3564
  %3930 = vmatprep.subr.bf16.mxu0 %v3572
  %3931 = vmatpush1.bf16.msra.mxu0 %v3571
  %3932 = vmatprep.subr.bf16.mxu0 %v3579
  %3933 = vmatpush1.bf16.msra.mxu0 %v3578
  %3934 = vmatprep.subr.bf16.mxu0 %v3586
  %3935 = vmatpush1.bf16.msra.mxu0 %v3585
  %3936 = vmatprep.subr.bf16.mxu0 %v3593
  %3937 = vmatpush1.bf16.msra.mxu0 %v3592
  %3938 = vmatprep.subr.bf16.mxu0 %v3600
  %3939 = vmatpush1.bf16.msra.mxu0 %v3599
  %3940 = vmatprep.subr.bf16.mxu0 %v3607
  %3941 = vmatpush1.bf16.msra.mxu0 %v3606
  %3942 = vmatprep.subr.bf16.mxu0 %v3614
  %3943 = vmatpush1.bf16.msra.mxu0 %v3613
  %3944 = vmatprep.subr.bf16.mxu0 %v3621
  %3945 = vmatpush1.bf16.msra.mxu0 %v3620
  %3946 = vmatprep.subr.bf16.mxu0 %v3628
  %3947 = vmatpush1.bf16.msra.mxu0 %v3627
  %3948 = vmatprep.subr.bf16.mxu0 %v3635
  %3949 = vmatpush1.bf16.msra.mxu0 %v3634
  %3950 = vmatprep.subr.bf16.mxu0 %v3642
  %3951 = vmatpush1.bf16.msra.mxu0 %v3641
  %3952 = vmatprep.subr.bf16.mxu0 %v3649
  %3953 = vmatpush1.bf16.msra.mxu0 %v3648
  %3954 = vmatprep.mubr.bf16.mxu0 %v2433
  %3955 = vmatmul.mubr.bf16.gmra.mrb[0].mxu0 %v2432
  %v3956 = vpop.f32.mrb[0].mxu0
  %v3957 = vadd.f32 %v3914, %v3956
  %v3958 = vpop.f32.mrb[0].mxu0
  %v3959 = vadd.f32 %v3916, %v3958
  %v3960 = vpop.f32.mrb[0].mxu0
  %v3961 = vadd.f32 %v3918, %v3960
  %v3962 = vpop.f32.mrb[0].mxu0
  %v3963 = vadd.f32 %v3920, %v3962
  %3964 = vdwg.mxu0
  %3965 = vmatprep.subr.bf16.mxu0 %v3434
  %3966 = vmatpush1.bf16.msra.mxu0 %v3433
  %3967 = vmatprep.subr.bf16.mxu0 %v3441
  %3968 = vmatpush1.bf16.msra.mxu0 %v3440
  %3969 = vmatprep.subr.bf16.mxu0 %v3448
  %3970 = vmatpush1.bf16.msra.mxu0 %v3447
  %3971 = vmatprep.subr.bf16.mxu0 %v3455
  %3972 = vmatpush1.bf16.msra.mxu0 %v3454
  %3973 = vmatprep.subr.bf16.mxu0 %v3462
  %3974 = vmatpush1.bf16.msra.mxu0 %v3461
  %3975 = vmatprep.subr.bf16.mxu0 %v3469
  %3976 = vmatpush1.bf16.msra.mxu0 %v3468
  %3977 = vmatprep.subr.bf16.mxu0 %v3476
  %3978 = vmatpush1.bf16.msra.mxu0 %v3475
  %3979 = vmatprep.subr.bf16.mxu0 %v3483
  %3980 = vmatpush1.bf16.msra.mxu0 %v3482
  %3981 = vmatprep.subr.bf16.mxu0 %v3490
  %3982 = vmatpush1.bf16.msra.mxu0 %v3489
  %3983 = vmatprep.subr.bf16.mxu0 %v3497
  %3984 = vmatpush1.bf16.msra.mxu0 %v3496
  %3985 = vmatprep.subr.bf16.mxu0 %v3504
  %3986 = vmatpush1.bf16.msra.mxu0 %v3503
  %3987 = vmatprep.subr.bf16.mxu0 %v3511
  %3988 = vmatpush1.bf16.msra.mxu0 %v3510
  %3989 = vmatprep.subr.bf16.mxu0 %v3518
  %3990 = vmatpush1.bf16.msra.mxu0 %v3517
  %3991 = vmatprep.subr.bf16.mxu0 %v3525
  %3992 = vmatpush1.bf16.msra.mxu0 %v3524
  %3993 = vmatprep.subr.bf16.mxu0 %v3532
  %3994 = vmatpush1.bf16.msra.mxu0 %v3531
  %3995 = vmatprep.subr.bf16.mxu0 %v3539
  %3996 = vmatpush1.bf16.msra.mxu0 %v3538
  %3997 = vmatprep.mubr.bf16.mxu0 %v2431
  %3998 = vmatmul.mubr.bf16.gmra.mrb[0].mxu0 %v2430
  %v3999 = vpop.f32.mrb[0].mxu0
  %v4000 = vadd.f32 %v2703, %v3999
  %v4001 = vpop.f32.mrb[0].mxu0
  %v4002 = vadd.f32 %v2707, %v4001
  %v4003 = vpop.f32.mrb[0].mxu0
  %v4004 = vadd.f32 %v2703, %v4003
  %v4005 = vpop.f32.mrb[0].mxu0
  %v4006 = vadd.f32 %v2707, %v4005
  %4007 = vdwg.mxu0
  %4008 = vmatprep.subr.bf16.mxu0 %v3546
  %4009 = vmatpush1.bf16.msra.mxu0 %v3545
  %4010 = vmatprep.subr.bf16.mxu0 %v3553
  %4011 = vmatpush1.bf16.msra.mxu0 %v3552
  %4012 = vmatprep.subr.bf16.mxu0 %v3560
  %4013 = vmatpush1.bf16.msra.mxu0 %v3559
  %4014 = vmatprep.subr.bf16.mxu0 %v3567
  %4015 = vmatpush1.bf16.msra.mxu0 %v3566
  %4016 = vmatprep.subr.bf16.mxu0 %v3574
  %4017 = vmatpush1.bf16.msra.mxu0 %v3573
  %4018 = vmatprep.subr.bf16.mxu0 %v3581
  %4019 = vmatpush1.bf16.msra.mxu0 %v3580
  %4020 = vmatprep.subr.bf16.mxu0 %v3588
  %4021 = vmatpush1.bf16.msra.mxu0 %v3587
  %4022 = vmatprep.subr.bf16.mxu0 %v3595
  %4023 = vmatpush1.bf16.msra.mxu0 %v3594
  %4024 = vmatprep.subr.bf16.mxu0 %v3602
  %4025 = vmatpush1.bf16.msra.mxu0 %v3601
  %4026 = vmatprep.subr.bf16.mxu0 %v3609
  %4027 = vmatpush1.bf16.msra.mxu0 %v3608
  %4028 = vmatprep.subr.bf16.mxu0 %v3616
  %4029 = vmatpush1.bf16.msra.mxu0 %v3615
  %4030 = vmatprep.subr.bf16.mxu0 %v3623
  %4031 = vmatpush1.bf16.msra.mxu0 %v3622
  %4032 = vmatprep.subr.bf16.mxu0 %v3630
  %4033 = vmatpush1.bf16.msra.mxu0 %v3629
  %4034 = vmatprep.subr.bf16.mxu0 %v3637
  %4035 = vmatpush1.bf16.msra.mxu0 %v3636
  %4036 = vmatprep.subr.bf16.mxu0 %v3644
  %4037 = vmatpush1.bf16.msra.mxu0 %v3643
  %4038 = vmatprep.subr.bf16.mxu0 %v3651
  %4039 = vmatpush1.bf16.msra.mxu0 %v3650
  %4040 = vmatprep.mubr.bf16.mxu0 %v2433
  %4041 = vmatmul.mubr.bf16.gmra.mrb[0].mxu0 %v2432
  %v4042 = vpop.f32.mrb[0].mxu0
  %v4043 = vadd.f32 %v4000, %v4042
  %v4044 = vpop.f32.mrb[0].mxu0
  %v4045 = vadd.f32 %v4002, %v4044
  %v4046 = vpop.f32.mrb[0].mxu0
  %v4047 = vadd.f32 %v4004, %v4046
  %v4048 = vpop.f32.mrb[0].mxu0
  %v4049 = vadd.f32 %v4006, %v4048
  %4050 = vdwg.mxu0
  %4051 = vmatprep.subr.bf16.mxu0 %v3436
  %4052 = vmatpush1.bf16.msra.mxu0 %v3435
  %4053 = vmatprep.subr.bf16.mxu0 %v3443
  %4054 = vmatpush1.bf16.msra.mxu0 %v3442
  %4055 = vmatprep.subr.bf16.mxu0 %v3450
  %4056 = vmatpush1.bf16.msra.mxu0 %v3449
  %4057 = vmatprep.subr.bf16.mxu0 %v3457
  %4058 = vmatpush1.bf16.msra.mxu0 %v3456
  %4059 = vmatprep.subr.bf16.mxu0 %v3464
  %4060 = vmatpush1.bf16.msra.mxu0 %v3463
  %4061 = vmatprep.subr.bf16.mxu0 %v3471
  %4062 = vmatpush1.bf16.msra.mxu0 %v3470
  %4063 = vmatprep.subr.bf16.mxu0 %v3478
  %4064 = vmatpush1.bf16.msra.mxu0 %v3477
  %4065 = vmatprep.subr.bf16.mxu0 %v3485
  %4066 = vmatpush1.bf16.msra.mxu0 %v3484
  %4067 = vmatprep.subr.bf16.mxu0 %v3492
  %4068 = vmatpush1.bf16.msra.mxu0 %v3491
  %4069 = vmatprep.subr.bf16.mxu0 %v3499
  %4070 = vmatpush1.bf16.msra.mxu0 %v3498
  %4071 = vmatprep.subr.bf16.mxu0 %v3506
  %4072 = vmatpush1.bf16.msra.mxu0 %v3505
  %4073 = vmatprep.subr.bf16.mxu0 %v3513
  %4074 = vmatpush1.bf16.msra.mxu0 %v3512
  %4075 = vmatprep.subr.bf16.mxu0 %v3520
  %4076 = vmatpush1.bf16.msra.mxu0 %v3519
  %4077 = vmatprep.subr.bf16.mxu0 %v3527
  %4078 = vmatpush1.bf16.msra.mxu0 %v3526
  %4079 = vmatprep.subr.bf16.mxu0 %v3534
  %4080 = vmatpush1.bf16.msra.mxu0 %v3533
  %4081 = vmatprep.subr.bf16.mxu0 %v3541
  %4082 = vmatpush1.bf16.msra.mxu0 %v3540
  %4083 = vmatprep.mubr.bf16.mxu0 %v2431
  %4084 = vmatmul.mubr.bf16.gmra.mrb[0].mxu0 %v2430
  %v4085 = vpop.f32.mrb[0].mxu0
  %v4086 = vadd.f32 %v2711, %v4085
  %v4087 = vpop.f32.mrb[0].mxu0
  %v4088 = vadd.f32 %v2715, %v4087
  %v4089 = vpop.f32.mrb[0].mxu0
  %v4090 = vadd.f32 %v2711, %v4089
  %v4091 = vpop.f32.mrb[0].mxu0
  %v4092 = vadd.f32 %v2715, %v4091
  %4093 = vdwg.mxu0
  %4094 = vmatprep.subr.bf16.mxu0 %v3548
  %4095 = vmatpush1.bf16.msra.mxu0 %v3547
  %4096 = vmatprep.subr.bf16.mxu0 %v3555
  %4097 = vmatpush1.bf16.msra.mxu0 %v3554
  %4098 = vmatprep.subr.bf16.mxu0 %v3562
  %4099 = vmatpush1.bf16.msra.mxu0 %v3561
  %4100 = vmatprep.subr.bf16.mxu0 %v3569
  %4101 = vmatpush1.bf16.msra.mxu0 %v3568
  %4102 = vmatprep.subr.bf16.mxu0 %v3576
  %4103 = vmatpush1.bf16.msra.mxu0 %v3575
  %4104 = vmatprep.subr.bf16.mxu0 %v3583
  %4105 = vmatpush1.bf16.msra.mxu0 %v3582
  %4106 = vmatprep.subr.bf16.mxu0 %v3590
  %4107 = vmatpush1.bf16.msra.mxu0 %v3589
  %4108 = vmatprep.subr.bf16.mxu0 %v3597
  %4109 = vmatpush1.bf16.msra.mxu0 %v3596
  %4110 = vmatprep.subr.bf16.mxu0 %v3604
  %4111 = vmatpush1.bf16.msra.mxu0 %v3603
  %4112 = vmatprep.subr.bf16.mxu0 %v3611
  %4113 = vmatpush1.bf16.msra.mxu0 %v3610
  %4114 = vmatprep.subr.bf16.mxu0 %v3618
  %4115 = vmatpush1.bf16.msra.mxu0 %v3617
  %4116 = vmatprep.subr.bf16.mxu0 %v3625
  %4117 = vmatpush1.bf16.msra.mxu0 %v3624
  %4118 = vmatprep.subr.bf16.mxu0 %v3632
  %4119 = vmatpush1.bf16.msra.mxu0 %v3631
  %4120 = vmatprep.subr.bf16.mxu0 %v3639
  %4121 = vmatpush1.bf16.msra.mxu0 %v3638
  %4122 = vmatprep.subr.bf16.mxu0 %v3646
  %4123 = vmatpush1.bf16.msra.mxu0 %v3645
  %4124 = vmatprep.subr.bf16.mxu0 %v3653
  %4125 = vmatpush1.bf16.msra.mxu0 %v3652
  %4126 = vmatprep.mubr.bf16.mxu0 %v2433
  %4127 = vmatmul.mubr.bf16.gmra.mrb[0].mxu0 %v2432
  %v4128 = vpop.f32.mrb[0].mxu0
  %v4129 = vadd.f32 %v4086, %v4128
  %v4130 = vpop.f32.mrb[0].mxu0
  %v4131 = vadd.f32 %v4088, %v4130
  %v4132 = vpop.f32.mrb[0].mxu0
  %v4133 = vadd.f32 %v4090, %v4132
  %v4134 = vpop.f32.mrb[0].mxu0
  %v4135 = vadd.f32 %v4092, %v4134
  %4136 = vdwg.mxu0
  %4137 = vmatprep.subr.bf16.mxu0 0
  %4138 = vmatpush1.bf16.msra.mxu0 %v3437
  %4139 = vmatprep.subr.bf16.mxu0 0
  %4140 = vmatpush1.bf16.msra.mxu0 %v3444
  %4141 = vmatprep.subr.bf16.mxu0 0
  %4142 = vmatpush1.bf16.msra.mxu0 %v3451
  %4143 = vmatprep.subr.bf16.mxu0 0
  %4144 = vmatpush1.bf16.msra.mxu0 %v3458
  %4145 = vmatprep.subr.bf16.mxu0 0
  %4146 = vmatpush1.bf16.msra.mxu0 %v3465
  %4147 = vmatprep.subr.bf16.mxu0 0
  %4148 = vmatpush1.bf16.msra.mxu0 %v3472
  %4149 = vmatprep.subr.bf16.mxu0 0
  %4150 = vmatpush1.bf16.msra.mxu0 %v3479
  %4151 = vmatprep.subr.bf16.mxu0 0
  %4152 = vmatpush1.bf16.msra.mxu0 %v3486
  %4153 = vmatprep.subr.bf16.mxu0 0
  %4154 = vmatpush1.bf16.msra.mxu0 %v3493
  %4155 = vmatprep.subr.bf16.mxu0 0
  %4156 = vmatpush1.bf16.msra.mxu0 %v3500
  %4157 = vmatprep.subr.bf16.mxu0 0
  %4158 = vmatpush1.bf16.msra.mxu0 %v3507
  %4159 = vmatprep.subr.bf16.mxu0 0
  %4160 = vmatpush1.bf16.msra.mxu0 %v3514
  %4161 = vmatprep.subr.bf16.mxu0 0
  %4162 = vmatpush1.bf16.msra.mxu0 %v3521
  %4163 = vmatprep.subr.bf16.mxu0 0
  %4164 = vmatpush1.bf16.msra.mxu0 %v3528
  %4165 = vmatprep.subr.bf16.mxu0 0
  %4166 = vmatpush1.bf16.msra.mxu0 %v3535
  %4167 = vmatprep.subr.bf16.mxu0 0
  %4168 = vmatpush1.bf16.msra.mxu0 %v3542
  %4169 = vmatprep.mubr.bf16.mxu0 %v2431
  %4170 = vmatmul.mubr.bf16.gmra.mrb[0].mxu0 %v2430
  %v4171 = vpop.f32.mrb[0].mxu0
  %v4172 = vadd.f32 %v2719, %v4171
  %v4173 = vpop.f32.mrb[0].mxu0
  %v4174 = vpop.f32.mrb[0].mxu0
  %v4175 = vadd.f32 %v2719, %v4174
  %v4176 = vpop.f32.mrb[0].mxu0
  %4177 = vdwg.mxu0
  %4178 = vmatprep.subr.bf16.mxu0 0
  %4179 = vmatpush1.bf16.msra.mxu0 %v3549
  %4180 = vmatprep.subr.bf16.mxu0 0
  %4181 = vmatpush1.bf16.msra.mxu0 %v3556
  %4182 = vmatprep.subr.bf16.mxu0 0
  %4183 = vmatpush1.bf16.msra.mxu0 %v3563
  %4184 = vmatprep.subr.bf16.mxu0 0
  %4185 = vmatpush1.bf16.msra.mxu0 %v3570
  %4186 = vmatprep.subr.bf16.mxu0 0
  %4187 = vmatpush1.bf16.msra.mxu0 %v3577
  %4188 = vmatprep.subr.bf16.mxu0 0
  %4189 = vmatpush1.bf16.msra.mxu0 %v3584
  %4190 = vmatprep.subr.bf16.mxu0 0
  %4191 = vmatpush1.bf16.msra.mxu0 %v3591
  %4192 = vmatprep.subr.bf16.mxu0 0
  %4193 = vmatpush1.bf16.msra.mxu0 %v3598
  %4194 = vmatprep.subr.bf16.mxu0 0
  %4195 = vmatpush1.bf16.msra.mxu0 %v3605
  %4196 = vmatprep.subr.bf16.mxu0 0
  %4197 = vmatpush1.bf16.msra.mxu0 %v3612
  %4198 = vmatprep.subr.bf16.mxu0 0
  %4199 = vmatpush1.bf16.msra.mxu0 %v3619
  %4200 = vmatprep.subr.bf16.mxu0 0
  %4201 = vmatpush1.bf16.msra.mxu0 %v3626
  %4202 = vmatprep.subr.bf16.mxu0 0
  %4203 = vmatpush1.bf16.msra.mxu0 %v3633
  %4204 = vmatprep.subr.bf16.mxu0 0
  %4205 = vmatpush1.bf16.msra.mxu0 %v3640
  %4206 = vmatprep.subr.bf16.mxu0 0
  %4207 = vmatpush1.bf16.msra.mxu0 %v3647
  %4208 = vmatprep.subr.bf16.mxu0 0
  %4209 = vmatpush1.bf16.msra.mxu0 %v3654
  %4210 = vmatprep.mubr.bf16.mxu0 %v2433
  %4211 = vmatmul.mubr.bf16.gmra.mrb[0].mxu0 %v2432
  %v4212 = vpop.f32.mrb[0].mxu0
  %v4213 = vadd.f32 %v4172, %v4212
  %v4214 = vpop.f32.mrb[0].mxu0
  %v4215 = vpop.f32.mrb[0].mxu0
  %v4216 = vadd.f32 %v4175, %v4215
  %v4217 = vpop.f32.mrb[0].mxu0
  %4218 = vdwg.mxu0
  %4219 = vst [vmem:[%s12] sm:$0xff] %v2111
  %4220 = vst [vmem:[%s12 + $0x8] sm:$0xff] %v2115
  %4221 = vst [vmem:[%s11] sm:$0xff] %v3957
  %4222 = vst [vmem:[%s11 + $0x8] sm:$0xff] %v3959
  %4223 = vst [vmem:[%s11 + $0x10] sm:$0xff] %v4043
  %4224 = vst [vmem:[%s11 + $0x18] sm:$0xff] %v4045
  %4225 = vst [vmem:[%s11 + $0x20] sm:$0xff] %v4129
  %4226 = vst [vmem:[%s11 + $0x28] sm:$0xff] %v4131
  %4227 = vst.msk [vmem:[%s11 + $0x30] sm:$0xff] %vm1260, %v4213
  %4228 = vst [vmem:[%s11 + $0x38] sm:$0xff] %v3961
  %4229 = vst [vmem:[%s11 + $0x40] sm:$0xff] %v3963
  %4230 = vst [vmem:[%s11 + $0x48] sm:$0xff] %v4047
  %4231 = vst [vmem:[%s11 + $0x50] sm:$0xff] %v4049
  %4232 = vst [vmem:[%s11 + $0x58] sm:$0xff] %v4133
  %4233 = vst [vmem:[%s11 + $0x60] sm:$0xff] %v4135
  %4234 = vst.msk [vmem:[%s11 + $0x68] sm:$0xff] %vm1260, %v4216
  // Predicated region
  $region46: #{autoencoder_forward.1} parent=0 // pred_check
    _
  $region47: #{autoencoder_forward.1} parent=0 // pred_check_branch
    %4236 = sbr.rel (0) target = $region49
  $region48: #{autoencoder_forward.1} parent=0 // pred_region
    _
  $region49: #{autoencoder_forward.1} parent=0 // pred_fallthru
    _
  // Predicated region
  $region50: #{autoencoder_forward.1} parent=0 // pred_check
    _
  $region51: #{autoencoder_forward.1} parent=0 // pred_check_branch
    %4238 = sbr.rel (0) target = $region53
  $region52: #{autoencoder_forward.1} parent=0 // pred_region
    _
  $region53: #{autoencoder_forward.1} parent=0 // pred_fallthru
    _
  // Predicated region
  $region54: #{autoencoder_forward.1} parent=0 // pred_check
    _
  $region55: #{autoencoder_forward.1} parent=0 // pred_check_branch
    %4240 = sbr.rel (0) target = $region57
  $region56: #{autoencoder_forward.1} parent=0 // pred_region
    _
  $region57: #{autoencoder_forward.1} parent=0 // pred_fallthru
    _
  // Predicated region
  $region58: #{autoencoder_forward.1} parent=0 // pred_check
    _
  $region59: #{autoencoder_forward.1} parent=0 // pred_check_branch
    %4242 = sbr.rel (0) target = $region61
  $region60: #{autoencoder_forward.1} parent=0 // pred_region
    _
  $region61: #{autoencoder_forward.1} parent=0 // pred_fallthru
    _

</llo_original>
